<compile_context>
chip_gen: v5e
topology: v5e:2x2
jax: 0.10.0
libtpu: 0.0.40
codegen_flags: <defaults>
</compile_context>

<pallas_src>
import functools

import jax
import jax.numpy as jnp
import numpy as np
from jax import lax
from jax.experimental import pallas as pl
from jax.experimental.pallas import tpu as pltpu

LANE = 128                      # output channels padded to lane width (lane-dense stores)
MXU_DTYPE = jnp.bfloat16        # MXU operand dtype (accumulation stays f32)


def _round_up(x, m):
    return (x + m - 1) // m * m


def _pick_vmem_limit():
    """Generation-aware VMEM limit: ~3/4 of physical VMEM, capped at 96 MiB."""
    try:
        cap = int(pltpu.get_tpu_info().vmem_capacity_bytes)
        return min(96 * 1024 * 1024, (cap * 3) // 4)
    except Exception:
        return 32 * 1024 * 1024     # conservative fallback (safe on v5e/v6e/v7x)


_VMEM_LIMIT = _pick_vmem_limit()


# ----------------------------- fused Pallas kernel -----------------------------

def _make_fused_kernel(OH, OW, cin, K1p, Fp, bt, use_shortcut):
    """Fused ResBlock forward; one grid step processes `bt` batch elements."""
    rows = OH * OW
    ctr = 4 * cin                       # lane offset of the centre (kh=kw=1) tap

    def kernel(*args):
        if use_shortcut:
            x_ref, w1_ref, b1_ref, w2_ref, b2_ref, ws_ref, bs_ref, o_ref, h1_scr = args
        else:
            x_ref, w1_ref, b1_ref, w2_ref, b2_ref, o_ref, h1_scr = args

        # ---- conv1 (3x3, stride=s, pad=1): ONE GEMM over the packed 9*cin K dim ----
        lhs1 = x_ref[...].reshape(bt * rows, K1p)             # bf16, streamed from HBM
        acc1 = jnp.dot(lhs1, w1_ref[...], preferred_element_type=jnp.float32)
        h1 = jnp.maximum(acc1 + b1_ref[...], 0.0)             # (bt*rows, Fp) f32

        # ---- stage h1 in a bf16 VMEM scratch with zero halo (never touches HBM) ----
        # Zero only the 4 halo borders; the interior is fully overwritten below.
        zrow = jnp.zeros((bt, 1, OW + 2, Fp), h1_scr.dtype)
        zcol = jnp.zeros((bt, OH, 1, Fp), h1_scr.dtype)
        h1_scr[:, 0:1, :, :] = zrow
        h1_scr[:, OH + 1:OH + 2, :, :] = zrow
        h1_scr[:, 1:OH + 1, 0:1, :] = zcol
        h1_scr[:, 1:OH + 1, OW + 1:OW + 2, :] = zcol
        for b in range(bt):
            h1_scr[b, 1:OH + 1, 1:OW + 1, :] = (
                h1[b * rows:(b + 1) * rows].reshape(OH, OW, Fp).astype(h1_scr.dtype))

        # ---- conv2 (3x3, stride=1, pad=1): 9 shifted bf16 windows, f32 accumulation ----
        acc2 = jnp.zeros((bt * rows, Fp), jnp.float32)
        for kh in range(3):
            for kw in range(3):
                wins = [h1_scr[b, kh:kh + OH, kw:kw + OW, :].reshape(rows, Fp)
                        for b in range(bt)]
                lhs = wins[0] if bt == 1 else jnp.concatenate(wins, axis=0)
                acc2 = acc2 + jnp.dot(lhs, w2_ref[kh * 3 + kw],
                                      preferred_element_type=jnp.float32)
        acc2 = acc2 + b2_ref[...]

        # ---- residual path ----
        if use_shortcut:
            # 1x1 stride-s shortcut conv: its input (x at the strided positions) is the
            # centre-tap lanes of the resident lhs1; ws is embedded at those rows of
            # ws_ref (all other rows zero), so we reuse lhs1 directly - no extra stream.
            res = jnp.dot(lhs1, ws_ref[...],
                          preferred_element_type=jnp.float32) + bs_ref[...]
            out = jnp.maximum(acc2 + res, 0.0)
            o_ref[...] = out.reshape(bt, rows, Fp).astype(o_ref.dtype)
        else:
            # Identity residual (cin == cout): f32 add in the real lanes, no ws=I GEMM.
            o_ref[...] = jnp.maximum(acc2, 0.0).reshape(bt, rows, Fp).astype(o_ref.dtype)
            xc = lhs1[:, ctr:ctr + cin].astype(jnp.float32)    # centre tap == x itself
            out_lo = jnp.maximum(acc2[:, :cin] + xc, 0.0)
            o_ref[:, :, 0:cin] = out_lo.reshape(bt, rows, cin).astype(o_ref.dtype)

    return kernel


# ------------------------------ wrapper (layout glue only) ------------------------------

@functools.partial(jax.jit, static_argnames=("downsample",))
def resblock_forward(x_nchw, w1, b1, w2, b2, ws, bs, *, downsample):
    n, cin, H, W = x_nchw.shape
    cout = w1.shape[0]
    s = downsample
    OH = (H + 2 - 3) // s + 1
    OW = (W + 2 - 3) // s + 1
    rows = OH * OW
    Fp = _round_up(cout, LANE)
    K1 = 9 * cin
    K1p = _round_up(K1, 8)              # sublane-friendly K for the packed conv1 GEMM
    use_shortcut = s > 1
    if not use_shortcut:
        assert cin == cout, "identity residual needs cin == cout"

    # Fold batch elements into one grid step until GEMM M ~ 256 (keeps each f32
    # accumulator <= ~32 vregs while raising MXU utilisation).
    bt = 1
    for cand in range(min(n, max(1, 256 // max(rows, 1))), 0, -1):
        if n % cand == 0:
            bt = cand
            break

    # ---- bf16 input stream, REAL channel count, conv1 taps packed along K ----
    x = jnp.transpose(x_nchw, (0, 2, 3, 1))                    # NCHW -> NHWC
    xpad = jnp.pad(x, ((0, 0), (1, 1), (1, 1), (0, 0)))        # conv pad=1 (spatial only)
    taps = []
    for kh in range(3):
        for kw in range(3):
            taps.append(xpad[:, kh:kh + (OH - 1) * s + 1:s,
                             kw:kw + (OW - 1) * s + 1:s, :])   # (n, OH, OW, cin)
    patches = jnp.concatenate(taps, axis=-1).reshape(n, rows, K1)
    patches = jnp.pad(patches, ((0, 0), (0, 0), (0, K1p - K1))).astype(MXU_DTYPE)

    # conv1 weight packed to match the tap-major K layout: row = (kh*3+kw)*cin + ci.
    w1g = jnp.transpose(w1, (2, 3, 1, 0)).reshape(K1, cout)
    w1g = jnp.pad(w1g, ((0, K1p - K1), (0, Fp - cout))).astype(MXU_DTYPE)
    w2g = jnp.pad(jnp.transpose(w2, (2, 3, 1, 0)).reshape(9, cout, cout),
                  ((0, 0), (0, Fp - cout), (0, Fp - cout))).astype(MXU_DTYPE)
    b1p = jnp.pad(b1, (0, Fp - cout)).reshape(1, Fp).astype(jnp.float32)
    b2p = jnp.pad(b2, (0, Fp - cout)).reshape(1, Fp).astype(jnp.float32)

    operands = [patches, w1g, b1p, w2g, b2p]
    in_specs = [
        pl.BlockSpec((bt, rows, K1p), lambda i: (i, 0, 0)),
        pl.BlockSpec((K1p, Fp), lambda i: (0, 0)),
        pl.BlockSpec((1, Fp), lambda i: (0, 0)),
        pl.BlockSpec((9, Fp, Fp), lambda i: (0, 0, 0)),
        pl.BlockSpec((1, Fp), lambda i: (0, 0)),
    ]
    if use_shortcut:
        # Embed the 1x1 shortcut weights at the centre-tap rows of a (K1p, Fp) rhs
        # so the shortcut GEMM reuses the resident conv1 lhs (same GEMM shape too).
        ws2d = jnp.transpose(ws[:, :, 0, 0], (1, 0))           # (cin, cout)
        wsg = jnp.zeros((K1p, Fp), jnp.float32)
        wsg = wsg.at[4 * cin:5 * cin, :cout].set(ws2d).astype(MXU_DTYPE)
        bsp = jnp.pad(bs, (0, Fp - cout)).reshape(1, Fp).astype(jnp.float32)
        operands += [wsg, bsp]
        in_specs += [pl.BlockSpec((K1p, Fp), lambda i: (0, 0)),
                     pl.BlockSpec((1, Fp), lambda i: (0, 0))]

    kernel = _make_fused_kernel(OH, OW, cin, K1p, Fp, bt, use_shortcut)
    out = pl.pallas_call(
        kernel,
        out_shape=jax.ShapeDtypeStruct((n, rows, Fp), jnp.float32),
        grid=(n // bt,),
        in_specs=in_specs,
        out_specs=pl.BlockSpec((bt, rows, Fp), lambda i: (i, 0, 0)),
        scratch_shapes=[pltpu.VMEM((bt, OH + 2, OW + 2, Fp), MXU_DTYPE)],  # bf16 h1 + halo
        compiler_params=pltpu.CompilerParams(
            dimension_semantics=("parallel",),
            vmem_limit_bytes=_VMEM_LIMIT,
        ),
    )(*operands)

    out = out.reshape(n, OH, OW, Fp)[..., :cout]
    return jnp.transpose(out, (0, 3, 1, 2))                    # NHWC -> NCHW


class ResBlockPallas:
    """Pallas implementation of the PyTorch ResBlock forward pass."""

    def __init__(self, in_channels, out_channels, key):
        assert out_channels >= in_channels, "ResBlock needs out_channels >= in_channels"
        self.in_channels = in_channels
        self.out_channels = out_channels
        self.downsample = out_channels // in_channels
        if self.downsample == 1:
            assert in_channels == out_channels, "identity residual needs Cin == Cout"
        k1, k2, k3, k4, k5, k6 = jax.random.split(key, 6)
        # Deterministic synthetic parameters (PyTorch conv weight layout: OIHW).
        self.w1 = 0.1 * jax.random.normal(k1, (out_channels, in_channels, 3, 3), jnp.float32)
        self.b1 = 0.1 * jax.random.normal(k2, (out_channels,), jnp.float32)
        self.w2 = 0.1 * jax.random.normal(k3, (out_channels, out_channels, 3, 3), jnp.float32)
        self.b2 = 0.1 * jax.random.normal(k4, (out_channels,), jnp.float32)
        self.ws = 0.1 * jax.random.normal(k5, (out_channels, in_channels, 1, 1), jnp.float32)
        self.bs = 0.1 * jax.random.normal(k6, (out_channels,), jnp.float32)

    def __call__(self, x_nchw):
        return resblock_forward(x_nchw, self.w1, self.b1, self.w2, self.b2,
                                self.ws, self.bs, downsample=self.downsample)


# ------------------------------ pure-JAX reference ------------------------------

def resblock_reference(x, m):
    def conv(inp, w, b, stride, pad):
        out = lax.conv_general_dilated(
            inp, w, (stride, stride), ((pad, pad), (pad, pad)),
            dimension_numbers=("NCHW", "OIHW", "NCHW"))
        return out + b.reshape(1, -1, 1, 1)

    out = conv(x, m.w1, m.b1, m.downsample, 1)
    out = jnp.maximum(out, 0.0)
    out = conv(out, m.w2, m.b2, 1, 1)
    residual = x
    if m.downsample > 1:
        residual = conv(x, m.ws, m.bs, m.downsample, 0)
    return jnp.maximum(out + residual, 0.0)


if __name__ == "__main__":
    key = jax.random.PRNGKey(0)
    kparam, kx = jax.random.split(key)

    in_channels, out_channels = 4, 8          # downsample = 2 -> shortcut path exercised
    block = ResBlockPallas(in_channels, out_channels, kparam)

    x = jax.random.normal(kx, (2, in_channels, 16, 16), jnp.float32)   # NCHW like PyTorch

    out = jax.block_until_ready(block(x))

    ref = resblock_reference(x, block)
    # bfloat16 MXU operands (f32 accumulation) -> compare at bf16-level tolerance.
    np.testing.assert_allclose(np.asarray(out), np.asarray(ref), atol=3e-2, rtol=3e-2)

    print("KERNEL_OK")
</pallas_src>

<mosaic_0001>
module attributes {stable_mosaic.version = 11 : i64} {
  func.func @kernel(%arg0: i32, %arg1: memref<2x64x40xbf16, #tpu.memory_space<vmem>>, %arg2: memref<40x128xbf16, #tpu.memory_space<vmem>>, %arg3: memref<1x128xf32, #tpu.memory_space<vmem>>, %arg4: memref<9x128x128xbf16, #tpu.memory_space<vmem>>, %arg5: memref<1x128xf32, #tpu.memory_space<vmem>>, %arg6: memref<40x128xbf16, #tpu.memory_space<vmem>>, %arg7: memref<1x128xf32, #tpu.memory_space<vmem>>, %arg8: memref<2x64x128xf32, #tpu.memory_space<vmem>>, %arg9: memref<2x10x10x128xbf16, #tpu.memory_space<vmem>>) attributes {dimension_semantics = [#tpu.dimension_semantics<parallel>], iteration_bounds = array<i64: 1>, scalar_prefetch = 0 : i64, scratch_operands = 1 : i64, tpu.core_type = #tpu.core_type<tc>, window_params = [{transform_indices = @transform_0, window_bounds = array<i64: 2, 64, 40>}, {pipeline_mode = #tpu.pipeline_mode<synchronous>, transform_indices = @transform_1, window_bounds = array<i64: 40, 128>}, {pipeline_mode = #tpu.pipeline_mode<synchronous>, transform_indices = @transform_2, window_bounds = array<i64: 1, 128>}, {pipeline_mode = #tpu.pipeline_mode<synchronous>, transform_indices = @transform_3, window_bounds = array<i64: 9, 128, 128>}, {pipeline_mode = #tpu.pipeline_mode<synchronous>, transform_indices = @transform_4, window_bounds = array<i64: 1, 128>}, {pipeline_mode = #tpu.pipeline_mode<synchronous>, transform_indices = @transform_5, window_bounds = array<i64: 40, 128>}, {pipeline_mode = #tpu.pipeline_mode<synchronous>, transform_indices = @transform_6, window_bounds = array<i64: 1, 128>}, {transform_indices = @transform_7, window_bounds = array<i64: 2, 64, 128>}]} {
    %c0 = arith.constant 0 : index
    %c0_0 = arith.constant 0 : index
    %c0_1 = arith.constant 0 : index
    %0 = vector.load %arg1[%c0, %c0_0, %c0_1] : memref<2x64x40xbf16, #tpu.memory_space<vmem>>, vector<2x64x40xbf16>
    %1 = vector.shape_cast %0 : vector<2x64x40xbf16> to vector<128x40xbf16>
    %c0_2 = arith.constant 0 : index
    %c0_3 = arith.constant 0 : index
    %2 = vector.load %arg2[%c0_2, %c0_3] : memref<40x128xbf16, #tpu.memory_space<vmem>>, vector<40x128xbf16>
    %cst = arith.constant dense<0.000000e+00> : vector<128x128xf32>
    %3 = tpu.matmul %1, %2, %cst {dimension_numbers = #tpu.dot_dimension_numbers<[1], [0], [0], [1], [0, 0, 1, 1], [], []>} : vector<128x40xbf16>, vector<40x128xbf16>, vector<128x128xf32> -> vector<128x128xf32>
    %c0_4 = arith.constant 0 : index
    %c0_5 = arith.constant 0 : index
    %4 = vector.load %arg3[%c0_4, %c0_5] : memref<1x128xf32, #tpu.memory_space<vmem>>, vector<1x128xf32>
    %5 = vector.broadcast %4 : vector<1x128xf32> to vector<128x128xf32>
    %6 = arith.addf %3, %5 : vector<128x128xf32>
    %cst_6 = arith.constant 0.000000e+00 : f32
    %7 = vector.broadcast %cst_6 : f32 to vector<128x128xf32>
    %8 = arith.maximumf %6, %7 : vector<128x128xf32>
    %cst_7 = arith.constant 0.000000e+00 : bf16
    %9 = vector.broadcast %cst_7 : bf16 to vector<2x1x10x128xbf16>
    %cst_8 = arith.constant 0.000000e+00 : bf16
    %10 = vector.broadcast %cst_8 : bf16 to vector<2x8x1x128xbf16>
    %c0_9 = arith.constant 0 : index
    %c0_10 = arith.constant 0 : index
    %c0_11 = arith.constant 0 : index
    %c0_12 = arith.constant 0 : index
    %11 = vector.load %arg9[%c0_9, %c0_10, %c0_11, %c0_12] : memref<2x10x10x128xbf16, #tpu.memory_space<vmem>>, vector<2x1x10x128xbf16>
    tpu.vector_store %arg9[%c0_9, %c0_10, %c0_11, %c0_12], %9 {strides = array<i32>} : memref<2x10x10x128xbf16, #tpu.memory_space<vmem>>, vector<2x1x10x128xbf16>,
    %c0_13 = arith.constant 0 : index
    %c9 = arith.constant 9 : index
    %c0_14 = arith.constant 0 : index
    %c0_15 = arith.constant 0 : index
    %12 = vector.load %arg9[%c0_13, %c9, %c0_14, %c0_15] : memref<2x10x10x128xbf16, #tpu.memory_space<vmem>>, vector<2x1x10x128xbf16>
    tpu.vector_store %arg9[%c0_13, %c9, %c0_14, %c0_15], %9 {strides = array<i32>} : memref<2x10x10x128xbf16, #tpu.memory_space<vmem>>, vector<2x1x10x128xbf16>,
    %c0_16 = arith.constant 0 : index
    %c1 = arith.constant 1 : index
    %c0_17 = arith.constant 0 : index
    %c0_18 = arith.constant 0 : index
    %13 = vector.load %arg9[%c0_16, %c1, %c0_17, %c0_18] : memref<2x10x10x128xbf16, #tpu.memory_space<vmem>>, vector<2x8x1x128xbf16>
    tpu.vector_store %arg9[%c0_16, %c1, %c0_17, %c0_18], %10 {strides = array<i32>} : memref<2x10x10x128xbf16, #tpu.memory_space<vmem>>, vector<2x8x1x128xbf16>,
    %c0_19 = arith.constant 0 : index
    %c1_20 = arith.constant 1 : index
    %c9_21 = arith.constant 9 : index
    %c0_22 = arith.constant 0 : index
    %14 = vector.load %arg9[%c0_19, %c1_20, %c9_21, %c0_22] : memref<2x10x10x128xbf16, #tpu.memory_space<vmem>>, vector<2x8x1x128xbf16>
    tpu.vector_store %arg9[%c0_19, %c1_20, %c9_21, %c0_22], %10 {strides = array<i32>} : memref<2x10x10x128xbf16, #tpu.memory_space<vmem>>, vector<2x8x1x128xbf16>,
    %15 = vector.extract_strided_slice %8 {offsets = [0, 0], sizes = [64, 128], strides = [1, 1]} : vector<128x128xf32> to vector<64x128xf32>
    %16 = vector.shape_cast %15 : vector<64x128xf32> to vector<8x8x128xf32>
    %17 = arith.truncf %16 : vector<8x8x128xf32> to vector<8x8x128xbf16>
    %c0_23 = arith.constant 0 : index
    %c1_24 = arith.constant 1 : index
    %c1_25 = arith.constant 1 : index
    %c0_26 = arith.constant 0 : index
    %18 = vector.load %arg9[%c0_23, %c1_24, %c1_25, %c0_26] : memref<2x10x10x128xbf16, #tpu.memory_space<vmem>>, vector<1x8x8x128xbf16>
    %19 = vector.shape_cast %18 : vector<1x8x8x128xbf16> to vector<8x8x128xbf16>
    %20 = vector.shape_cast %17 : vector<8x8x128xbf16> to vector<1x8x8x128xbf16>
    tpu.vector_store %arg9[%c0_23, %c1_24, %c1_25, %c0_26], %20 {strides = array<i32>} : memref<2x10x10x128xbf16, #tpu.memory_space<vmem>>, vector<1x8x8x128xbf16>,
    %21 = vector.extract_strided_slice %8 {offsets = [64, 0], sizes = [64, 128], strides = [1, 1]} : vector<128x128xf32> to vector<64x128xf32>
    %22 = vector.shape_cast %21 : vector<64x128xf32> to vector<8x8x128xf32>
    %23 = arith.truncf %22 : vector<8x8x128xf32> to vector<8x8x128xbf16>
    %c1_27 = arith.constant 1 : index
    %c1_28 = arith.constant 1 : index
    %c1_29 = arith.constant 1 : index
    %c0_30 = arith.constant 0 : index
    %24 = vector.load %arg9[%c1_27, %c1_28, %c1_29, %c0_30] : memref<2x10x10x128xbf16, #tpu.memory_space<vmem>>, vector<1x8x8x128xbf16>
    %25 = vector.shape_cast %24 : vector<1x8x8x128xbf16> to vector<8x8x128xbf16>
    %26 = vector.shape_cast %23 : vector<8x8x128xbf16> to vector<1x8x8x128xbf16>
    tpu.vector_store %arg9[%c1_27, %c1_28, %c1_29, %c0_30], %26 {strides = array<i32>} : memref<2x10x10x128xbf16, #tpu.memory_space<vmem>>, vector<1x8x8x128xbf16>,
    %cst_31 = arith.constant 0.000000e+00 : f32
    %27 = vector.broadcast %cst_31 : f32 to vector<128x128xf32>
    %c0_32 = arith.constant 0 : index
    %c0_33 = arith.constant 0 : index
    %c0_34 = arith.constant 0 : index
    %c0_35 = arith.constant 0 : index
    %28 = vector.load %arg9[%c0_32, %c0_33, %c0_34, %c0_35] : memref<2x10x10x128xbf16, #tpu.memory_space<vmem>>, vector<1x8x8x128xbf16>
    %29 = vector.shape_cast %28 : vector<1x8x8x128xbf16> to vector<8x8x128xbf16>
    %30 = vector.shape_cast %29 : vector<8x8x128xbf16> to vector<64x128xbf16>
    %c1_36 = arith.constant 1 : index
    %c0_37 = arith.constant 0 : index
    %c0_38 = arith.constant 0 : index
    %c0_39 = arith.constant 0 : index
    %31 = vector.load %arg9[%c1_36, %c0_37, %c0_38, %c0_39] : memref<2x10x10x128xbf16, #tpu.memory_space<vmem>>, vector<1x8x8x128xbf16>
    %32 = vector.shape_cast %31 : vector<1x8x8x128xbf16> to vector<8x8x128xbf16>
    %33 = vector.shape_cast %32 : vector<8x8x128xbf16> to vector<64x128xbf16>
    %34 = tpu.concatenate %30, %33 in 0 : vector<64x128xbf16>, vector<64x128xbf16> -> vector<128x128xbf16>
    %c0_40 = arith.constant 0 : index
    %c0_41 = arith.constant 0 : index
    %c0_42 = arith.constant 0 : index
    %35 = vector.load %arg4[%c0_40, %c0_41, %c0_42] : memref<9x128x128xbf16, #tpu.memory_space<vmem>>, vector<1x128x128xbf16>
    %36 = vector.shape_cast %35 : vector<1x128x128xbf16> to vector<128x128xbf16>
    %cst_43 = arith.constant dense<0.000000e+00> : vector<128x128xf32>
    %37 = tpu.matmul %34, %36, %cst_43 {dimension_numbers = #tpu.dot_dimension_numbers<[1], [0], [0], [1], [0, 0, 1, 1], [], []>} : vector<128x128xbf16>, vector<128x128xbf16>, vector<128x128xf32> -> vector<128x128xf32>
    %38 = arith.addf %27, %37 : vector<128x128xf32>
    %c0_44 = arith.constant 0 : index
    %c0_45 = arith.constant 0 : index
    %c1_46 = arith.constant 1 : index
    %c0_47 = arith.constant 0 : index
    %39 = vector.load %arg9[%c0_44, %c0_45, %c1_46, %c0_47] : memref<2x10x10x128xbf16, #tpu.memory_space<vmem>>, vector<1x8x8x128xbf16>
    %40 = vector.shape_cast %39 : vector<1x8x8x128xbf16> to vector<8x8x128xbf16>
    %41 = vector.shape_cast %40 : vector<8x8x128xbf16> to vector<64x128xbf16>
    %c1_48 = arith.constant 1 : index
    %c0_49 = arith.constant 0 : index
    %c1_50 = arith.constant 1 : index
    %c0_51 = arith.constant 0 : index
    %42 = vector.load %arg9[%c1_48, %c0_49, %c1_50, %c0_51] : memref<2x10x10x128xbf16, #tpu.memory_space<vmem>>, vector<1x8x8x128xbf16>
    %43 = vector.shape_cast %42 : vector<1x8x8x128xbf16> to vector<8x8x128xbf16>
    %44 = vector.shape_cast %43 : vector<8x8x128xbf16> to vector<64x128xbf16>
    %45 = tpu.concatenate %41, %44 in 0 : vector<64x128xbf16>, vector<64x128xbf16> -> vector<128x128xbf16>
    %c1_52 = arith.constant 1 : index
    %c0_53 = arith.constant 0 : index
    %c0_54 = arith.constant 0 : index
    %46 = vector.load %arg4[%c1_52, %c0_53, %c0_54] : memref<9x128x128xbf16, #tpu.memory_space<vmem>>, vector<1x128x128xbf16>
    %47 = vector.shape_cast %46 : vector<1x128x128xbf16> to vector<128x128xbf16>
    %cst_55 = arith.constant dense<0.000000e+00> : vector<128x128xf32>
    %48 = tpu.matmul %45, %47, %cst_55 {dimension_numbers = #tpu.dot_dimension_numbers<[1], [0], [0], [1], [0, 0, 1, 1], [], []>} : vector<128x128xbf16>, vector<128x128xbf16>, vector<128x128xf32> -> vector<128x128xf32>
    %49 = arith.addf %38, %48 : vector<128x128xf32>
    %c0_56 = arith.constant 0 : index
    %c0_57 = arith.constant 0 : index
    %c2 = arith.constant 2 : index
    %c0_58 = arith.constant 0 : index
    %50 = vector.load %arg9[%c0_56, %c0_57, %c2, %c0_58] : memref<2x10x10x128xbf16, #tpu.memory_space<vmem>>, vector<1x8x8x128xbf16>
    %51 = vector.shape_cast %50 : vector<1x8x8x128xbf16> to vector<8x8x128xbf16>
    %52 = vector.shape_cast %51 : vector<8x8x128xbf16> to vector<64x128xbf16>
    %c1_59 = arith.constant 1 : index
    %c0_60 = arith.constant 0 : index
    %c2_61 = arith.constant 2 : index
    %c0_62 = arith.constant 0 : index
    %53 = vector.load %arg9[%c1_59, %c0_60, %c2_61, %c0_62] : memref<2x10x10x128xbf16, #tpu.memory_space<vmem>>, vector<1x8x8x128xbf16>
    %54 = vector.shape_cast %53 : vector<1x8x8x128xbf16> to vector<8x8x128xbf16>
    %55 = vector.shape_cast %54 : vector<8x8x128xbf16> to vector<64x128xbf16>
    %56 = tpu.concatenate %52, %55 in 0 : vector<64x128xbf16>, vector<64x128xbf16> -> vector<128x128xbf16>
    %c2_63 = arith.constant 2 : index
    %c0_64 = arith.constant 0 : index
    %c0_65 = arith.constant 0 : index
    %57 = vector.load %arg4[%c2_63, %c0_64, %c0_65] : memref<9x128x128xbf16, #tpu.memory_space<vmem>>, vector<1x128x128xbf16>
    %58 = vector.shape_cast %57 : vector<1x128x128xbf16> to vector<128x128xbf16>
    %cst_66 = arith.constant dense<0.000000e+00> : vector<128x128xf32>
    %59 = tpu.matmul %56, %58, %cst_66 {dimension_numbers = #tpu.dot_dimension_numbers<[1], [0], [0], [1], [0, 0, 1, 1], [], []>} : vector<128x128xbf16>, vector<128x128xbf16>, vector<128x128xf32> -> vector<128x128xf32>
    %60 = arith.addf %49, %59 : vector<128x128xf32>
    %c0_67 = arith.constant 0 : index
    %c1_68 = arith.constant 1 : index
    %c0_69 = arith.constant 0 : index
    %c0_70 = arith.constant 0 : index
    %61 = vector.load %arg9[%c0_67, %c1_68, %c0_69, %c0_70] : memref<2x10x10x128xbf16, #tpu.memory_space<vmem>>, vector<1x8x8x128xbf16>
    %62 = vector.shape_cast %61 : vector<1x8x8x128xbf16> to vector<8x8x128xbf16>
    %63 = vector.shape_cast %62 : vector<8x8x128xbf16> to vector<64x128xbf16>
    %c1_71 = arith.constant 1 : index
    %c1_72 = arith.constant 1 : index
    %c0_73 = arith.constant 0 : index
    %c0_74 = arith.constant 0 : index
    %64 = vector.load %arg9[%c1_71, %c1_72, %c0_73, %c0_74] : memref<2x10x10x128xbf16, #tpu.memory_space<vmem>>, vector<1x8x8x128xbf16>
    %65 = vector.shape_cast %64 : vector<1x8x8x128xbf16> to vector<8x8x128xbf16>
    %66 = vector.shape_cast %65 : vector<8x8x128xbf16> to vector<64x128xbf16>
    %67 = tpu.concatenate %63, %66 in 0 : vector<64x128xbf16>, vector<64x128xbf16> -> vector<128x128xbf16>
    %c3 = arith.constant 3 : index
    %c0_75 = arith.constant 0 : index
    %c0_76 = arith.constant 0 : index
    %68 = vector.load %arg4[%c3, %c0_75, %c0_76] : memref<9x128x128xbf16, #tpu.memory_space<vmem>>, vector<1x128x128xbf16>
    %69 = vector.shape_cast %68 : vector<1x128x128xbf16> to vector<128x128xbf16>
    %cst_77 = arith.constant dense<0.000000e+00> : vector<128x128xf32>
    %70 = tpu.matmul %67, %69, %cst_77 {dimension_numbers = #tpu.dot_dimension_numbers<[1], [0], [0], [1], [0, 0, 1, 1], [], []>} : vector<128x128xbf16>, vector<128x128xbf16>, vector<128x128xf32> -> vector<128x128xf32>
    %71 = arith.addf %60, %70 : vector<128x128xf32>
    %c0_78 = arith.constant 0 : index
    %c1_79 = arith.constant 1 : index
    %c1_80 = arith.constant 1 : index
    %c0_81 = arith.constant 0 : index
    %72 = vector.load %arg9[%c0_78, %c1_79, %c1_80, %c0_81] : memref<2x10x10x128xbf16, #tpu.memory_space<vmem>>, vector<1x8x8x128xbf16>
    %73 = vector.shape_cast %72 : vector<1x8x8x128xbf16> to vector<8x8x128xbf16>
    %74 = vector.shape_cast %73 : vector<8x8x128xbf16> to vector<64x128xbf16>
    %c1_82 = arith.constant 1 : index
    %c1_83 = arith.constant 1 : index
    %c1_84 = arith.constant 1 : index
    %c0_85 = arith.constant 0 : index
    %75 = vector.load %arg9[%c1_82, %c1_83, %c1_84, %c0_85] : memref<2x10x10x128xbf16, #tpu.memory_space<vmem>>, vector<1x8x8x128xbf16>
    %76 = vector.shape_cast %75 : vector<1x8x8x128xbf16> to vector<8x8x128xbf16>
    %77 = vector.shape_cast %76 : vector<8x8x128xbf16> to vector<64x128xbf16>
    %78 = tpu.concatenate %74, %77 in 0 : vector<64x128xbf16>, vector<64x128xbf16> -> vector<128x128xbf16>
    %c4 = arith.constant 4 : index
    %c0_86 = arith.constant 0 : index
    %c0_87 = arith.constant 0 : index
    %79 = vector.load %arg4[%c4, %c0_86, %c0_87] : memref<9x128x128xbf16, #tpu.memory_space<vmem>>, vector<1x128x128xbf16>
    %80 = vector.shape_cast %79 : vector<1x128x128xbf16> to vector<128x128xbf16>
    %cst_88 = arith.constant dense<0.000000e+00> : vector<128x128xf32>
    %81 = tpu.matmul %78, %80, %cst_88 {dimension_numbers = #tpu.dot_dimension_numbers<[1], [0], [0], [1], [0, 0, 1, 1], [], []>} : vector<128x128xbf16>, vector<128x128xbf16>, vector<128x128xf32> -> vector<128x128xf32>
    %82 = arith.addf %71, %81 : vector<128x128xf32>
    %c0_89 = arith.constant 0 : index
    %c1_90 = arith.constant 1 : index
    %c2_91 = arith.constant 2 : index
    %c0_92 = arith.constant 0 : index
    %83 = vector.load %arg9[%c0_89, %c1_90, %c2_91, %c0_92] : memref<2x10x10x128xbf16, #tpu.memory_space<vmem>>, vector<1x8x8x128xbf16>
    %84 = vector.shape_cast %83 : vector<1x8x8x128xbf16> to vector<8x8x128xbf16>
    %85 = vector.shape_cast %84 : vector<8x8x128xbf16> to vector<64x128xbf16>
    %c1_93 = arith.constant 1 : index
    %c1_94 = arith.constant 1 : index
    %c2_95 = arith.constant 2 : index
    %c0_96 = arith.constant 0 : index
    %86 = vector.load %arg9[%c1_93, %c1_94, %c2_95, %c0_96] : memref<2x10x10x128xbf16, #tpu.memory_space<vmem>>, vector<1x8x8x128xbf16>
    %87 = vector.shape_cast %86 : vector<1x8x8x128xbf16> to vector<8x8x128xbf16>
    %88 = vector.shape_cast %87 : vector<8x8x128xbf16> to vector<64x128xbf16>
    %89 = tpu.concatenate %85, %88 in 0 : vector<64x128xbf16>, vector<64x128xbf16> -> vector<128x128xbf16>
    %c5 = arith.constant 5 : index
    %c0_97 = arith.constant 0 : index
    %c0_98 = arith.constant 0 : index
    %90 = vector.load %arg4[%c5, %c0_97, %c0_98] : memref<9x128x128xbf16, #tpu.memory_space<vmem>>, vector<1x128x128xbf16>
    %91 = vector.shape_cast %90 : vector<1x128x128xbf16> to vector<128x128xbf16>
    %cst_99 = arith.constant dense<0.000000e+00> : vector<128x128xf32>
    %92 = tpu.matmul %89, %91, %cst_99 {dimension_numbers = #tpu.dot_dimension_numbers<[1], [0], [0], [1], [0, 0, 1, 1], [], []>} : vector<128x128xbf16>, vector<128x128xbf16>, vector<128x128xf32> -> vector<128x128xf32>
    %93 = arith.addf %82, %92 : vector<128x128xf32>
    %c0_100 = arith.constant 0 : index
    %c2_101 = arith.constant 2 : index
    %c0_102 = arith.constant 0 : index
    %c0_103 = arith.constant 0 : index
    %94 = vector.load %arg9[%c0_100, %c2_101, %c0_102, %c0_103] : memref<2x10x10x128xbf16, #tpu.memory_space<vmem>>, vector<1x8x8x128xbf16>
    %95 = vector.shape_cast %94 : vector<1x8x8x128xbf16> to vector<8x8x128xbf16>
    %96 = vector.shape_cast %95 : vector<8x8x128xbf16> to vector<64x128xbf16>
    %c1_104 = arith.constant 1 : index
    %c2_105 = arith.constant 2 : index
    %c0_106 = arith.constant 0 : index
    %c0_107 = arith.constant 0 : index
    %97 = vector.load %arg9[%c1_104, %c2_105, %c0_106, %c0_107] : memref<2x10x10x128xbf16, #tpu.memory_space<vmem>>, vector<1x8x8x128xbf16>
    %98 = vector.shape_cast %97 : vector<1x8x8x128xbf16> to vector<8x8x128xbf16>
    %99 = vector.shape_cast %98 : vector<8x8x128xbf16> to vector<64x128xbf16>
    %100 = tpu.concatenate %96, %99 in 0 : vector<64x128xbf16>, vector<64x128xbf16> -> vector<128x128xbf16>
    %c6 = arith.constant 6 : index
    %c0_108 = arith.constant 0 : index
    %c0_109 = arith.constant 0 : index
    %101 = vector.load %arg4[%c6, %c0_108, %c0_109] : memref<9x128x128xbf16, #tpu.memory_space<vmem>>, vector<1x128x128xbf16>
    %102 = vector.shape_cast %101 : vector<1x128x128xbf16> to vector<128x128xbf16>
    %cst_110 = arith.constant dense<0.000000e+00> : vector<128x128xf32>
    %103 = tpu.matmul %100, %102, %cst_110 {dimension_numbers = #tpu.dot_dimension_numbers<[1], [0], [0], [1], [0, 0, 1, 1], [], []>} : vector<128x128xbf16>, vector<128x128xbf16>, vector<128x128xf32> -> vector<128x128xf32>
    %104 = arith.addf %93, %103 : vector<128x128xf32>
    %c0_111 = arith.constant 0 : index
    %c2_112 = arith.constant 2 : index
    %c1_113 = arith.constant 1 : index
    %c0_114 = arith.constant 0 : index
    %105 = vector.load %arg9[%c0_111, %c2_112, %c1_113, %c0_114] : memref<2x10x10x128xbf16, #tpu.memory_space<vmem>>, vector<1x8x8x128xbf16>
    %106 = vector.shape_cast %105 : vector<1x8x8x128xbf16> to vector<8x8x128xbf16>
    %107 = vector.shape_cast %106 : vector<8x8x128xbf16> to vector<64x128xbf16>
    %c1_115 = arith.constant 1 : index
    %c2_116 = arith.constant 2 : index
    %c1_117 = arith.constant 1 : index
    %c0_118 = arith.constant 0 : index
    %108 = vector.load %arg9[%c1_115, %c2_116, %c1_117, %c0_118] : memref<2x10x10x128xbf16, #tpu.memory_space<vmem>>, vector<1x8x8x128xbf16>
    %109 = vector.shape_cast %108 : vector<1x8x8x128xbf16> to vector<8x8x128xbf16>
    %110 = vector.shape_cast %109 : vector<8x8x128xbf16> to vector<64x128xbf16>
    %111 = tpu.concatenate %107, %110 in 0 : vector<64x128xbf16>, vector<64x128xbf16> -> vector<128x128xbf16>
    %c7 = arith.constant 7 : index
    %c0_119 = arith.constant 0 : index
    %c0_120 = arith.constant 0 : index
    %112 = vector.load %arg4[%c7, %c0_119, %c0_120] : memref<9x128x128xbf16, #tpu.memory_space<vmem>>, vector<1x128x128xbf16>
    %113 = vector.shape_cast %112 : vector<1x128x128xbf16> to vector<128x128xbf16>
    %cst_121 = arith.constant dense<0.000000e+00> : vector<128x128xf32>
    %114 = tpu.matmul %111, %113, %cst_121 {dimension_numbers = #tpu.dot_dimension_numbers<[1], [0], [0], [1], [0, 0, 1, 1], [], []>} : vector<128x128xbf16>, vector<128x128xbf16>, vector<128x128xf32> -> vector<128x128xf32>
    %115 = arith.addf %104, %114 : vector<128x128xf32>
    %c0_122 = arith.constant 0 : index
    %c2_123 = arith.constant 2 : index
    %c2_124 = arith.constant 2 : index
    %c0_125 = arith.constant 0 : index
    %116 = vector.load %arg9[%c0_122, %c2_123, %c2_124, %c0_125] : memref<2x10x10x128xbf16, #tpu.memory_space<vmem>>, vector<1x8x8x128xbf16>
    %117 = vector.shape_cast %116 : vector<1x8x8x128xbf16> to vector<8x8x128xbf16>
    %118 = vector.shape_cast %117 : vector<8x8x128xbf16> to vector<64x128xbf16>
    %c1_126 = arith.constant 1 : index
    %c2_127 = arith.constant 2 : index
    %c2_128 = arith.constant 2 : index
    %c0_129 = arith.constant 0 : index
    %119 = vector.load %arg9[%c1_126, %c2_127, %c2_128, %c0_129] : memref<2x10x10x128xbf16, #tpu.memory_space<vmem>>, vector<1x8x8x128xbf16>
    %120 = vector.shape_cast %119 : vector<1x8x8x128xbf16> to vector<8x8x128xbf16>
    %121 = vector.shape_cast %120 : vector<8x8x128xbf16> to vector<64x128xbf16>
    %122 = tpu.concatenate %118, %121 in 0 : vector<64x128xbf16>, vector<64x128xbf16> -> vector<128x128xbf16>
    %c8 = arith.constant 8 : index
    %c0_130 = arith.constant 0 : index
    %c0_131 = arith.constant 0 : index
    %123 = vector.load %arg4[%c8, %c0_130, %c0_131] : memref<9x128x128xbf16, #tpu.memory_space<vmem>>, vector<1x128x128xbf16>
    %124 = vector.shape_cast %123 : vector<1x128x128xbf16> to vector<128x128xbf16>
    %cst_132 = arith.constant dense<0.000000e+00> : vector<128x128xf32>
    %125 = tpu.matmul %122, %124, %cst_132 {dimension_numbers = #tpu.dot_dimension_numbers<[1], [0], [0], [1], [0, 0, 1, 1], [], []>} : vector<128x128xbf16>, vector<128x128xbf16>, vector<128x128xf32> -> vector<128x128xf32>
    %126 = arith.addf %115, %125 : vector<128x128xf32>
    %c0_133 = arith.constant 0 : index
    %c0_134 = arith.constant 0 : index
    %127 = vector.load %arg5[%c0_133, %c0_134] : memref<1x128xf32, #tpu.memory_space<vmem>>, vector<1x128xf32>
    %128 = vector.broadcast %127 : vector<1x128xf32> to vector<128x128xf32>
    %129 = arith.addf %126, %128 : vector<128x128xf32>
    %c0_135 = arith.constant 0 : index
    %c0_136 = arith.constant 0 : index
    %130 = vector.load %arg6[%c0_135, %c0_136] : memref<40x128xbf16, #tpu.memory_space<vmem>>, vector<40x128xbf16>
    %cst_137 = arith.constant dense<0.000000e+00> : vector<128x128xf32>
    %131 = tpu.matmul %1, %130, %cst_137 {dimension_numbers = #tpu.dot_dimension_numbers<[1], [0], [0], [1], [0, 0, 1, 1], [], []>} : vector<128x40xbf16>, vector<40x128xbf16>, vector<128x128xf32> -> vector<128x128xf32>
    %c0_138 = arith.constant 0 : index
    %c0_139 = arith.constant 0 : index
    %132 = vector.load %arg7[%c0_138, %c0_139] : memref<1x128xf32, #tpu.memory_space<vmem>>, vector<1x128xf32>
    %133 = vector.broadcast %132 : vector<1x128xf32> to vector<128x128xf32>
    %134 = arith.addf %131, %133 : vector<128x128xf32>
    %135 = arith.addf %129, %134 : vector<128x128xf32>
    %cst_140 = arith.constant 0.000000e+00 : f32
    %136 = vector.broadcast %cst_140 : f32 to vector<128x128xf32>
    %137 = arith.maximumf %135, %136 : vector<128x128xf32>
    %138 = vector.shape_cast %137 : vector<128x128xf32> to vector<2x64x128xf32>
    %c0_141 = arith.constant 0 : index
    %c0_142 = arith.constant 0 : index
    %c0_143 = arith.constant 0 : index
    %139 = vector.load %arg8[%c0_141, %c0_142, %c0_143] : memref<2x64x128xf32, #tpu.memory_space<vmem>>, vector<2x64x128xf32>
    tpu.vector_store %arg8[%c0_141, %c0_142, %c0_143], %138 {strides = array<i32>} : memref<2x64x128xf32, #tpu.memory_space<vmem>>, vector<2x64x128xf32>,
    return
  }
  func.func @transform_0(%arg0: i32) -> (i32, i32, i32) {
    %c0_i32 = arith.constant 0 : i32
    %c0_i32_0 = arith.constant 0 : i32
    %c0_i32_1 = arith.constant 0 : i32
    return %arg0, %c0_i32, %c0_i32_0 : i32, i32, i32
  }
  func.func @transform_1(%arg0: i32) -> (i32, i32) {
    %c0_i32 = arith.constant 0 : i32
    %c0_i32_0 = arith.constant 0 : i32
    %c0_i32_1 = arith.constant 0 : i32
    return %c0_i32, %c0_i32_0 : i32, i32
  }
  func.func @transform_2(%arg0: i32) -> (i32, i32) {
    %c0_i32 = arith.constant 0 : i32
    %c0_i32_0 = arith.constant 0 : i32
    %c0_i32_1 = arith.constant 0 : i32
    return %c0_i32, %c0_i32_0 : i32, i32
  }
  func.func @transform_3(%arg0: i32) -> (i32, i32, i32) {
    %c0_i32 = arith.constant 0 : i32
    %c0_i32_0 = arith.constant 0 : i32
    %c0_i32_1 = arith.constant 0 : i32
    %c0_i32_2 = arith.constant 0 : i32
    return %c0_i32, %c0_i32_0, %c0_i32_1 : i32, i32, i32
  }
  func.func @transform_4(%arg0: i32) -> (i32, i32) {
    %c0_i32 = arith.constant 0 : i32
    %c0_i32_0 = arith.constant 0 : i32
    %c0_i32_1 = arith.constant 0 : i32
    return %c0_i32, %c0_i32_0 : i32, i32
  }
  func.func @transform_5(%arg0: i32) -> (i32, i32) {
    %c0_i32 = arith.constant 0 : i32
    %c0_i32_0 = arith.constant 0 : i32
    %c0_i32_1 = arith.constant 0 : i32
    return %c0_i32, %c0_i32_0 : i32, i32
  }
  func.func @transform_6(%arg0: i32) -> (i32, i32) {
    %c0_i32 = arith.constant 0 : i32
    %c0_i32_0 = arith.constant 0 : i32
    %c0_i32_1 = arith.constant 0 : i32
    return %c0_i32, %c0_i32_0 : i32, i32
  }
  func.func @transform_7(%arg0: i32) -> (i32, i32, i32) {
    %c0_i32 = arith.constant 0 : i32
    %c0_i32_0 = arith.constant 0 : i32
    %c0_i32_1 = arith.constant 0 : i32
    return %arg0, %c0_i32, %c0_i32_0 : i32, i32, i32
  }
}

</mosaic_0001>

<llo_original>
// kernel: resblock_forward.1
$region0: #{resblock_forward.1}
  #allocation0 [shape = 'u32[]', space=smem, size = 0x4, offset = 0x4, fixed_abs, tag = 'smem constant byte address 0x4 - core index']
  #allocation1 [shape = 'u32[72,128]{1,0:T(1,128)}', space=vmem, size = 0x9000, scoped, tag = 'internal scratch']
  #allocation2 [shape = 'bf16[2,10,10,128]{3,2,1,0:T(8,128)(2,1)}', space=vmem, size = 0x14000, scoped, tag = 'scratch operand']
  %s0 = inlined_call_operand.vmem [shape: bf16[2,64,40], index: 0, kind: input, shape index: {}]
  %s1 = inlined_call_operand.vmem [shape: bf16[40,128], index: 1, kind: input, shape index: {}]
  %s2 = inlined_call_operand.vmem [shape: f32[1,128], index: 2, kind: input, shape index: {}]
  %s3 = inlined_call_operand.vmem [shape: bf16[9,128,128], index: 3, kind: input, shape index: {}]
  %s4 = inlined_call_operand.vmem [shape: f32[1,128], index: 4, kind: input, shape index: {}]
  %s5 = inlined_call_operand.vmem [shape: bf16[40,128], index: 5, kind: input, shape index: {}]
  %s6 = inlined_call_operand.vmem [shape: f32[1,128], index: 6, kind: input, shape index: {}]
  %s7 = inlined_call_operand.vmem [shape: f32[2,64,128], index: 7, kind: output, shape index: {}]
  %s8 = sld [smem:[#allocation0]]
  $region38: #{resblock_forward.1} parent=0
    _
  %s10 = ssub.s32 1, %s8
  %s11 = scalar_select 0, %s10, %s8
  // Predicated region
  $region2: #{resblock_forward.1} parent=0 // pred_check
    _
  $region3: #{resblock_forward.1} parent=0 // pred_check_branch
    %13 = sbr.rel (0) target = $region5
  $region4: #{resblock_forward.1} parent=0 // pred_region
    _
  $region5: #{resblock_forward.1} parent=0 // pred_fallthru
    _
  // Predicated region
  $region6: #{resblock_forward.1} parent=0 // pred_check
    _
  $region7: #{resblock_forward.1} parent=0 // pred_check_branch
    %15 = sbr.rel (0) target = $region9
  $region8: #{resblock_forward.1} parent=0 // pred_region
    _
  $region9: #{resblock_forward.1} parent=0 // pred_fallthru
    _
  // Predicated region
  $region10: #{resblock_forward.1} parent=0 // pred_check
    _
  $region11: #{resblock_forward.1} parent=0 // pred_check_branch
    %17 = sbr.rel (0) target = $region13
  $region12: #{resblock_forward.1} parent=0 // pred_region
    _
  $region13: #{resblock_forward.1} parent=0 // pred_fallthru
    _
  // Predicated region
  $region14: #{resblock_forward.1} parent=0 // pred_check
    _
  $region15: #{resblock_forward.1} parent=0 // pred_check_branch
    %19 = sbr.rel (0) target = $region17
  $region16: #{resblock_forward.1} parent=0 // pred_region
    _
  $region17: #{resblock_forward.1} parent=0 // pred_fallthru
    _
  // Predicated region
  $region18: #{resblock_forward.1} parent=0 // pred_check
    _
  $region19: #{resblock_forward.1} parent=0 // pred_check_branch
    %21 = sbr.rel (0) target = $region21
  $region20: #{resblock_forward.1} parent=0 // pred_region
    _
  $region21: #{resblock_forward.1} parent=0 // pred_fallthru
    _
  // Predicated region
  $region22: #{resblock_forward.1} parent=0 // pred_check
    _
  $region23: #{resblock_forward.1} parent=0 // pred_check_branch
    %23 = sbr.rel (0) target = $region25
  $region24: #{resblock_forward.1} parent=0 // pred_region
    _
  $region25: #{resblock_forward.1} parent=0 // pred_fallthru
    _
  // Predicated region
  $region26: #{resblock_forward.1} parent=0 // pred_check
    _
  $region27: #{resblock_forward.1} parent=0 // pred_check_branch
    %25 = sbr.rel (0) target = $region29
  $region28: #{resblock_forward.1} parent=0 // pred_region
    _
  $region29: #{resblock_forward.1} parent=0 // pred_fallthru
    _
  %v27 = vld [vmem:[%s0] sm:$0xf]
  %v28 = vld [vmem:[%s0 + $0x4] sm:$0xf]
  %v29 = vld [vmem:[%s0 + $0x8] sm:$0xf]
  %v30 = vld [vmem:[%s0 + $0xc] sm:$0xf]
  %v31 = vld [vmem:[%s0 + $0x10] sm:$0xf]
  %v32 = vld [vmem:[%s0 + $0x14] sm:$0xf]
  %v33 = vld [vmem:[%s0 + $0x18] sm:$0xf]
  %v34 = vld [vmem:[%s0 + $0x1c] sm:$0xf]
  %v35 = vld [vmem:[%s0 + $0x20] sm:$0xf]
  %v36 = vld [vmem:[%s0 + $0x24] sm:$0xf]
  %v37 = vld [vmem:[%s0 + $0x28] sm:$0xf]
  %v38 = vld [vmem:[%s0 + $0x2c] sm:$0xf]
  %v39 = vld [vmem:[%s0 + $0x30] sm:$0xf]
  %v40 = vld [vmem:[%s0 + $0x34] sm:$0xf]
  %v41 = vld [vmem:[%s0 + $0x38] sm:$0xf]
  %v42 = vld [vmem:[%s0 + $0x3c] sm:$0xf]
  %v43 = vld [vmem:[%s1] sm:$0xf]
  %v44 = vld [vmem:[%s1 + $0x4] sm:$0xf]
  %v45 = vld [vmem:[%s1 + $0x8] sm:$0xf]
  %v46 = vld [vmem:[%s1 + $0xc] sm:$0xf]
  %v47 = vld [vmem:[%s1 + $0x10] sm:$0xf]
  %v48 = vld [vmem:[%s2] sm:$0x1]
  %v50 = vperm.slane %v48, 0
  %v68 = vunpack.c.l.b16 %v27
  %v69 = vunpack.c.l.b16 %v28
  %v70 = vunpack.c.l.b16 %v29
  %v71 = vunpack.c.l.b16 %v30
  %v72 = vunpack.c.l.b16 %v31
  %v73 = vunpack.c.l.b16 %v32
  %v74 = vunpack.c.l.b16 %v33
  %v75 = vunpack.c.l.b16 %v34
  %v76 = vunpack.c.l.b16 %v35
  %v77 = vunpack.c.l.b16 %v36
  %v78 = vunpack.c.l.b16 %v37
  %v79 = vunpack.c.l.b16 %v38
  %v80 = vunpack.c.l.b16 %v39
  %v81 = vunpack.c.l.b16 %v40
  %v82 = vunpack.c.l.b16 %v41
  %v83 = vunpack.c.l.b16 %v42
  %v84 = vpack.c.b16 %v69, %v68
  %v85 = vpack.c.b16 %v71, %v70
  %v86 = vpack.c.b16 %v73, %v72
  %v87 = vpack.c.b16 %v75, %v74
  %v88 = vpack.c.b16 %v77, %v76
  %v89 = vpack.c.b16 %v79, %v78
  %v90 = vpack.c.b16 %v81, %v80
  %v91 = vpack.c.b16 %v83, %v82
  %v97 = vunpack.c.l.b16 %v43
  %v98 = vunpack.c.l.b16 %v44
  %v99 = vunpack.c.l.b16 %v45
  %v100 = vunpack.c.l.b16 %v46
  %v101 = vunpack.c.l.b16 %v47
  %v102 = vpack.c.b16 %v98, %v97
  %v103 = vpack.c.b16 %v100, %v99
  %v104 = vpack.c.b16 %v101, %v101
  %vm107 = vcmask 326656
  %v109 = vsel %vm107, %v84, 0
  %v112 = vsel %vm107, %v85, 0
  %v115 = vsel %vm107, %v86, 0
  %v118 = vsel %vm107, %v87, 0
  %v121 = vsel %vm107, %v88, 0
  %v124 = vsel %vm107, %v89, 0
  %v127 = vsel %vm107, %v90, 0
  %v130 = vsel %vm107, %v91, 0
  %vm132 = vcmask 1043456
  %v134 = vsel %vm132, %v104, 0
  %136 = vmatpush.bf16.msra.mxu0 0
  %137 = vmatpush.bf16.msra.mxu0 0
  %138 = vmatpush.bf16.msra.mxu0 0
  %139 = vmatpush.bf16.msra.mxu0 0
  %140 = vmatpush.bf16.msra.mxu0 0
  %141 = vmatpush.bf16.msra.mxu0 %v134
  %142 = vmatpush.bf16.msra.mxu0 %v103
  %143 = vmatpush.bf16.msra.mxu0 %v102
  %144 = vmatmul.bf16.gmra.mxu0 %v109
  %v145 = vpop.f32.mrf.mxu0
  %v146 = vadd.f32 %v50, %v145
  %v147 = vpop.f32.mrf.mxu0
  %v148 = vadd.f32 %v50, %v147
  %149 = vmatmul.bf16.gmra.mxu0 %v112
  %v150 = vpop.f32.mrf.mxu0
  %v151 = vadd.f32 %v50, %v150
  %v152 = vpop.f32.mrf.mxu0
  %v153 = vadd.f32 %v50, %v152
  %154 = vmatmul.bf16.gmra.mxu0 %v115
  %v155 = vpop.f32.mrf.mxu0
  %v156 = vadd.f32 %v50, %v155
  %v157 = vpop.f32.mrf.mxu0
  %v158 = vadd.f32 %v50, %v157
  %159 = vmatmul.bf16.gmra.mxu0 %v118
  %v160 = vpop.f32.mrf.mxu0
  %v161 = vadd.f32 %v50, %v160
  %v162 = vpop.f32.mrf.mxu0
  %v163 = vadd.f32 %v50, %v162
  %164 = vmatmul.bf16.gmra.mxu0 %v121
  %v165 = vpop.f32.mrf.mxu0
  %v166 = vadd.f32 %v50, %v165
  %v167 = vpop.f32.mrf.mxu0
  %v168 = vadd.f32 %v50, %v167
  %169 = vmatmul.bf16.gmra.mxu0 %v124
  %v170 = vpop.f32.mrf.mxu0
  %v171 = vadd.f32 %v50, %v170
  %v172 = vpop.f32.mrf.mxu0
  %v173 = vadd.f32 %v50, %v172
  %174 = vmatmul.bf16.gmra.mxu0 %v127
  %v175 = vpop.f32.mrf.mxu0
  %v176 = vadd.f32 %v50, %v175
  %v177 = vpop.f32.mrf.mxu0
  %v178 = vadd.f32 %v50, %v177
  %179 = vmatmul.bf16.gmra.mxu0 %v130
  %v180 = vpop.f32.mrf.mxu0
  %v181 = vadd.f32 %v50, %v180
  %v182 = vpop.f32.mrf.mxu0
  %v183 = vadd.f32 %v50, %v182
  %184 = vdwg.mxu0
  %v185 = vmax.f32 %v146, 0.0
  %v186 = vmax.f32 %v148, 0.0
  %v187 = vmax.f32 %v151, 0.0
  %v188 = vmax.f32 %v153, 0.0
  %v189 = vmax.f32 %v156, 0.0
  %v190 = vmax.f32 %v158, 0.0
  %v191 = vmax.f32 %v161, 0.0
  %v192 = vmax.f32 %v163, 0.0
  %v193 = vmax.f32 %v166, 0.0
  %v194 = vmax.f32 %v168, 0.0
  %v195 = vmax.f32 %v171, 0.0
  %v196 = vmax.f32 %v173, 0.0
  %v197 = vmax.f32 %v176, 0.0
  %v198 = vmax.f32 %v178, 0.0
  %v199 = vmax.f32 %v181, 0.0
  %v200 = vmax.f32 %v183, 0.0
  %201 = vst [vmem:[#allocation2] sm:$0xf] 0
  %202 = vst [vmem:[#allocation2 + $0x4] sm:$0x1] 0
  %203 = vst [vmem:[#allocation2 + $0x50] sm:$0xf] 0
  %204 = vst [vmem:[#allocation2 + $0x54] sm:$0x1] 0
  %s205 = scalar_lea.vmem [#allocation2], 72
  %206 = vst [vmem:[%s205] sm:$0xf] 0
  %207 = vst [vmem:[%s205 + $0x4] sm:$0x1] 0
  %208 = vst [vmem:[%s205 + $0x50] sm:$0xf] 0
  %209 = vst [vmem:[%s205 + $0x54] sm:$0x1] 0
  %s210 = scalar_lea.vmem [#allocation2], 8
  %vm211 = vcmask 1040384
  %vm212 = vsmask.f32 256
  %vm213 = vmand %vm211, %vm212
  %v214 = vld [vmem:[%s210] sm:$0x1]
  %v215 = vsel %vm213, 0, %v214
  %216 = vst [vmem:[%s210] sm:$0x1] %v215
  %v217 = vld [vmem:[%s210 + $0x8] sm:$0x1]
  %v218 = vsel %vm213, 0, %v217
  %219 = vst [vmem:[%s210 + $0x8] sm:$0x1] %v218
  %v220 = vld [vmem:[%s210 + $0x10] sm:$0x1]
  %v221 = vsel %vm213, 0, %v220
  %222 = vst [vmem:[%s210 + $0x10] sm:$0x1] %v221
  %v223 = vld [vmem:[%s210 + $0x18] sm:$0x1]
  %v224 = vsel %vm213, 0, %v223
  %225 = vst [vmem:[%s210 + $0x18] sm:$0x1] %v224
  %v226 = vld [vmem:[%s210 + $0x20] sm:$0x1]
  %v227 = vsel %vm213, 0, %v226
  %228 = vst [vmem:[%s210 + $0x20] sm:$0x1] %v227
  %v229 = vld [vmem:[%s210 + $0x28] sm:$0x1]
  %v230 = vsel %vm213, 0, %v229
  %231 = vst [vmem:[%s210 + $0x28] sm:$0x1] %v230
  %v232 = vld [vmem:[%s210 + $0x30] sm:$0x1]
  %v233 = vsel %vm213, 0, %v232
  %234 = vst [vmem:[%s210 + $0x30] sm:$0x1] %v233
  %v235 = vld [vmem:[%s210 + $0x38] sm:$0x1]
  %v236 = vsel %vm213, 0, %v235
  %237 = vst [vmem:[%s210 + $0x38] sm:$0x1] %v236
  %v238 = vld [vmem:[%s210 + $0x50] sm:$0x1]
  %v239 = vsel %vm213, 0, %v238
  %240 = vst [vmem:[%s210 + $0x50] sm:$0x1] %v239
  %v241 = vld [vmem:[%s210 + $0x58] sm:$0x1]
  %v242 = vsel %vm213, 0, %v241
  %243 = vst [vmem:[%s210 + $0x58] sm:$0x1] %v242
  %v244 = vld [vmem:[%s210 + $0x60] sm:$0x1]
  %v245 = vsel %vm213, 0, %v244
  %246 = vst [vmem:[%s210 + $0x60] sm:$0x1] %v245
  %v247 = vld [vmem:[%s210 + $0x68] sm:$0x1]
  %v248 = vsel %vm213, 0, %v247
  %249 = vst [vmem:[%s210 + $0x68] sm:$0x1] %v248
  %v250 = vld [vmem:[%s210 + $0x70] sm:$0x1]
  %v251 = vsel %vm213, 0, %v250
  %252 = vst [vmem:[%s210 + $0x70] sm:$0x1] %v251
  %v253 = vld [vmem:[%s210 + $0x78] sm:$0x1]
  %v254 = vsel %vm213, 0, %v253
  %255 = vst [vmem:[%s210 + $0x78] sm:$0x1] %v254
  %v256 = vld [vmem:[%s210 + $0x80] sm:$0x1]
  %v257 = vsel %vm213, 0, %v256
  %258 = vst [vmem:[%s210 + $0x80] sm:$0x1] %v257
  %v259 = vld [vmem:[%s210 + $0x88] sm:$0x1]
  %v260 = vsel %vm213, 0, %v259
  %261 = vst [vmem:[%s210 + $0x88] sm:$0x1] %v260
  %vm262 = vsmask.f32 7938
  %vm263 = vmand %vm211, %vm262
  %v264 = vld [vmem:[%s210 + $0x4] sm:$0x1]
  %v265 = vsel %vm263, 0, %v264
  %266 = vst [vmem:[%s210 + $0x4] sm:$0x1] %v265
  %v267 = vld [vmem:[%s210 + $0xc] sm:$0x1]
  %v268 = vsel %vm263, 0, %v267
  %269 = vst [vmem:[%s210 + $0xc] sm:$0x1] %v268
  %v270 = vld [vmem:[%s210 + $0x14] sm:$0x1]
  %v271 = vsel %vm263, 0, %v270
  %272 = vst [vmem:[%s210 + $0x14] sm:$0x1] %v271
  %v273 = vld [vmem:[%s210 + $0x1c] sm:$0x1]
  %v274 = vsel %vm263, 0, %v273
  %275 = vst [vmem:[%s210 + $0x1c] sm:$0x1] %v274
  %v276 = vld [vmem:[%s210 + $0x24] sm:$0x1]
  %v277 = vsel %vm263, 0, %v276
  %278 = vst [vmem:[%s210 + $0x24] sm:$0x1] %v277
  %v279 = vld [vmem:[%s210 + $0x2c] sm:$0x1]
  %v280 = vsel %vm263, 0, %v279
  %281 = vst [vmem:[%s210 + $0x2c] sm:$0x1] %v280
  %v282 = vld [vmem:[%s210 + $0x34] sm:$0x1]
  %v283 = vsel %vm263, 0, %v282
  %284 = vst [vmem:[%s210 + $0x34] sm:$0x1] %v283
  %v285 = vld [vmem:[%s210 + $0x3c] sm:$0x1]
  %v286 = vsel %vm263, 0, %v285
  %287 = vst [vmem:[%s210 + $0x3c] sm:$0x1] %v286
  %v288 = vld [vmem:[%s210 + $0x54] sm:$0x1]
  %v289 = vsel %vm263, 0, %v288
  %290 = vst [vmem:[%s210 + $0x54] sm:$0x1] %v289
  %v291 = vld [vmem:[%s210 + $0x5c] sm:$0x1]
  %v292 = vsel %vm263, 0, %v291
  %293 = vst [vmem:[%s210 + $0x5c] sm:$0x1] %v292
  %v294 = vld [vmem:[%s210 + $0x64] sm:$0x1]
  %v295 = vsel %vm263, 0, %v294
  %296 = vst [vmem:[%s210 + $0x64] sm:$0x1] %v295
  %v297 = vld [vmem:[%s210 + $0x6c] sm:$0x1]
  %v298 = vsel %vm263, 0, %v297
  %299 = vst [vmem:[%s210 + $0x6c] sm:$0x1] %v298
  %v300 = vld [vmem:[%s210 + $0x74] sm:$0x1]
  %v301 = vsel %vm263, 0, %v300
  %302 = vst [vmem:[%s210 + $0x74] sm:$0x1] %v301
  %v303 = vld [vmem:[%s210 + $0x7c] sm:$0x1]
  %v304 = vsel %vm263, 0, %v303
  %305 = vst [vmem:[%s210 + $0x7c] sm:$0x1] %v304
  %v306 = vld [vmem:[%s210 + $0x84] sm:$0x1]
  %v307 = vsel %vm263, 0, %v306
  %308 = vst [vmem:[%s210 + $0x84] sm:$0x1] %v307
  %v309 = vld [vmem:[%s210 + $0x8c] sm:$0x1]
  %v310 = vsel %vm263, 0, %v309
  %311 = vst [vmem:[%s210 + $0x8c] sm:$0x1] %v310
  %v312 = vpack.c.bf16 %v185, %v185
  %v313 = vpack.c.bf16 %v186, %v186
  %v314 = vpack.c.bf16 %v187, %v187
  %v315 = vpack.c.bf16 %v188, %v188
  %v316 = vpack.c.bf16 %v189, %v189
  %v317 = vpack.c.bf16 %v190, %v190
  %v318 = vpack.c.bf16 %v191, %v191
  %v319 = vpack.c.bf16 %v192, %v192
  %v321 = vshrl.u32 %v312, 16
  %v323 = vrot.slane %v321, 7
  %v324 = vshll.u32 %v312, 16
  %v326 = vor.u32 %v323, %v324
  %v327 = vrot.slane %v323, 4
  %v329 = vshrl.u32 %v313, 16
  %v331 = vrot.slane %v329, 7
  %v332 = vshll.u32 %v313, 16
  %v334 = vor.u32 %v331, %v332
  %v335 = vrot.slane %v331, 4
  %v337 = vshrl.u32 %v314, 16
  %v339 = vrot.slane %v337, 7
  %v340 = vshll.u32 %v314, 16
  %v342 = vor.u32 %v339, %v340
  %v343 = vrot.slane %v339, 4
  %v345 = vshrl.u32 %v315, 16
  %v347 = vrot.slane %v345, 7
  %v348 = vshll.u32 %v315, 16
  %v350 = vor.u32 %v347, %v348
  %v351 = vrot.slane %v347, 4
  %v353 = vshrl.u32 %v316, 16
  %v355 = vrot.slane %v353, 7
  %v356 = vshll.u32 %v316, 16
  %v358 = vor.u32 %v355, %v356
  %v359 = vrot.slane %v355, 4
  %v361 = vshrl.u32 %v317, 16
  %v363 = vrot.slane %v361, 7
  %v364 = vshll.u32 %v317, 16
  %v366 = vor.u32 %v363, %v364
  %v367 = vrot.slane %v363, 4
  %v369 = vshrl.u32 %v318, 16
  %v371 = vrot.slane %v369, 7
  %v372 = vshll.u32 %v318, 16
  %v374 = vor.u32 %v371, %v372
  %v375 = vrot.slane %v371, 4
  %v377 = vshrl.u32 %v319, 16
  %v379 = vrot.slane %v377, 7
  %v380 = vshll.u32 %v319, 16
  %v382 = vor.u32 %v379, %v380
  %v383 = vrot.slane %v379, 4
  %vm400 = vcmask 1043456
  %vm401 = vmand %vm400, %vm262
  %v402 = vld [vmem:[%s210] sm:$0xf]
  %v403 = vsel %vm401, %v326, %v402
  %404 = vst [vmem:[%s210] sm:$0xf] %v403
  %v405 = vld [vmem:[%s210 + $0x4] sm:$0x1]
  %v406 = vsel %vm213, %v327, %v405
  %407 = vst [vmem:[%s210 + $0x4] sm:$0x1] %v406
  %v408 = vld [vmem:[%s210 + $0x8] sm:$0xf]
  %v409 = vsel %vm401, %v334, %v408
  %410 = vst [vmem:[%s210 + $0x8] sm:$0xf] %v409
  %v411 = vld [vmem:[%s210 + $0xc] sm:$0x1]
  %v412 = vsel %vm213, %v335, %v411
  %413 = vst [vmem:[%s210 + $0xc] sm:$0x1] %v412
  %v414 = vld [vmem:[%s210 + $0x10] sm:$0xf]
  %v415 = vsel %vm401, %v342, %v414
  %416 = vst [vmem:[%s210 + $0x10] sm:$0xf] %v415
  %v417 = vld [vmem:[%s210 + $0x14] sm:$0x1]
  %v418 = vsel %vm213, %v343, %v417
  %419 = vst [vmem:[%s210 + $0x14] sm:$0x1] %v418
  %v420 = vld [vmem:[%s210 + $0x18] sm:$0xf]
  %v421 = vsel %vm401, %v350, %v420
  %422 = vst [vmem:[%s210 + $0x18] sm:$0xf] %v421
  %v423 = vld [vmem:[%s210 + $0x1c] sm:$0x1]
  %v424 = vsel %vm213, %v351, %v423
  %425 = vst [vmem:[%s210 + $0x1c] sm:$0x1] %v424
  %v426 = vld [vmem:[%s210 + $0x20] sm:$0xf]
  %v427 = vsel %vm401, %v358, %v426
  %428 = vst [vmem:[%s210 + $0x20] sm:$0xf] %v427
  %v429 = vld [vmem:[%s210 + $0x24] sm:$0x1]
  %v430 = vsel %vm213, %v359, %v429
  %431 = vst [vmem:[%s210 + $0x24] sm:$0x1] %v430
  %v432 = vld [vmem:[%s210 + $0x28] sm:$0xf]
  %v433 = vsel %vm401, %v366, %v432
  %434 = vst [vmem:[%s210 + $0x28] sm:$0xf] %v433
  %v435 = vld [vmem:[%s210 + $0x2c] sm:$0x1]
  %v436 = vsel %vm213, %v367, %v435
  %437 = vst [vmem:[%s210 + $0x2c] sm:$0x1] %v436
  %v438 = vld [vmem:[%s210 + $0x30] sm:$0xf]
  %v439 = vsel %vm401, %v374, %v438
  %440 = vst [vmem:[%s210 + $0x30] sm:$0xf] %v439
  %v441 = vld [vmem:[%s210 + $0x34] sm:$0x1]
  %v442 = vsel %vm213, %v375, %v441
  %443 = vst [vmem:[%s210 + $0x34] sm:$0x1] %v442
  %v444 = vld [vmem:[%s210 + $0x38] sm:$0xf]
  %v445 = vsel %vm401, %v382, %v444
  %446 = vst [vmem:[%s210 + $0x38] sm:$0xf] %v445
  %v447 = vld [vmem:[%s210 + $0x3c] sm:$0x1]
  %v448 = vsel %vm213, %v383, %v447
  %449 = vst [vmem:[%s210 + $0x3c] sm:$0x1] %v448
  %v450 = vpack.c.bf16 %v193, %v193
  %v451 = vpack.c.bf16 %v194, %v194
  %v452 = vpack.c.bf16 %v195, %v195
  %v453 = vpack.c.bf16 %v196, %v196
  %v454 = vpack.c.bf16 %v197, %v197
  %v455 = vpack.c.bf16 %v198, %v198
  %v456 = vpack.c.bf16 %v199, %v199
  %v457 = vpack.c.bf16 %v200, %v200
  %v459 = vshrl.u32 %v450, 16
  %v461 = vrot.slane %v459, 7
  %v462 = vshll.u32 %v450, 16
  %v464 = vor.u32 %v461, %v462
  %v465 = vrot.slane %v461, 4
  %v467 = vshrl.u32 %v451, 16
  %v469 = vrot.slane %v467, 7
  %v470 = vshll.u32 %v451, 16
  %v472 = vor.u32 %v469, %v470
  %v473 = vrot.slane %v469, 4
  %v475 = vshrl.u32 %v452, 16
  %v477 = vrot.slane %v475, 7
  %v478 = vshll.u32 %v452, 16
  %v480 = vor.u32 %v477, %v478
  %v481 = vrot.slane %v477, 4
  %v483 = vshrl.u32 %v453, 16
  %v485 = vrot.slane %v483, 7
  %v486 = vshll.u32 %v453, 16
  %v488 = vor.u32 %v485, %v486
  %v489 = vrot.slane %v485, 4
  %v491 = vshrl.u32 %v454, 16
  %v493 = vrot.slane %v491, 7
  %v494 = vshll.u32 %v454, 16
  %v496 = vor.u32 %v493, %v494
  %v497 = vrot.slane %v493, 4
  %v499 = vshrl.u32 %v455, 16
  %v501 = vrot.slane %v499, 7
  %v502 = vshll.u32 %v455, 16
  %v504 = vor.u32 %v501, %v502
  %v505 = vrot.slane %v501, 4
  %v507 = vshrl.u32 %v456, 16
  %v509 = vrot.slane %v507, 7
  %v510 = vshll.u32 %v456, 16
  %v512 = vor.u32 %v509, %v510
  %v513 = vrot.slane %v509, 4
  %v515 = vshrl.u32 %v457, 16
  %v517 = vrot.slane %v515, 7
  %v518 = vshll.u32 %v457, 16
  %v520 = vor.u32 %v517, %v518
  %v521 = vrot.slane %v517, 4
  %s538 = scalar_lea.vmem [#allocation2], 88
  %v539 = vld [vmem:[%s538] sm:$0xf]
  %v540 = vsel %vm401, %v464, %v539
  %541 = vst [vmem:[%s538] sm:$0xf] %v540
  %v542 = vld [vmem:[%s538 + $0x4] sm:$0x1]
  %v543 = vsel %vm213, %v465, %v542
  %544 = vst [vmem:[%s538 + $0x4] sm:$0x1] %v543
  %v545 = vld [vmem:[%s538 + $0x8] sm:$0xf]
  %v546 = vsel %vm401, %v472, %v545
  %547 = vst [vmem:[%s538 + $0x8] sm:$0xf] %v546
  %v548 = vld [vmem:[%s538 + $0xc] sm:$0x1]
  %v549 = vsel %vm213, %v473, %v548
  %550 = vst [vmem:[%s538 + $0xc] sm:$0x1] %v549
  %v551 = vld [vmem:[%s538 + $0x10] sm:$0xf]
  %v552 = vsel %vm401, %v480, %v551
  %553 = vst [vmem:[%s538 + $0x10] sm:$0xf] %v552
  %v554 = vld [vmem:[%s538 + $0x14] sm:$0x1]
  %v555 = vsel %vm213, %v481, %v554
  %556 = vst [vmem:[%s538 + $0x14] sm:$0x1] %v555
  %v557 = vld [vmem:[%s538 + $0x18] sm:$0xf]
  %v558 = vsel %vm401, %v488, %v557
  %559 = vst [vmem:[%s538 + $0x18] sm:$0xf] %v558
  %v560 = vld [vmem:[%s538 + $0x1c] sm:$0x1]
  %v561 = vsel %vm213, %v489, %v560
  %562 = vst [vmem:[%s538 + $0x1c] sm:$0x1] %v561
  %v563 = vld [vmem:[%s538 + $0x20] sm:$0xf]
  %v564 = vsel %vm401, %v496, %v563
  %565 = vst [vmem:[%s538 + $0x20] sm:$0xf] %v564
  %v566 = vld [vmem:[%s538 + $0x24] sm:$0x1]
  %v567 = vsel %vm213, %v497, %v566
  %568 = vst [vmem:[%s538 + $0x24] sm:$0x1] %v567
  %v569 = vld [vmem:[%s538 + $0x28] sm:$0xf]
  %v570 = vsel %vm401, %v504, %v569
  %571 = vst [vmem:[%s538 + $0x28] sm:$0xf] %v570
  %v572 = vld [vmem:[%s538 + $0x2c] sm:$0x1]
  %v573 = vsel %vm213, %v505, %v572
  %574 = vst [vmem:[%s538 + $0x2c] sm:$0x1] %v573
  %v575 = vld [vmem:[%s538 + $0x30] sm:$0xf]
  %v576 = vsel %vm401, %v512, %v575
  %577 = vst [vmem:[%s538 + $0x30] sm:$0xf] %v576
  %v578 = vld [vmem:[%s538 + $0x34] sm:$0x1]
  %v579 = vsel %vm213, %v513, %v578
  %580 = vst [vmem:[%s538 + $0x34] sm:$0x1] %v579
  %v581 = vld [vmem:[%s538 + $0x38] sm:$0xf]
  %v582 = vsel %vm401, %v520, %v581
  %583 = vst [vmem:[%s538 + $0x38] sm:$0xf] %v582
  %v584 = vld [vmem:[%s538 + $0x3c] sm:$0x1]
  %v585 = vsel %vm213, %v521, %v584
  %586 = vst [vmem:[%s538 + $0x3c] sm:$0x1] %v585
  %v587 = vld [vmem:[#allocation2] sm:$0xf]
  %v588 = vld [vmem:[#allocation2 + $0x8] sm:$0xf]
  %v589 = vld [vmem:[#allocation2 + $0x10] sm:$0xf]
  %v590 = vld [vmem:[#allocation2 + $0x18] sm:$0xf]
  %v591 = vld [vmem:[#allocation2 + $0x20] sm:$0xf]
  %v592 = vld [vmem:[#allocation2 + $0x28] sm:$0xf]
  %v593 = vld [vmem:[#allocation2 + $0x30] sm:$0xf]
  %v594 = vld [vmem:[#allocation2 + $0x38] sm:$0xf]
  %s595 = scalar_lea.vmem [#allocation2], 80
  %v596 = vld [vmem:[%s595] sm:$0xf]
  %v597 = vld [vmem:[%s595 + $0x8] sm:$0xf]
  %v598 = vld [vmem:[%s595 + $0x10] sm:$0xf]
  %v599 = vld [vmem:[%s595 + $0x18] sm:$0xf]
  %v600 = vld [vmem:[%s595 + $0x20] sm:$0xf]
  %v601 = vld [vmem:[%s595 + $0x28] sm:$0xf]
  %v602 = vld [vmem:[%s595 + $0x30] sm:$0xf]
  %v603 = vld [vmem:[%s595 + $0x38] sm:$0xf]
  %v612 = vunpack.c.l.b16 %v587
  %v613 = vunpack.c.l.b16 %v588
  %v614 = vunpack.c.l.b16 %v589
  %v615 = vunpack.c.l.b16 %v590
  %v616 = vunpack.c.l.b16 %v591
  %v617 = vunpack.c.l.b16 %v592
  %v618 = vunpack.c.l.b16 %v593
  %v619 = vunpack.c.l.b16 %v594
  %v620 = vpack.c.b16 %v613, %v612
  %v621 = vpack.c.b16 %v615, %v614
  %v622 = vpack.c.b16 %v617, %v616
  %v623 = vpack.c.b16 %v619, %v618
  %v636 = vunpack.c.l.b16 %v596
  %v637 = vunpack.c.l.b16 %v597
  %v638 = vunpack.c.l.b16 %v598
  %v639 = vunpack.c.l.b16 %v599
  %v640 = vunpack.c.l.b16 %v600
  %v641 = vunpack.c.l.b16 %v601
  %v642 = vunpack.c.l.b16 %v602
  %v643 = vunpack.c.l.b16 %v603
  %v644 = vpack.c.b16 %v637, %v636
  %v645 = vpack.c.b16 %v639, %v638
  %v646 = vpack.c.b16 %v641, %v640
  %v647 = vpack.c.b16 %v643, %v642
  %v652 = vld [vmem:[%s3] sm:$0xf]
  %v653 = vld [vmem:[%s3 + $0x4] sm:$0xf]
  %v654 = vld [vmem:[%s3 + $0x8] sm:$0xf]
  %v655 = vld [vmem:[%s3 + $0xc] sm:$0xf]
  %v656 = vld [vmem:[%s3 + $0x10] sm:$0xf]
  %v657 = vld [vmem:[%s3 + $0x14] sm:$0xf]
  %v658 = vld [vmem:[%s3 + $0x18] sm:$0xf]
  %v659 = vld [vmem:[%s3 + $0x1c] sm:$0xf]
  %v660 = vld [vmem:[%s3 + $0x20] sm:$0xf]
  %v661 = vld [vmem:[%s3 + $0x24] sm:$0xf]
  %v662 = vld [vmem:[%s3 + $0x28] sm:$0xf]
  %v663 = vld [vmem:[%s3 + $0x2c] sm:$0xf]
  %v664 = vld [vmem:[%s3 + $0x30] sm:$0xf]
  %v665 = vld [vmem:[%s3 + $0x34] sm:$0xf]
  %v666 = vld [vmem:[%s3 + $0x38] sm:$0xf]
  %v667 = vld [vmem:[%s3 + $0x3c] sm:$0xf]
  %v668 = vld [vmem:[#allocation2 + $0x4] sm:$0x1]
  %v669 = vld [vmem:[#allocation2 + $0xc] sm:$0x1]
  %v670 = vld [vmem:[#allocation2 + $0x14] sm:$0x1]
  %v671 = vld [vmem:[#allocation2 + $0x1c] sm:$0x1]
  %v672 = vld [vmem:[#allocation2 + $0x24] sm:$0x1]
  %v673 = vld [vmem:[#allocation2 + $0x2c] sm:$0x1]
  %v674 = vld [vmem:[#allocation2 + $0x34] sm:$0x1]
  %v675 = vld [vmem:[#allocation2 + $0x3c] sm:$0x1]
  %vm676 = vsmask.f32 3328
  %vm677 = vsmask.f32 7440
  %vm678 = vmor %vm676, %vm677
  %v680 = vshrl.u32 %v587, 16
  %v682 = vrot.slane %v680, 4
  %v683 = vshll.u32 %v587, 16
  %v685 = vrot.slane %v683, 5
  %v686 = vor.u32 %v682, %v685
  %v687 = vrot.slane %v686, 4
  %v689 = vshll.u32 %v668, 16
  %v691 = vrot.slane %v689, 5
  %v692 = vsel %vm678, %v687, %v691
  %v694 = vshrl.u32 %v588, 16
  %v696 = vrot.slane %v694, 4
  %v697 = vshll.u32 %v588, 16
  %v699 = vrot.slane %v697, 5
  %v700 = vor.u32 %v696, %v699
  %v701 = vrot.slane %v700, 4
  %v703 = vshll.u32 %v669, 16
  %v705 = vrot.slane %v703, 5
  %v706 = vsel %vm678, %v701, %v705
  %v708 = vshrl.u32 %v589, 16
  %v710 = vrot.slane %v708, 4
  %v711 = vshll.u32 %v589, 16
  %v713 = vrot.slane %v711, 5
  %v714 = vor.u32 %v710, %v713
  %v715 = vrot.slane %v714, 4
  %v717 = vshll.u32 %v670, 16
  %v719 = vrot.slane %v717, 5
  %v720 = vsel %vm678, %v715, %v719
  %v722 = vshrl.u32 %v590, 16
  %v724 = vrot.slane %v722, 4
  %v725 = vshll.u32 %v590, 16
  %v727 = vrot.slane %v725, 5
  %v728 = vor.u32 %v724, %v727
  %v729 = vrot.slane %v728, 4
  %v731 = vshll.u32 %v671, 16
  %v733 = vrot.slane %v731, 5
  %v734 = vsel %vm678, %v729, %v733
  %v736 = vshrl.u32 %v591, 16
  %v738 = vrot.slane %v736, 4
  %v739 = vshll.u32 %v591, 16
  %v741 = vrot.slane %v739, 5
  %v742 = vor.u32 %v738, %v741
  %v743 = vrot.slane %v742, 4
  %v745 = vshll.u32 %v672, 16
  %v747 = vrot.slane %v745, 5
  %v748 = vsel %vm678, %v743, %v747
  %v750 = vshrl.u32 %v592, 16
  %v752 = vrot.slane %v750, 4
  %v753 = vshll.u32 %v592, 16
  %v755 = vrot.slane %v753, 5
  %v756 = vor.u32 %v752, %v755
  %v757 = vrot.slane %v756, 4
  %v759 = vshll.u32 %v673, 16
  %v761 = vrot.slane %v759, 5
  %v762 = vsel %vm678, %v757, %v761
  %v764 = vshrl.u32 %v593, 16
  %v766 = vrot.slane %v764, 4
  %v767 = vshll.u32 %v593, 16
  %v769 = vrot.slane %v767, 5
  %v770 = vor.u32 %v766, %v769
  %v771 = vrot.slane %v770, 4
  %v773 = vshll.u32 %v674, 16
  %v775 = vrot.slane %v773, 5
  %v776 = vsel %vm678, %v771, %v775
  %v778 = vshrl.u32 %v594, 16
  %v780 = vrot.slane %v778, 4
  %v781 = vshll.u32 %v594, 16
  %v783 = vrot.slane %v781, 5
  %v784 = vor.u32 %v780, %v783
  %v785 = vrot.slane %v784, 4
  %v787 = vshll.u32 %v675, 16
  %v789 = vrot.slane %v787, 5
  %v790 = vsel %vm678, %v785, %v789
  %v791 = vld [vmem:[%s595 + $0x4] sm:$0x1]
  %v792 = vld [vmem:[%s595 + $0xc] sm:$0x1]
  %v793 = vld [vmem:[%s595 + $0x14] sm:$0x1]
  %v794 = vld [vmem:[%s595 + $0x1c] sm:$0x1]
  %v795 = vld [vmem:[%s595 + $0x24] sm:$0x1]
  %v796 = vld [vmem:[%s595 + $0x2c] sm:$0x1]
  %v797 = vld [vmem:[%s595 + $0x34] sm:$0x1]
  %v798 = vld [vmem:[%s595 + $0x3c] sm:$0x1]
  %v800 = vshrl.u32 %v596, 16
  %v802 = vrot.slane %v800, 4
  %v803 = vshll.u32 %v596, 16
  %v805 = vrot.slane %v803, 5
  %v806 = vor.u32 %v802, %v805
  %v807 = vrot.slane %v806, 4
  %v809 = vshll.u32 %v791, 16
  %v811 = vrot.slane %v809, 5
  %v812 = vsel %vm678, %v807, %v811
  %v814 = vshrl.u32 %v597, 16
  %v816 = vrot.slane %v814, 4
  %v817 = vshll.u32 %v597, 16
  %v819 = vrot.slane %v817, 5
  %v820 = vor.u32 %v816, %v819
  %v821 = vrot.slane %v820, 4
  %v823 = vshll.u32 %v792, 16
  %v825 = vrot.slane %v823, 5
  %v826 = vsel %vm678, %v821, %v825
  %v828 = vshrl.u32 %v598, 16
  %v830 = vrot.slane %v828, 4
  %v831 = vshll.u32 %v598, 16
  %v833 = vrot.slane %v831, 5
  %v834 = vor.u32 %v830, %v833
  %v835 = vrot.slane %v834, 4
  %v837 = vshll.u32 %v793, 16
  %v839 = vrot.slane %v837, 5
  %v840 = vsel %vm678, %v835, %v839
  %v842 = vshrl.u32 %v599, 16
  %v844 = vrot.slane %v842, 4
  %v845 = vshll.u32 %v599, 16
  %v847 = vrot.slane %v845, 5
  %v848 = vor.u32 %v844, %v847
  %v849 = vrot.slane %v848, 4
  %v851 = vshll.u32 %v794, 16
  %v853 = vrot.slane %v851, 5
  %v854 = vsel %vm678, %v849, %v853
  %v856 = vshrl.u32 %v600, 16
  %v858 = vrot.slane %v856, 4
  %v859 = vshll.u32 %v600, 16
  %v861 = vrot.slane %v859, 5
  %v862 = vor.u32 %v858, %v861
  %v863 = vrot.slane %v862, 4
  %v865 = vshll.u32 %v795, 16
  %v867 = vrot.slane %v865, 5
  %v868 = vsel %vm678, %v863, %v867
  %v870 = vshrl.u32 %v601, 16
  %v872 = vrot.slane %v870, 4
  %v873 = vshll.u32 %v601, 16
  %v875 = vrot.slane %v873, 5
  %v876 = vor.u32 %v872, %v875
  %v877 = vrot.slane %v876, 4
  %v879 = vshll.u32 %v796, 16
  %v881 = vrot.slane %v879, 5
  %v882 = vsel %vm678, %v877, %v881
  %v884 = vshrl.u32 %v602, 16
  %v886 = vrot.slane %v884, 4
  %v887 = vshll.u32 %v602, 16
  %v889 = vrot.slane %v887, 5
  %v890 = vor.u32 %v886, %v889
  %v891 = vrot.slane %v890, 4
  %v893 = vshll.u32 %v797, 16
  %v895 = vrot.slane %v893, 5
  %v896 = vsel %vm678, %v891, %v895
  %v898 = vshrl.u32 %v603, 16
  %v900 = vrot.slane %v898, 4
  %v901 = vshll.u32 %v603, 16
  %v903 = vrot.slane %v901, 5
  %v904 = vor.u32 %v900, %v903
  %v905 = vrot.slane %v904, 4
  %v907 = vshll.u32 %v798, 16
  %v909 = vrot.slane %v907, 5
  %v910 = vsel %vm678, %v905, %v909
  %v911 = vunpack.c.l.b16 %v692
  %v912 = vunpack.c.l.b16 %v706
  %v913 = vunpack.c.l.b16 %v720
  %v914 = vunpack.c.l.b16 %v734
  %v915 = vunpack.c.l.b16 %v748
  %v916 = vunpack.c.l.b16 %v762
  %v917 = vunpack.c.l.b16 %v776
  %v918 = vunpack.c.l.b16 %v790
  %v919 = vpack.c.b16 %v912, %v911
  %v920 = vpack.c.b16 %v914, %v913
  %v921 = vpack.c.b16 %v916, %v915
  %v922 = vpack.c.b16 %v918, %v917
  %v927 = vunpack.c.l.b16 %v812
  %v928 = vunpack.c.l.b16 %v826
  %v929 = vunpack.c.l.b16 %v840
  %v930 = vunpack.c.l.b16 %v854
  %v931 = vunpack.c.l.b16 %v868
  %v932 = vunpack.c.l.b16 %v882
  %v933 = vunpack.c.l.b16 %v896
  %v934 = vunpack.c.l.b16 %v910
  %v935 = vpack.c.b16 %v928, %v927
  %v936 = vpack.c.b16 %v930, %v929
  %v937 = vpack.c.b16 %v932, %v931
  %v938 = vpack.c.b16 %v934, %v933
  %s943 = scalar_lea.vmem %s3, 64
  %v944 = vld [vmem:[%s943] sm:$0xf]
  %v945 = vld [vmem:[%s943 + $0x4] sm:$0xf]
  %v946 = vld [vmem:[%s943 + $0x8] sm:$0xf]
  %v947 = vld [vmem:[%s943 + $0xc] sm:$0xf]
  %v948 = vld [vmem:[%s943 + $0x10] sm:$0xf]
  %v949 = vld [vmem:[%s943 + $0x14] sm:$0xf]
  %v950 = vld [vmem:[%s943 + $0x18] sm:$0xf]
  %v951 = vld [vmem:[%s943 + $0x1c] sm:$0xf]
  %v952 = vld [vmem:[%s943 + $0x20] sm:$0xf]
  %v953 = vld [vmem:[%s943 + $0x24] sm:$0xf]
  %v954 = vld [vmem:[%s943 + $0x28] sm:$0xf]
  %v955 = vld [vmem:[%s943 + $0x2c] sm:$0xf]
  %v956 = vld [vmem:[%s943 + $0x30] sm:$0xf]
  %v957 = vld [vmem:[%s943 + $0x34] sm:$0xf]
  %v958 = vld [vmem:[%s943 + $0x38] sm:$0xf]
  %v959 = vld [vmem:[%s943 + $0x3c] sm:$0xf]
  %v976 = vunpack.c.l.b16 %v944
  %v977 = vunpack.c.l.b16 %v945
  %v978 = vunpack.c.l.b16 %v946
  %v979 = vunpack.c.l.b16 %v947
  %v980 = vunpack.c.l.b16 %v948
  %v981 = vunpack.c.l.b16 %v949
  %v982 = vunpack.c.l.b16 %v950
  %v983 = vunpack.c.l.b16 %v951
  %v984 = vunpack.c.l.b16 %v952
  %v985 = vunpack.c.l.b16 %v953
  %v986 = vunpack.c.l.b16 %v954
  %v987 = vunpack.c.l.b16 %v955
  %v988 = vunpack.c.l.b16 %v956
  %v989 = vunpack.c.l.b16 %v957
  %v990 = vunpack.c.l.b16 %v958
  %v991 = vunpack.c.l.b16 %v959
  %v992 = vpack.c.b16 %v977, %v976
  %v993 = vpack.c.b16 %v979, %v978
  %v994 = vpack.c.b16 %v981, %v980
  %v995 = vpack.c.b16 %v983, %v982
  %v996 = vpack.c.b16 %v985, %v984
  %v997 = vpack.c.b16 %v987, %v986
  %v998 = vpack.c.b16 %v989, %v988
  %v999 = vpack.c.b16 %v991, %v990
  %1008 = vmatpush.bf16.msra.mxu0 %v999
  %1009 = vmatpush.bf16.msra.mxu0 %v998
  %1010 = vmatpush.bf16.msra.mxu0 %v997
  %1011 = vmatpush.bf16.msra.mxu0 %v996
  %1012 = vmatpush.bf16.msra.mxu0 %v995
  %1013 = vmatpush.bf16.msra.mxu0 %v994
  %1014 = vmatpush.bf16.msra.mxu0 %v993
  %1015 = vmatpush.bf16.msra.mxu0 %v992
  %1016 = vmatmul.bf16.gmra.mxu0 %v919
  %v1017 = vpop.f32.mrf.mxu0
  %v1018 = vadd.f32 0.0, %v1017
  %v1019 = vpop.f32.mrf.mxu0
  %v1020 = vadd.f32 0.0, %v1019
  %1021 = vmatmul.bf16.gmra.mxu0 %v920
  %v1022 = vpop.f32.mrf.mxu0
  %v1023 = vadd.f32 0.0, %v1022
  %v1024 = vpop.f32.mrf.mxu0
  %v1025 = vadd.f32 0.0, %v1024
  %1026 = vmatmul.bf16.gmra.mxu0 %v921
  %v1027 = vpop.f32.mrf.mxu0
  %v1028 = vadd.f32 0.0, %v1027
  %v1029 = vpop.f32.mrf.mxu0
  %v1030 = vadd.f32 0.0, %v1029
  %1031 = vmatmul.bf16.gmra.mxu0 %v922
  %v1032 = vpop.f32.mrf.mxu0
  %v1033 = vadd.f32 0.0, %v1032
  %v1034 = vpop.f32.mrf.mxu0
  %v1035 = vadd.f32 0.0, %v1034
  %1036 = vmatmul.bf16.gmra.mxu0 %v935
  %v1037 = vpop.f32.mrf.mxu0
  %v1038 = vadd.f32 0.0, %v1037
  %v1039 = vpop.f32.mrf.mxu0
  %v1040 = vadd.f32 0.0, %v1039
  %1041 = vmatmul.bf16.gmra.mxu0 %v936
  %v1042 = vpop.f32.mrf.mxu0
  %v1043 = vadd.f32 0.0, %v1042
  %v1044 = vpop.f32.mrf.mxu0
  %v1045 = vadd.f32 0.0, %v1044
  %1046 = vmatmul.bf16.gmra.mxu0 %v937
  %v1047 = vpop.f32.mrf.mxu0
  %v1048 = vadd.f32 0.0, %v1047
  %v1049 = vpop.f32.mrf.mxu0
  %v1050 = vadd.f32 0.0, %v1049
  %1051 = vmatmul.bf16.gmra.mxu0 %v938
  %v1052 = vpop.f32.mrf.mxu0
  %v1053 = vadd.f32 0.0, %v1052
  %v1054 = vpop.f32.mrf.mxu0
  %v1055 = vadd.f32 0.0, %v1054
  %1056 = vdwg.mxu0
  %v1073 = vunpack.c.l.b16 %v652
  %v1074 = vunpack.c.l.b16 %v653
  %v1075 = vunpack.c.l.b16 %v654
  %v1076 = vunpack.c.l.b16 %v655
  %v1077 = vunpack.c.l.b16 %v656
  %v1078 = vunpack.c.l.b16 %v657
  %v1079 = vunpack.c.l.b16 %v658
  %v1080 = vunpack.c.l.b16 %v659
  %v1081 = vunpack.c.l.b16 %v660
  %v1082 = vunpack.c.l.b16 %v661
  %v1083 = vunpack.c.l.b16 %v662
  %v1084 = vunpack.c.l.b16 %v663
  %v1085 = vunpack.c.l.b16 %v664
  %v1086 = vunpack.c.l.b16 %v665
  %v1087 = vunpack.c.l.b16 %v666
  %v1088 = vunpack.c.l.b16 %v667
  %v1089 = vpack.c.b16 %v1074, %v1073
  %v1090 = vpack.c.b16 %v1076, %v1075
  %v1091 = vpack.c.b16 %v1078, %v1077
  %v1092 = vpack.c.b16 %v1080, %v1079
  %v1093 = vpack.c.b16 %v1082, %v1081
  %v1094 = vpack.c.b16 %v1084, %v1083
  %v1095 = vpack.c.b16 %v1086, %v1085
  %v1096 = vpack.c.b16 %v1088, %v1087
  %1105 = vmatpush.bf16.msra.mxu0 %v1096
  %1106 = vmatpush.bf16.msra.mxu0 %v1095
  %1107 = vmatpush.bf16.msra.mxu0 %v1094
  %1108 = vmatpush.bf16.msra.mxu0 %v1093
  %1109 = vmatpush.bf16.msra.mxu0 %v1092
  %1110 = vmatpush.bf16.msra.mxu0 %v1091
  %1111 = vmatpush.bf16.msra.mxu0 %v1090
  %1112 = vmatpush.bf16.msra.mxu0 %v1089
  %1113 = vmatmul.bf16.gmra.mxu0 %v620
  %v1114 = vpop.f32.mrf.mxu0
  %v1115 = vadd.f32 %v1018, %v1114
  %v1116 = vpop.f32.mrf.mxu0
  %v1117 = vadd.f32 %v1020, %v1116
  %1118 = vmatmul.bf16.gmra.mxu0 %v621
  %v1119 = vpop.f32.mrf.mxu0
  %v1120 = vadd.f32 %v1023, %v1119
  %v1121 = vpop.f32.mrf.mxu0
  %v1122 = vadd.f32 %v1025, %v1121
  %1123 = vmatmul.bf16.gmra.mxu0 %v622
  %v1124 = vpop.f32.mrf.mxu0
  %v1125 = vadd.f32 %v1028, %v1124
  %v1126 = vpop.f32.mrf.mxu0
  %v1127 = vadd.f32 %v1030, %v1126
  %1128 = vmatmul.bf16.gmra.mxu0 %v623
  %v1129 = vpop.f32.mrf.mxu0
  %v1130 = vadd.f32 %v1033, %v1129
  %v1131 = vpop.f32.mrf.mxu0
  %v1132 = vadd.f32 %v1035, %v1131
  %1133 = vmatmul.bf16.gmra.mxu0 %v644
  %v1134 = vpop.f32.mrf.mxu0
  %v1135 = vadd.f32 %v1038, %v1134
  %v1136 = vpop.f32.mrf.mxu0
  %v1137 = vadd.f32 %v1040, %v1136
  %1138 = vmatmul.bf16.gmra.mxu0 %v645
  %v1139 = vpop.f32.mrf.mxu0
  %v1140 = vadd.f32 %v1043, %v1139
  %v1141 = vpop.f32.mrf.mxu0
  %v1142 = vadd.f32 %v1045, %v1141
  %1143 = vmatmul.bf16.gmra.mxu0 %v646
  %v1144 = vpop.f32.mrf.mxu0
  %v1145 = vadd.f32 %v1048, %v1144
  %v1146 = vpop.f32.mrf.mxu0
  %v1147 = vadd.f32 %v1050, %v1146
  %1148 = vmatmul.bf16.gmra.mxu0 %v647
  %v1149 = vpop.f32.mrf.mxu0
  %v1150 = vadd.f32 %v1053, %v1149
  %v1151 = vpop.f32.mrf.mxu0
  %v1152 = vadd.f32 %v1055, %v1151
  %1153 = vdwg.mxu0
  %v1154 = vld [vmem:[#allocation2] sm:$0xe]
  %v1155 = vld [vmem:[#allocation2 + $0x8] sm:$0xe]
  %v1156 = vld [vmem:[#allocation2 + $0x10] sm:$0xe]
  %v1157 = vld [vmem:[#allocation2 + $0x18] sm:$0xe]
  %v1158 = vld [vmem:[#allocation2 + $0x20] sm:$0xe]
  %v1159 = vld [vmem:[#allocation2 + $0x28] sm:$0xe]
  %v1160 = vld [vmem:[#allocation2 + $0x30] sm:$0xe]
  %v1161 = vld [vmem:[#allocation2 + $0x38] sm:$0xe]
  %vm1178 = vcmask 1042432
  %vm1179 = vcmask 1046532
  %vm1180 = vmor %vm1178, %vm1179
  %v1181 = vrot.slane %v1154, 5
  %v1182 = vrot.slane %v1181, 4
  %v1183 = vrot.slane %v668, 5
  %v1184 = vsel %vm1180, %v1182, %v1183
  %v1185 = vrot.slane %v1155, 5
  %v1186 = vrot.slane %v1185, 4
  %v1187 = vrot.slane %v669, 5
  %v1188 = vsel %vm1180, %v1186, %v1187
  %v1189 = vrot.slane %v1156, 5
  %v1190 = vrot.slane %v1189, 4
  %v1191 = vrot.slane %v670, 5
  %v1192 = vsel %vm1180, %v1190, %v1191
  %v1193 = vrot.slane %v1157, 5
  %v1194 = vrot.slane %v1193, 4
  %v1195 = vrot.slane %v671, 5
  %v1196 = vsel %vm1180, %v1194, %v1195
  %v1197 = vrot.slane %v1158, 5
  %v1198 = vrot.slane %v1197, 4
  %v1199 = vrot.slane %v672, 5
  %v1200 = vsel %vm1180, %v1198, %v1199
  %v1201 = vrot.slane %v1159, 5
  %v1202 = vrot.slane %v1201, 4
  %v1203 = vrot.slane %v673, 5
  %v1204 = vsel %vm1180, %v1202, %v1203
  %v1205 = vrot.slane %v1160, 5
  %v1206 = vrot.slane %v1205, 4
  %v1207 = vrot.slane %v674, 5
  %v1208 = vsel %vm1180, %v1206, %v1207
  %v1209 = vrot.slane %v1161, 5
  %v1210 = vrot.slane %v1209, 4
  %v1211 = vrot.slane %v675, 5
  %v1212 = vsel %vm1180, %v1210, %v1211
  %v1213 = vld [vmem:[%s595] sm:$0xe]
  %v1214 = vld [vmem:[%s595 + $0x8] sm:$0xe]
  %v1215 = vld [vmem:[%s595 + $0x10] sm:$0xe]
  %v1216 = vld [vmem:[%s595 + $0x18] sm:$0xe]
  %v1217 = vld [vmem:[%s595 + $0x20] sm:$0xe]
  %v1218 = vld [vmem:[%s595 + $0x28] sm:$0xe]
  %v1219 = vld [vmem:[%s595 + $0x30] sm:$0xe]
  %v1220 = vld [vmem:[%s595 + $0x38] sm:$0xe]
  %v1237 = vrot.slane %v1213, 5
  %v1238 = vrot.slane %v1237, 4
  %v1239 = vrot.slane %v791, 5
  %v1240 = vsel %vm1180, %v1238, %v1239
  %v1241 = vrot.slane %v1214, 5
  %v1242 = vrot.slane %v1241, 4
  %v1243 = vrot.slane %v792, 5
  %v1244 = vsel %vm1180, %v1242, %v1243
  %v1245 = vrot.slane %v1215, 5
  %v1246 = vrot.slane %v1245, 4
  %v1247 = vrot.slane %v793, 5
  %v1248 = vsel %vm1180, %v1246, %v1247
  %v1249 = vrot.slane %v1216, 5
  %v1250 = vrot.slane %v1249, 4
  %v1251 = vrot.slane %v794, 5
  %v1252 = vsel %vm1180, %v1250, %v1251
  %v1253 = vrot.slane %v1217, 5
  %v1254 = vrot.slane %v1253, 4
  %v1255 = vrot.slane %v795, 5
  %v1256 = vsel %vm1180, %v1254, %v1255
  %v1257 = vrot.slane %v1218, 5
  %v1258 = vrot.slane %v1257, 4
  %v1259 = vrot.slane %v796, 5
  %v1260 = vsel %vm1180, %v1258, %v1259
  %v1261 = vrot.slane %v1219, 5
  %v1262 = vrot.slane %v1261, 4
  %v1263 = vrot.slane %v797, 5
  %v1264 = vsel %vm1180, %v1262, %v1263
  %v1265 = vrot.slane %v1220, 5
  %v1266 = vrot.slane %v1265, 4
  %v1267 = vrot.slane %v798, 5
  %v1268 = vsel %vm1180, %v1266, %v1267
  %v1269 = vunpack.c.l.b16 %v1184
  %v1270 = vunpack.c.l.b16 %v1188
  %v1271 = vunpack.c.l.b16 %v1192
  %v1272 = vunpack.c.l.b16 %v1196
  %v1273 = vunpack.c.l.b16 %v1200
  %v1274 = vunpack.c.l.b16 %v1204
  %v1275 = vunpack.c.l.b16 %v1208
  %v1276 = vunpack.c.l.b16 %v1212
  %v1277 = vpack.c.b16 %v1270, %v1269
  %v1278 = vpack.c.b16 %v1272, %v1271
  %v1279 = vpack.c.b16 %v1274, %v1273
  %v1280 = vpack.c.b16 %v1276, %v1275
  %v1285 = vunpack.c.l.b16 %v1240
  %v1286 = vunpack.c.l.b16 %v1244
  %v1287 = vunpack.c.l.b16 %v1248
  %v1288 = vunpack.c.l.b16 %v1252
  %v1289 = vunpack.c.l.b16 %v1256
  %v1290 = vunpack.c.l.b16 %v1260
  %v1291 = vunpack.c.l.b16 %v1264
  %v1292 = vunpack.c.l.b16 %v1268
  %v1293 = vpack.c.b16 %v1286, %v1285
  %v1294 = vpack.c.b16 %v1288, %v1287
  %v1295 = vpack.c.b16 %v1290, %v1289
  %v1296 = vpack.c.b16 %v1292, %v1291
  %s1301 = scalar_lea.vmem %s3, 128
  %v1302 = vld [vmem:[%s1301] sm:$0xf]
  %v1303 = vld [vmem:[%s1301 + $0x4] sm:$0xf]
  %v1304 = vld [vmem:[%s1301 + $0x8] sm:$0xf]
  %v1305 = vld [vmem:[%s1301 + $0xc] sm:$0xf]
  %v1306 = vld [vmem:[%s1301 + $0x10] sm:$0xf]
  %v1307 = vld [vmem:[%s1301 + $0x14] sm:$0xf]
  %v1308 = vld [vmem:[%s1301 + $0x18] sm:$0xf]
  %v1309 = vld [vmem:[%s1301 + $0x1c] sm:$0xf]
  %v1310 = vld [vmem:[%s1301 + $0x20] sm:$0xf]
  %v1311 = vld [vmem:[%s1301 + $0x24] sm:$0xf]
  %v1312 = vld [vmem:[%s1301 + $0x28] sm:$0xf]
  %v1313 = vld [vmem:[%s1301 + $0x2c] sm:$0xf]
  %v1314 = vld [vmem:[%s1301 + $0x30] sm:$0xf]
  %v1315 = vld [vmem:[%s1301 + $0x34] sm:$0xf]
  %v1316 = vld [vmem:[%s1301 + $0x38] sm:$0xf]
  %v1317 = vld [vmem:[%s1301 + $0x3c] sm:$0xf]
  %v1334 = vunpack.c.l.b16 %v1302
  %v1335 = vunpack.c.l.b16 %v1303
  %v1336 = vunpack.c.l.b16 %v1304
  %v1337 = vunpack.c.l.b16 %v1305
  %v1338 = vunpack.c.l.b16 %v1306
  %v1339 = vunpack.c.l.b16 %v1307
  %v1340 = vunpack.c.l.b16 %v1308
  %v1341 = vunpack.c.l.b16 %v1309
  %v1342 = vunpack.c.l.b16 %v1310
  %v1343 = vunpack.c.l.b16 %v1311
  %v1344 = vunpack.c.l.b16 %v1312
  %v1345 = vunpack.c.l.b16 %v1313
  %v1346 = vunpack.c.l.b16 %v1314
  %v1347 = vunpack.c.l.b16 %v1315
  %v1348 = vunpack.c.l.b16 %v1316
  %v1349 = vunpack.c.l.b16 %v1317
  %v1350 = vpack.c.b16 %v1335, %v1334
  %v1351 = vpack.c.b16 %v1337, %v1336
  %v1352 = vpack.c.b16 %v1339, %v1338
  %v1353 = vpack.c.b16 %v1341, %v1340
  %v1354 = vpack.c.b16 %v1343, %v1342
  %v1355 = vpack.c.b16 %v1345, %v1344
  %v1356 = vpack.c.b16 %v1347, %v1346
  %v1357 = vpack.c.b16 %v1349, %v1348
  %1366 = vmatpush.bf16.msra.mxu0 %v1357
  %1367 = vmatpush.bf16.msra.mxu0 %v1356
  %1368 = vmatpush.bf16.msra.mxu0 %v1355
  %1369 = vmatpush.bf16.msra.mxu0 %v1354
  %1370 = vmatpush.bf16.msra.mxu0 %v1353
  %1371 = vmatpush.bf16.msra.mxu0 %v1352
  %1372 = vmatpush.bf16.msra.mxu0 %v1351
  %1373 = vmatpush.bf16.msra.mxu0 %v1350
  %1374 = vmatmul.bf16.gmra.mxu0 %v1277
  %v1375 = vpop.f32.mrf.mxu0
  %v1376 = vadd.f32 0.0, %v1375
  %v1377 = vpop.f32.mrf.mxu0
  %v1378 = vadd.f32 0.0, %v1377
  %1379 = vmatmul.bf16.gmra.mxu0 %v1278
  %v1380 = vpop.f32.mrf.mxu0
  %v1381 = vadd.f32 0.0, %v1380
  %v1382 = vpop.f32.mrf.mxu0
  %v1383 = vadd.f32 0.0, %v1382
  %1384 = vmatmul.bf16.gmra.mxu0 %v1279
  %v1385 = vpop.f32.mrf.mxu0
  %v1386 = vadd.f32 0.0, %v1385
  %v1387 = vpop.f32.mrf.mxu0
  %v1388 = vadd.f32 0.0, %v1387
  %1389 = vmatmul.bf16.gmra.mxu0 %v1280
  %v1390 = vpop.f32.mrf.mxu0
  %v1391 = vadd.f32 0.0, %v1390
  %v1392 = vpop.f32.mrf.mxu0
  %v1393 = vadd.f32 0.0, %v1392
  %1394 = vmatmul.bf16.gmra.mxu0 %v1293
  %v1395 = vpop.f32.mrf.mxu0
  %v1396 = vadd.f32 0.0, %v1395
  %v1397 = vpop.f32.mrf.mxu0
  %v1398 = vadd.f32 0.0, %v1397
  %1399 = vmatmul.bf16.gmra.mxu0 %v1294
  %v1400 = vpop.f32.mrf.mxu0
  %v1401 = vadd.f32 0.0, %v1400
  %v1402 = vpop.f32.mrf.mxu0
  %v1403 = vadd.f32 0.0, %v1402
  %1404 = vmatmul.bf16.gmra.mxu0 %v1295
  %v1405 = vpop.f32.mrf.mxu0
  %v1406 = vadd.f32 0.0, %v1405
  %v1407 = vpop.f32.mrf.mxu0
  %v1408 = vadd.f32 0.0, %v1407
  %1409 = vmatmul.bf16.gmra.mxu0 %v1296
  %v1410 = vpop.f32.mrf.mxu0
  %v1411 = vadd.f32 0.0, %v1410
  %v1412 = vpop.f32.mrf.mxu0
  %v1413 = vadd.f32 0.0, %v1412
  %1414 = vdwg.mxu0
  %v1415 = vadd.f32 %v1115, %v1376
  %v1416 = vadd.f32 %v1117, %v1378
  %v1417 = vadd.f32 %v1120, %v1381
  %v1418 = vadd.f32 %v1122, %v1383
  %v1419 = vadd.f32 %v1125, %v1386
  %v1420 = vadd.f32 %v1127, %v1388
  %v1421 = vadd.f32 %v1130, %v1391
  %v1422 = vadd.f32 %v1132, %v1393
  %v1423 = vadd.f32 %v1135, %v1396
  %v1424 = vadd.f32 %v1137, %v1398
  %v1425 = vadd.f32 %v1140, %v1401
  %v1426 = vadd.f32 %v1142, %v1403
  %v1427 = vadd.f32 %v1145, %v1406
  %v1428 = vadd.f32 %v1147, %v1408
  %v1429 = vadd.f32 %v1150, %v1411
  %v1430 = vadd.f32 %v1152, %v1413
  %v1431 = vld [vmem:[%s210] sm:$0xf]
  %v1432 = vld [vmem:[%s210 + $0x8] sm:$0xf]
  %v1433 = vld [vmem:[%s210 + $0x10] sm:$0xf]
  %v1434 = vld [vmem:[%s210 + $0x18] sm:$0xf]
  %v1435 = vld [vmem:[%s210 + $0x20] sm:$0xf]
  %v1436 = vld [vmem:[%s210 + $0x28] sm:$0xf]
  %v1437 = vld [vmem:[%s210 + $0x30] sm:$0xf]
  %v1438 = vld [vmem:[%s210 + $0x38] sm:$0xf]
  %v1439 = vld [vmem:[%s538] sm:$0xf]
  %v1440 = vld [vmem:[%s538 + $0x8] sm:$0xf]
  %v1441 = vld [vmem:[%s538 + $0x10] sm:$0xf]
  %v1442 = vld [vmem:[%s538 + $0x18] sm:$0xf]
  %v1443 = vld [vmem:[%s538 + $0x20] sm:$0xf]
  %v1444 = vld [vmem:[%s538 + $0x28] sm:$0xf]
  %v1445 = vld [vmem:[%s538 + $0x30] sm:$0xf]
  %v1446 = vld [vmem:[%s538 + $0x38] sm:$0xf]
  %v1455 = vunpack.c.l.b16 %v1431
  %v1456 = vunpack.c.l.b16 %v1432
  %v1457 = vunpack.c.l.b16 %v1433
  %v1458 = vunpack.c.l.b16 %v1434
  %v1459 = vunpack.c.l.b16 %v1435
  %v1460 = vunpack.c.l.b16 %v1436
  %v1461 = vunpack.c.l.b16 %v1437
  %v1462 = vunpack.c.l.b16 %v1438
  %v1463 = vpack.c.b16 %v1456, %v1455
  %v1464 = vpack.c.b16 %v1458, %v1457
  %v1465 = vpack.c.b16 %v1460, %v1459
  %v1466 = vpack.c.b16 %v1462, %v1461
  %v1479 = vunpack.c.l.b16 %v1439
  %v1480 = vunpack.c.l.b16 %v1440
  %v1481 = vunpack.c.l.b16 %v1441
  %v1482 = vunpack.c.l.b16 %v1442
  %v1483 = vunpack.c.l.b16 %v1443
  %v1484 = vunpack.c.l.b16 %v1444
  %v1485 = vunpack.c.l.b16 %v1445
  %v1486 = vunpack.c.l.b16 %v1446
  %v1487 = vpack.c.b16 %v1480, %v1479
  %v1488 = vpack.c.b16 %v1482, %v1481
  %v1489 = vpack.c.b16 %v1484, %v1483
  %v1490 = vpack.c.b16 %v1486, %v1485
  %s1495 = scalar_lea.vmem %s3, 192
  %v1496 = vld [vmem:[%s1495] sm:$0xf]
  %v1497 = vld [vmem:[%s1495 + $0x4] sm:$0xf]
  %v1498 = vld [vmem:[%s1495 + $0x8] sm:$0xf]
  %v1499 = vld [vmem:[%s1495 + $0xc] sm:$0xf]
  %v1500 = vld [vmem:[%s1495 + $0x10] sm:$0xf]
  %v1501 = vld [vmem:[%s1495 + $0x14] sm:$0xf]
  %v1502 = vld [vmem:[%s1495 + $0x18] sm:$0xf]
  %v1503 = vld [vmem:[%s1495 + $0x1c] sm:$0xf]
  %v1504 = vld [vmem:[%s1495 + $0x20] sm:$0xf]
  %v1505 = vld [vmem:[%s1495 + $0x24] sm:$0xf]
  %v1506 = vld [vmem:[%s1495 + $0x28] sm:$0xf]
  %v1507 = vld [vmem:[%s1495 + $0x2c] sm:$0xf]
  %v1508 = vld [vmem:[%s1495 + $0x30] sm:$0xf]
  %v1509 = vld [vmem:[%s1495 + $0x34] sm:$0xf]
  %v1510 = vld [vmem:[%s1495 + $0x38] sm:$0xf]
  %v1511 = vld [vmem:[%s1495 + $0x3c] sm:$0xf]
  %v1528 = vunpack.c.l.b16 %v1496
  %v1529 = vunpack.c.l.b16 %v1497
  %v1530 = vunpack.c.l.b16 %v1498
  %v1531 = vunpack.c.l.b16 %v1499
  %v1532 = vunpack.c.l.b16 %v1500
  %v1533 = vunpack.c.l.b16 %v1501
  %v1534 = vunpack.c.l.b16 %v1502
  %v1535 = vunpack.c.l.b16 %v1503
  %v1536 = vunpack.c.l.b16 %v1504
  %v1537 = vunpack.c.l.b16 %v1505
  %v1538 = vunpack.c.l.b16 %v1506
  %v1539 = vunpack.c.l.b16 %v1507
  %v1540 = vunpack.c.l.b16 %v1508
  %v1541 = vunpack.c.l.b16 %v1509
  %v1542 = vunpack.c.l.b16 %v1510
  %v1543 = vunpack.c.l.b16 %v1511
  %v1544 = vpack.c.b16 %v1529, %v1528
  %v1545 = vpack.c.b16 %v1531, %v1530
  %v1546 = vpack.c.b16 %v1533, %v1532
  %v1547 = vpack.c.b16 %v1535, %v1534
  %v1548 = vpack.c.b16 %v1537, %v1536
  %v1549 = vpack.c.b16 %v1539, %v1538
  %v1550 = vpack.c.b16 %v1541, %v1540
  %v1551 = vpack.c.b16 %v1543, %v1542
  %1560 = vmatpush.bf16.msra.mxu0 %v1551
  %1561 = vmatpush.bf16.msra.mxu0 %v1550
  %1562 = vmatpush.bf16.msra.mxu0 %v1549
  %1563 = vmatpush.bf16.msra.mxu0 %v1548
  %1564 = vmatpush.bf16.msra.mxu0 %v1547
  %1565 = vmatpush.bf16.msra.mxu0 %v1546
  %1566 = vmatpush.bf16.msra.mxu0 %v1545
  %1567 = vmatpush.bf16.msra.mxu0 %v1544
  %1568 = vmatmul.bf16.gmra.mxu0 %v1463
  %v1569 = vpop.f32.mrf.mxu0
  %v1570 = vadd.f32 0.0, %v1569
  %v1571 = vpop.f32.mrf.mxu0
  %v1572 = vadd.f32 0.0, %v1571
  %1573 = vmatmul.bf16.gmra.mxu0 %v1464
  %v1574 = vpop.f32.mrf.mxu0
  %v1575 = vadd.f32 0.0, %v1574
  %v1576 = vpop.f32.mrf.mxu0
  %v1577 = vadd.f32 0.0, %v1576
  %1578 = vmatmul.bf16.gmra.mxu0 %v1465
  %v1579 = vpop.f32.mrf.mxu0
  %v1580 = vadd.f32 0.0, %v1579
  %v1581 = vpop.f32.mrf.mxu0
  %v1582 = vadd.f32 0.0, %v1581
  %1583 = vmatmul.bf16.gmra.mxu0 %v1466
  %v1584 = vpop.f32.mrf.mxu0
  %v1585 = vadd.f32 0.0, %v1584
  %v1586 = vpop.f32.mrf.mxu0
  %v1587 = vadd.f32 0.0, %v1586
  %1588 = vmatmul.bf16.gmra.mxu0 %v1487
  %v1589 = vpop.f32.mrf.mxu0
  %v1590 = vadd.f32 0.0, %v1589
  %v1591 = vpop.f32.mrf.mxu0
  %v1592 = vadd.f32 0.0, %v1591
  %1593 = vmatmul.bf16.gmra.mxu0 %v1488
  %v1594 = vpop.f32.mrf.mxu0
  %v1595 = vadd.f32 0.0, %v1594
  %v1596 = vpop.f32.mrf.mxu0
  %v1597 = vadd.f32 0.0, %v1596
  %1598 = vmatmul.bf16.gmra.mxu0 %v1489
  %v1599 = vpop.f32.mrf.mxu0
  %v1600 = vadd.f32 0.0, %v1599
  %v1601 = vpop.f32.mrf.mxu0
  %v1602 = vadd.f32 0.0, %v1601
  %1603 = vmatmul.bf16.gmra.mxu0 %v1490
  %v1604 = vpop.f32.mrf.mxu0
  %v1605 = vadd.f32 0.0, %v1604
  %v1606 = vpop.f32.mrf.mxu0
  %v1607 = vadd.f32 0.0, %v1606
  %1608 = vdwg.mxu0
  %v1609 = vadd.f32 %v1415, %v1570
  %v1610 = vadd.f32 %v1416, %v1572
  %v1611 = vadd.f32 %v1417, %v1575
  %v1612 = vadd.f32 %v1418, %v1577
  %v1613 = vadd.f32 %v1419, %v1580
  %v1614 = vadd.f32 %v1420, %v1582
  %v1615 = vadd.f32 %v1421, %v1585
  %v1616 = vadd.f32 %v1422, %v1587
  %v1617 = vadd.f32 %v1423, %v1590
  %v1618 = vadd.f32 %v1424, %v1592
  %v1619 = vadd.f32 %v1425, %v1595
  %v1620 = vadd.f32 %v1426, %v1597
  %v1621 = vadd.f32 %v1427, %v1600
  %v1622 = vadd.f32 %v1428, %v1602
  %v1623 = vadd.f32 %v1429, %v1605
  %v1624 = vadd.f32 %v1430, %v1607
  %v1625 = vld [vmem:[%s210] sm:$0xf]
  %v1626 = vld [vmem:[%s210 + $0x4] sm:$0x1]
  %v1627 = vld [vmem:[%s210 + $0x8] sm:$0xf]
  %v1628 = vld [vmem:[%s210 + $0xc] sm:$0x1]
  %v1629 = vld [vmem:[%s210 + $0x10] sm:$0xf]
  %v1630 = vld [vmem:[%s210 + $0x14] sm:$0x1]
  %v1631 = vld [vmem:[%s210 + $0x18] sm:$0xf]
  %v1632 = vld [vmem:[%s210 + $0x1c] sm:$0x1]
  %v1633 = vld [vmem:[%s210 + $0x20] sm:$0xf]
  %v1634 = vld [vmem:[%s210 + $0x24] sm:$0x1]
  %v1635 = vld [vmem:[%s210 + $0x28] sm:$0xf]
  %v1636 = vld [vmem:[%s210 + $0x2c] sm:$0x1]
  %v1637 = vld [vmem:[%s210 + $0x30] sm:$0xf]
  %v1638 = vld [vmem:[%s210 + $0x34] sm:$0x1]
  %v1639 = vld [vmem:[%s210 + $0x38] sm:$0xf]
  %v1640 = vld [vmem:[%s210 + $0x3c] sm:$0x1]
  %v1642 = vshrl.u32 %v1625, 16
  %v1644 = vrot.slane %v1642, 4
  %v1645 = vshll.u32 %v1625, 16
  %v1647 = vrot.slane %v1645, 5
  %v1648 = vor.u32 %v1644, %v1647
  %v1649 = vrot.slane %v1648, 4
  %v1651 = vshll.u32 %v1626, 16
  %v1653 = vrot.slane %v1651, 5
  %v1654 = vsel %vm678, %v1649, %v1653
  %v1656 = vshrl.u32 %v1627, 16
  %v1658 = vrot.slane %v1656, 4
  %v1659 = vshll.u32 %v1627, 16
  %v1661 = vrot.slane %v1659, 5
  %v1662 = vor.u32 %v1658, %v1661
  %v1663 = vrot.slane %v1662, 4
  %v1665 = vshll.u32 %v1628, 16
  %v1667 = vrot.slane %v1665, 5
  %v1668 = vsel %vm678, %v1663, %v1667
  %v1670 = vshrl.u32 %v1629, 16
  %v1672 = vrot.slane %v1670, 4
  %v1673 = vshll.u32 %v1629, 16
  %v1675 = vrot.slane %v1673, 5
  %v1676 = vor.u32 %v1672, %v1675
  %v1677 = vrot.slane %v1676, 4
  %v1679 = vshll.u32 %v1630, 16
  %v1681 = vrot.slane %v1679, 5
  %v1682 = vsel %vm678, %v1677, %v1681
  %v1684 = vshrl.u32 %v1631, 16
  %v1686 = vrot.slane %v1684, 4
  %v1687 = vshll.u32 %v1631, 16
  %v1689 = vrot.slane %v1687, 5
  %v1690 = vor.u32 %v1686, %v1689
  %v1691 = vrot.slane %v1690, 4
  %v1693 = vshll.u32 %v1632, 16
  %v1695 = vrot.slane %v1693, 5
  %v1696 = vsel %vm678, %v1691, %v1695
  %v1698 = vshrl.u32 %v1633, 16
  %v1700 = vrot.slane %v1698, 4
  %v1701 = vshll.u32 %v1633, 16
  %v1703 = vrot.slane %v1701, 5
  %v1704 = vor.u32 %v1700, %v1703
  %v1705 = vrot.slane %v1704, 4
  %v1707 = vshll.u32 %v1634, 16
  %v1709 = vrot.slane %v1707, 5
  %v1710 = vsel %vm678, %v1705, %v1709
  %v1712 = vshrl.u32 %v1635, 16
  %v1714 = vrot.slane %v1712, 4
  %v1715 = vshll.u32 %v1635, 16
  %v1717 = vrot.slane %v1715, 5
  %v1718 = vor.u32 %v1714, %v1717
  %v1719 = vrot.slane %v1718, 4
  %v1721 = vshll.u32 %v1636, 16
  %v1723 = vrot.slane %v1721, 5
  %v1724 = vsel %vm678, %v1719, %v1723
  %v1726 = vshrl.u32 %v1637, 16
  %v1728 = vrot.slane %v1726, 4
  %v1729 = vshll.u32 %v1637, 16
  %v1731 = vrot.slane %v1729, 5
  %v1732 = vor.u32 %v1728, %v1731
  %v1733 = vrot.slane %v1732, 4
  %v1735 = vshll.u32 %v1638, 16
  %v1737 = vrot.slane %v1735, 5
  %v1738 = vsel %vm678, %v1733, %v1737
  %v1740 = vshrl.u32 %v1639, 16
  %v1742 = vrot.slane %v1740, 4
  %v1743 = vshll.u32 %v1639, 16
  %v1745 = vrot.slane %v1743, 5
  %v1746 = vor.u32 %v1742, %v1745
  %v1747 = vrot.slane %v1746, 4
  %v1749 = vshll.u32 %v1640, 16
  %v1751 = vrot.slane %v1749, 5
  %v1752 = vsel %vm678, %v1747, %v1751
  %v1753 = vld [vmem:[%s538] sm:$0xf]
  %v1754 = vld [vmem:[%s538 + $0x4] sm:$0x1]
  %v1755 = vld [vmem:[%s538 + $0x8] sm:$0xf]
  %v1756 = vld [vmem:[%s538 + $0xc] sm:$0x1]
  %v1757 = vld [vmem:[%s538 + $0x10] sm:$0xf]
  %v1758 = vld [vmem:[%s538 + $0x14] sm:$0x1]
  %v1759 = vld [vmem:[%s538 + $0x18] sm:$0xf]
  %v1760 = vld [vmem:[%s538 + $0x1c] sm:$0x1]
  %v1761 = vld [vmem:[%s538 + $0x20] sm:$0xf]
  %v1762 = vld [vmem:[%s538 + $0x24] sm:$0x1]
  %v1763 = vld [vmem:[%s538 + $0x28] sm:$0xf]
  %v1764 = vld [vmem:[%s538 + $0x2c] sm:$0x1]
  %v1765 = vld [vmem:[%s538 + $0x30] sm:$0xf]
  %v1766 = vld [vmem:[%s538 + $0x34] sm:$0x1]
  %v1767 = vld [vmem:[%s538 + $0x38] sm:$0xf]
  %v1768 = vld [vmem:[%s538 + $0x3c] sm:$0x1]
  %v1770 = vshrl.u32 %v1753, 16
  %v1772 = vrot.slane %v1770, 4
  %v1773 = vshll.u32 %v1753, 16
  %v1775 = vrot.slane %v1773, 5
  %v1776 = vor.u32 %v1772, %v1775
  %v1777 = vrot.slane %v1776, 4
  %v1779 = vshll.u32 %v1754, 16
  %v1781 = vrot.slane %v1779, 5
  %v1782 = vsel %vm678, %v1777, %v1781
  %v1784 = vshrl.u32 %v1755, 16
  %v1786 = vrot.slane %v1784, 4
  %v1787 = vshll.u32 %v1755, 16
  %v1789 = vrot.slane %v1787, 5
  %v1790 = vor.u32 %v1786, %v1789
  %v1791 = vrot.slane %v1790, 4
  %v1793 = vshll.u32 %v1756, 16
  %v1795 = vrot.slane %v1793, 5
  %v1796 = vsel %vm678, %v1791, %v1795
  %v1798 = vshrl.u32 %v1757, 16
  %v1800 = vrot.slane %v1798, 4
  %v1801 = vshll.u32 %v1757, 16
  %v1803 = vrot.slane %v1801, 5
  %v1804 = vor.u32 %v1800, %v1803
  %v1805 = vrot.slane %v1804, 4
  %v1807 = vshll.u32 %v1758, 16
  %v1809 = vrot.slane %v1807, 5
  %v1810 = vsel %vm678, %v1805, %v1809
  %v1812 = vshrl.u32 %v1759, 16
  %v1814 = vrot.slane %v1812, 4
  %v1815 = vshll.u32 %v1759, 16
  %v1817 = vrot.slane %v1815, 5
  %v1818 = vor.u32 %v1814, %v1817
  %v1819 = vrot.slane %v1818, 4
  %v1821 = vshll.u32 %v1760, 16
  %v1823 = vrot.slane %v1821, 5
  %v1824 = vsel %vm678, %v1819, %v1823
  %v1826 = vshrl.u32 %v1761, 16
  %v1828 = vrot.slane %v1826, 4
  %v1829 = vshll.u32 %v1761, 16
  %v1831 = vrot.slane %v1829, 5
  %v1832 = vor.u32 %v1828, %v1831
  %v1833 = vrot.slane %v1832, 4
  %v1835 = vshll.u32 %v1762, 16
  %v1837 = vrot.slane %v1835, 5
  %v1838 = vsel %vm678, %v1833, %v1837
  %v1840 = vshrl.u32 %v1763, 16
  %v1842 = vrot.slane %v1840, 4
  %v1843 = vshll.u32 %v1763, 16
  %v1845 = vrot.slane %v1843, 5
  %v1846 = vor.u32 %v1842, %v1845
  %v1847 = vrot.slane %v1846, 4
  %v1849 = vshll.u32 %v1764, 16
  %v1851 = vrot.slane %v1849, 5
  %v1852 = vsel %vm678, %v1847, %v1851
  %v1854 = vshrl.u32 %v1765, 16
  %v1856 = vrot.slane %v1854, 4
  %v1857 = vshll.u32 %v1765, 16
  %v1859 = vrot.slane %v1857, 5
  %v1860 = vor.u32 %v1856, %v1859
  %v1861 = vrot.slane %v1860, 4
  %v1863 = vshll.u32 %v1766, 16
  %v1865 = vrot.slane %v1863, 5
  %v1866 = vsel %vm678, %v1861, %v1865
  %v1868 = vshrl.u32 %v1767, 16
  %v1870 = vrot.slane %v1868, 4
  %v1871 = vshll.u32 %v1767, 16
  %v1873 = vrot.slane %v1871, 5
  %v1874 = vor.u32 %v1870, %v1873
  %v1875 = vrot.slane %v1874, 4
  %v1877 = vshll.u32 %v1768, 16
  %v1879 = vrot.slane %v1877, 5
  %v1880 = vsel %vm678, %v1875, %v1879
  %v1881 = vunpack.c.l.b16 %v1654
  %v1882 = vunpack.c.l.b16 %v1668
  %v1883 = vunpack.c.l.b16 %v1682
  %v1884 = vunpack.c.l.b16 %v1696
  %v1885 = vunpack.c.l.b16 %v1710
  %v1886 = vunpack.c.l.b16 %v1724
  %v1887 = vunpack.c.l.b16 %v1738
  %v1888 = vunpack.c.l.b16 %v1752
  %v1889 = vpack.c.b16 %v1882, %v1881
  %v1890 = vpack.c.b16 %v1884, %v1883
  %v1891 = vpack.c.b16 %v1886, %v1885
  %v1892 = vpack.c.b16 %v1888, %v1887
  %v1897 = vunpack.c.l.b16 %v1782
  %v1898 = vunpack.c.l.b16 %v1796
  %v1899 = vunpack.c.l.b16 %v1810
  %v1900 = vunpack.c.l.b16 %v1824
  %v1901 = vunpack.c.l.b16 %v1838
  %v1902 = vunpack.c.l.b16 %v1852
  %v1903 = vunpack.c.l.b16 %v1866
  %v1904 = vunpack.c.l.b16 %v1880
  %v1905 = vpack.c.b16 %v1898, %v1897
  %v1906 = vpack.c.b16 %v1900, %v1899
  %v1907 = vpack.c.b16 %v1902, %v1901
  %v1908 = vpack.c.b16 %v1904, %v1903
  %s1913 = scalar_lea.vmem %s3, 256
  %v1914 = vld [vmem:[%s1913] sm:$0xf]
  %v1915 = vld [vmem:[%s1913 + $0x4] sm:$0xf]
  %v1916 = vld [vmem:[%s1913 + $0x8] sm:$0xf]
  %v1917 = vld [vmem:[%s1913 + $0xc] sm:$0xf]
  %v1918 = vld [vmem:[%s1913 + $0x10] sm:$0xf]
  %v1919 = vld [vmem:[%s1913 + $0x14] sm:$0xf]
  %v1920 = vld [vmem:[%s1913 + $0x18] sm:$0xf]
  %v1921 = vld [vmem:[%s1913 + $0x1c] sm:$0xf]
  %v1922 = vld [vmem:[%s1913 + $0x20] sm:$0xf]
  %v1923 = vld [vmem:[%s1913 + $0x24] sm:$0xf]
  %v1924 = vld [vmem:[%s1913 + $0x28] sm:$0xf]
  %v1925 = vld [vmem:[%s1913 + $0x2c] sm:$0xf]
  %v1926 = vld [vmem:[%s1913 + $0x30] sm:$0xf]
  %v1927 = vld [vmem:[%s1913 + $0x34] sm:$0xf]
  %v1928 = vld [vmem:[%s1913 + $0x38] sm:$0xf]
  %v1929 = vld [vmem:[%s1913 + $0x3c] sm:$0xf]
  %v1946 = vunpack.c.l.b16 %v1914
  %v1947 = vunpack.c.l.b16 %v1915
  %v1948 = vunpack.c.l.b16 %v1916
  %v1949 = vunpack.c.l.b16 %v1917
  %v1950 = vunpack.c.l.b16 %v1918
  %v1951 = vunpack.c.l.b16 %v1919
  %v1952 = vunpack.c.l.b16 %v1920
  %v1953 = vunpack.c.l.b16 %v1921
  %v1954 = vunpack.c.l.b16 %v1922
  %v1955 = vunpack.c.l.b16 %v1923
  %v1956 = vunpack.c.l.b16 %v1924
  %v1957 = vunpack.c.l.b16 %v1925
  %v1958 = vunpack.c.l.b16 %v1926
  %v1959 = vunpack.c.l.b16 %v1927
  %v1960 = vunpack.c.l.b16 %v1928
  %v1961 = vunpack.c.l.b16 %v1929
  %v1962 = vpack.c.b16 %v1947, %v1946
  %v1963 = vpack.c.b16 %v1949, %v1948
  %v1964 = vpack.c.b16 %v1951, %v1950
  %v1965 = vpack.c.b16 %v1953, %v1952
  %v1966 = vpack.c.b16 %v1955, %v1954
  %v1967 = vpack.c.b16 %v1957, %v1956
  %v1968 = vpack.c.b16 %v1959, %v1958
  %v1969 = vpack.c.b16 %v1961, %v1960
  %1978 = vmatpush.bf16.msra.mxu0 %v1969
  %1979 = vmatpush.bf16.msra.mxu0 %v1968
  %1980 = vmatpush.bf16.msra.mxu0 %v1967
  %1981 = vmatpush.bf16.msra.mxu0 %v1966
  %1982 = vmatpush.bf16.msra.mxu0 %v1965
  %1983 = vmatpush.bf16.msra.mxu0 %v1964
  %1984 = vmatpush.bf16.msra.mxu0 %v1963
  %1985 = vmatpush.bf16.msra.mxu0 %v1962
  %1986 = vmatmul.bf16.gmra.mxu0 %v1889
  %v1987 = vpop.f32.mrf.mxu0
  %v1988 = vadd.f32 0.0, %v1987
  %v1989 = vpop.f32.mrf.mxu0
  %v1990 = vadd.f32 0.0, %v1989
  %1991 = vmatmul.bf16.gmra.mxu0 %v1890
  %v1992 = vpop.f32.mrf.mxu0
  %v1993 = vadd.f32 0.0, %v1992
  %v1994 = vpop.f32.mrf.mxu0
  %v1995 = vadd.f32 0.0, %v1994
  %1996 = vmatmul.bf16.gmra.mxu0 %v1891
  %v1997 = vpop.f32.mrf.mxu0
  %v1998 = vadd.f32 0.0, %v1997
  %v1999 = vpop.f32.mrf.mxu0
  %v2000 = vadd.f32 0.0, %v1999
  %2001 = vmatmul.bf16.gmra.mxu0 %v1892
  %v2002 = vpop.f32.mrf.mxu0
  %v2003 = vadd.f32 0.0, %v2002
  %v2004 = vpop.f32.mrf.mxu0
  %v2005 = vadd.f32 0.0, %v2004
  %2006 = vmatmul.bf16.gmra.mxu0 %v1905
  %v2007 = vpop.f32.mrf.mxu0
  %v2008 = vadd.f32 0.0, %v2007
  %v2009 = vpop.f32.mrf.mxu0
  %v2010 = vadd.f32 0.0, %v2009
  %2011 = vmatmul.bf16.gmra.mxu0 %v1906
  %v2012 = vpop.f32.mrf.mxu0
  %v2013 = vadd.f32 0.0, %v2012
  %v2014 = vpop.f32.mrf.mxu0
  %v2015 = vadd.f32 0.0, %v2014
  %2016 = vmatmul.bf16.gmra.mxu0 %v1907
  %v2017 = vpop.f32.mrf.mxu0
  %v2018 = vadd.f32 0.0, %v2017
  %v2019 = vpop.f32.mrf.mxu0
  %v2020 = vadd.f32 0.0, %v2019
  %2021 = vmatmul.bf16.gmra.mxu0 %v1908
  %v2022 = vpop.f32.mrf.mxu0
  %v2023 = vadd.f32 0.0, %v2022
  %v2024 = vpop.f32.mrf.mxu0
  %v2025 = vadd.f32 0.0, %v2024
  %2026 = vdwg.mxu0
  %v2027 = vadd.f32 %v1609, %v1988
  %v2028 = vadd.f32 %v1610, %v1990
  %v2029 = vadd.f32 %v1611, %v1993
  %v2030 = vadd.f32 %v1612, %v1995
  %v2031 = vadd.f32 %v1613, %v1998
  %v2032 = vadd.f32 %v1614, %v2000
  %v2033 = vadd.f32 %v1615, %v2003
  %v2034 = vadd.f32 %v1616, %v2005
  %v2035 = vadd.f32 %v1617, %v2008
  %v2036 = vadd.f32 %v1618, %v2010
  %v2037 = vadd.f32 %v1619, %v2013
  %v2038 = vadd.f32 %v1620, %v2015
  %v2039 = vadd.f32 %v1621, %v2018
  %v2040 = vadd.f32 %v1622, %v2020
  %v2041 = vadd.f32 %v1623, %v2023
  %v2042 = vadd.f32 %v1624, %v2025
  %v2043 = vld [vmem:[%s210] sm:$0xe]
  %v2044 = vld [vmem:[%s210 + $0x8] sm:$0xe]
  %v2045 = vld [vmem:[%s210 + $0x10] sm:$0xe]
  %v2046 = vld [vmem:[%s210 + $0x18] sm:$0xe]
  %v2047 = vld [vmem:[%s210 + $0x20] sm:$0xe]
  %v2048 = vld [vmem:[%s210 + $0x28] sm:$0xe]
  %v2049 = vld [vmem:[%s210 + $0x30] sm:$0xe]
  %v2050 = vld [vmem:[%s210 + $0x38] sm:$0xe]
  %v2067 = vrot.slane %v2043, 5
  %v2068 = vrot.slane %v2067, 4
  %v2069 = vrot.slane %v1626, 5
  %v2070 = vsel %vm1180, %v2068, %v2069
  %v2071 = vrot.slane %v2044, 5
  %v2072 = vrot.slane %v2071, 4
  %v2073 = vrot.slane %v1628, 5
  %v2074 = vsel %vm1180, %v2072, %v2073
  %v2075 = vrot.slane %v2045, 5
  %v2076 = vrot.slane %v2075, 4
  %v2077 = vrot.slane %v1630, 5
  %v2078 = vsel %vm1180, %v2076, %v2077
  %v2079 = vrot.slane %v2046, 5
  %v2080 = vrot.slane %v2079, 4
  %v2081 = vrot.slane %v1632, 5
  %v2082 = vsel %vm1180, %v2080, %v2081
  %v2083 = vrot.slane %v2047, 5
  %v2084 = vrot.slane %v2083, 4
  %v2085 = vrot.slane %v1634, 5
  %v2086 = vsel %vm1180, %v2084, %v2085
  %v2087 = vrot.slane %v2048, 5
  %v2088 = vrot.slane %v2087, 4
  %v2089 = vrot.slane %v1636, 5
  %v2090 = vsel %vm1180, %v2088, %v2089
  %v2091 = vrot.slane %v2049, 5
  %v2092 = vrot.slane %v2091, 4
  %v2093 = vrot.slane %v1638, 5
  %v2094 = vsel %vm1180, %v2092, %v2093
  %v2095 = vrot.slane %v2050, 5
  %v2096 = vrot.slane %v2095, 4
  %v2097 = vrot.slane %v1640, 5
  %v2098 = vsel %vm1180, %v2096, %v2097
  %v2099 = vld [vmem:[%s538] sm:$0xe]
  %v2100 = vld [vmem:[%s538 + $0x8] sm:$0xe]
  %v2101 = vld [vmem:[%s538 + $0x10] sm:$0xe]
  %v2102 = vld [vmem:[%s538 + $0x18] sm:$0xe]
  %v2103 = vld [vmem:[%s538 + $0x20] sm:$0xe]
  %v2104 = vld [vmem:[%s538 + $0x28] sm:$0xe]
  %v2105 = vld [vmem:[%s538 + $0x30] sm:$0xe]
  %v2106 = vld [vmem:[%s538 + $0x38] sm:$0xe]
  %v2123 = vrot.slane %v2099, 5
  %v2124 = vrot.slane %v2123, 4
  %v2125 = vrot.slane %v1754, 5
  %v2126 = vsel %vm1180, %v2124, %v2125
  %v2127 = vrot.slane %v2100, 5
  %v2128 = vrot.slane %v2127, 4
  %v2129 = vrot.slane %v1756, 5
  %v2130 = vsel %vm1180, %v2128, %v2129
  %v2131 = vrot.slane %v2101, 5
  %v2132 = vrot.slane %v2131, 4
  %v2133 = vrot.slane %v1758, 5
  %v2134 = vsel %vm1180, %v2132, %v2133
  %v2135 = vrot.slane %v2102, 5
  %v2136 = vrot.slane %v2135, 4
  %v2137 = vrot.slane %v1760, 5
  %v2138 = vsel %vm1180, %v2136, %v2137
  %v2139 = vrot.slane %v2103, 5
  %v2140 = vrot.slane %v2139, 4
  %v2141 = vrot.slane %v1762, 5
  %v2142 = vsel %vm1180, %v2140, %v2141
  %v2143 = vrot.slane %v2104, 5
  %v2144 = vrot.slane %v2143, 4
  %v2145 = vrot.slane %v1764, 5
  %v2146 = vsel %vm1180, %v2144, %v2145
  %v2147 = vrot.slane %v2105, 5
  %v2148 = vrot.slane %v2147, 4
  %v2149 = vrot.slane %v1766, 5
  %v2150 = vsel %vm1180, %v2148, %v2149
  %v2151 = vrot.slane %v2106, 5
  %v2152 = vrot.slane %v2151, 4
  %v2153 = vrot.slane %v1768, 5
  %v2154 = vsel %vm1180, %v2152, %v2153
  %v2155 = vunpack.c.l.b16 %v2070
  %v2156 = vunpack.c.l.b16 %v2074
  %v2157 = vunpack.c.l.b16 %v2078
  %v2158 = vunpack.c.l.b16 %v2082
  %v2159 = vunpack.c.l.b16 %v2086
  %v2160 = vunpack.c.l.b16 %v2090
  %v2161 = vunpack.c.l.b16 %v2094
  %v2162 = vunpack.c.l.b16 %v2098
  %v2163 = vpack.c.b16 %v2156, %v2155
  %v2164 = vpack.c.b16 %v2158, %v2157
  %v2165 = vpack.c.b16 %v2160, %v2159
  %v2166 = vpack.c.b16 %v2162, %v2161
  %v2171 = vunpack.c.l.b16 %v2126
  %v2172 = vunpack.c.l.b16 %v2130
  %v2173 = vunpack.c.l.b16 %v2134
  %v2174 = vunpack.c.l.b16 %v2138
  %v2175 = vunpack.c.l.b16 %v2142
  %v2176 = vunpack.c.l.b16 %v2146
  %v2177 = vunpack.c.l.b16 %v2150
  %v2178 = vunpack.c.l.b16 %v2154
  %v2179 = vpack.c.b16 %v2172, %v2171
  %v2180 = vpack.c.b16 %v2174, %v2173
  %v2181 = vpack.c.b16 %v2176, %v2175
  %v2182 = vpack.c.b16 %v2178, %v2177
  %s2187 = scalar_lea.vmem %s3, 320
  %v2188 = vld [vmem:[%s2187] sm:$0xf]
  %v2189 = vld [vmem:[%s2187 + $0x4] sm:$0xf]
  %v2190 = vld [vmem:[%s2187 + $0x8] sm:$0xf]
  %v2191 = vld [vmem:[%s2187 + $0xc] sm:$0xf]
  %v2192 = vld [vmem:[%s2187 + $0x10] sm:$0xf]
  %v2193 = vld [vmem:[%s2187 + $0x14] sm:$0xf]
  %v2194 = vld [vmem:[%s2187 + $0x18] sm:$0xf]
  %v2195 = vld [vmem:[%s2187 + $0x1c] sm:$0xf]
  %v2196 = vld [vmem:[%s2187 + $0x20] sm:$0xf]
  %v2197 = vld [vmem:[%s2187 + $0x24] sm:$0xf]
  %v2198 = vld [vmem:[%s2187 + $0x28] sm:$0xf]
  %v2199 = vld [vmem:[%s2187 + $0x2c] sm:$0xf]
  %v2200 = vld [vmem:[%s2187 + $0x30] sm:$0xf]
  %v2201 = vld [vmem:[%s2187 + $0x34] sm:$0xf]
  %v2202 = vld [vmem:[%s2187 + $0x38] sm:$0xf]
  %v2203 = vld [vmem:[%s2187 + $0x3c] sm:$0xf]
  %v2220 = vunpack.c.l.b16 %v2188
  %v2221 = vunpack.c.l.b16 %v2189
  %v2222 = vunpack.c.l.b16 %v2190
  %v2223 = vunpack.c.l.b16 %v2191
  %v2224 = vunpack.c.l.b16 %v2192
  %v2225 = vunpack.c.l.b16 %v2193
  %v2226 = vunpack.c.l.b16 %v2194
  %v2227 = vunpack.c.l.b16 %v2195
  %v2228 = vunpack.c.l.b16 %v2196
  %v2229 = vunpack.c.l.b16 %v2197
  %v2230 = vunpack.c.l.b16 %v2198
  %v2231 = vunpack.c.l.b16 %v2199
  %v2232 = vunpack.c.l.b16 %v2200
  %v2233 = vunpack.c.l.b16 %v2201
  %v2234 = vunpack.c.l.b16 %v2202
  %v2235 = vunpack.c.l.b16 %v2203
  %v2236 = vpack.c.b16 %v2221, %v2220
  %v2237 = vpack.c.b16 %v2223, %v2222
  %v2238 = vpack.c.b16 %v2225, %v2224
  %v2239 = vpack.c.b16 %v2227, %v2226
  %v2240 = vpack.c.b16 %v2229, %v2228
  %v2241 = vpack.c.b16 %v2231, %v2230
  %v2242 = vpack.c.b16 %v2233, %v2232
  %v2243 = vpack.c.b16 %v2235, %v2234
  %2252 = vmatpush.bf16.msra.mxu0 %v2243
  %2253 = vmatpush.bf16.msra.mxu0 %v2242
  %2254 = vmatpush.bf16.msra.mxu0 %v2241
  %2255 = vmatpush.bf16.msra.mxu0 %v2240
  %2256 = vmatpush.bf16.msra.mxu0 %v2239
  %2257 = vmatpush.bf16.msra.mxu0 %v2238
  %2258 = vmatpush.bf16.msra.mxu0 %v2237
  %2259 = vmatpush.bf16.msra.mxu0 %v2236
  %2260 = vmatmul.bf16.gmra.mxu0 %v2163
  %v2261 = vpop.f32.mrf.mxu0
  %v2262 = vadd.f32 0.0, %v2261
  %v2263 = vpop.f32.mrf.mxu0
  %v2264 = vadd.f32 0.0, %v2263
  %2265 = vmatmul.bf16.gmra.mxu0 %v2164
  %v2266 = vpop.f32.mrf.mxu0
  %v2267 = vadd.f32 0.0, %v2266
  %v2268 = vpop.f32.mrf.mxu0
  %v2269 = vadd.f32 0.0, %v2268
  %2270 = vmatmul.bf16.gmra.mxu0 %v2165
  %v2271 = vpop.f32.mrf.mxu0
  %v2272 = vadd.f32 0.0, %v2271
  %v2273 = vpop.f32.mrf.mxu0
  %v2274 = vadd.f32 0.0, %v2273
  %2275 = vmatmul.bf16.gmra.mxu0 %v2166
  %v2276 = vpop.f32.mrf.mxu0
  %v2277 = vadd.f32 0.0, %v2276
  %v2278 = vpop.f32.mrf.mxu0
  %v2279 = vadd.f32 0.0, %v2278
  %2280 = vmatmul.bf16.gmra.mxu0 %v2179
  %v2281 = vpop.f32.mrf.mxu0
  %v2282 = vadd.f32 0.0, %v2281
  %v2283 = vpop.f32.mrf.mxu0
  %v2284 = vadd.f32 0.0, %v2283
  %2285 = vmatmul.bf16.gmra.mxu0 %v2180
  %v2286 = vpop.f32.mrf.mxu0
  %v2287 = vadd.f32 0.0, %v2286
  %v2288 = vpop.f32.mrf.mxu0
  %v2289 = vadd.f32 0.0, %v2288
  %2290 = vmatmul.bf16.gmra.mxu0 %v2181
  %v2291 = vpop.f32.mrf.mxu0
  %v2292 = vadd.f32 0.0, %v2291
  %v2293 = vpop.f32.mrf.mxu0
  %v2294 = vadd.f32 0.0, %v2293
  %2295 = vmatmul.bf16.gmra.mxu0 %v2182
  %v2296 = vpop.f32.mrf.mxu0
  %v2297 = vadd.f32 0.0, %v2296
  %v2298 = vpop.f32.mrf.mxu0
  %v2299 = vadd.f32 0.0, %v2298
  %2300 = vdwg.mxu0
  %v2301 = vadd.f32 %v2027, %v2262
  %v2302 = vadd.f32 %v2028, %v2264
  %v2303 = vadd.f32 %v2029, %v2267
  %v2304 = vadd.f32 %v2030, %v2269
  %v2305 = vadd.f32 %v2031, %v2272
  %v2306 = vadd.f32 %v2032, %v2274
  %v2307 = vadd.f32 %v2033, %v2277
  %v2308 = vadd.f32 %v2034, %v2279
  %v2309 = vadd.f32 %v2035, %v2282
  %v2310 = vadd.f32 %v2036, %v2284
  %v2311 = vadd.f32 %v2037, %v2287
  %v2312 = vadd.f32 %v2038, %v2289
  %v2313 = vadd.f32 %v2039, %v2292
  %v2314 = vadd.f32 %v2040, %v2294
  %v2315 = vadd.f32 %v2041, %v2297
  %v2316 = vadd.f32 %v2042, %v2299
  %s2317 = scalar_lea.vmem [#allocation2], 16
  %v2318 = vld [vmem:[%s2317] sm:$0xf]
  %v2319 = vld [vmem:[%s2317 + $0x8] sm:$0xf]
  %v2320 = vld [vmem:[%s2317 + $0x10] sm:$0xf]
  %v2321 = vld [vmem:[%s2317 + $0x18] sm:$0xf]
  %v2322 = vld [vmem:[%s2317 + $0x20] sm:$0xf]
  %v2323 = vld [vmem:[%s2317 + $0x28] sm:$0xf]
  %v2324 = vld [vmem:[%s2317 + $0x30] sm:$0xf]
  %v2325 = vld [vmem:[%s2317 + $0x38] sm:$0xf]
  %s2326 = scalar_lea.vmem [#allocation2], 96
  %v2327 = vld [vmem:[%s2326] sm:$0xf]
  %v2328 = vld [vmem:[%s2326 + $0x8] sm:$0xf]
  %v2329 = vld [vmem:[%s2326 + $0x10] sm:$0xf]
  %v2330 = vld [vmem:[%s2326 + $0x18] sm:$0xf]
  %v2331 = vld [vmem:[%s2326 + $0x20] sm:$0xf]
  %v2332 = vld [vmem:[%s2326 + $0x28] sm:$0xf]
  %v2333 = vld [vmem:[%s2326 + $0x30] sm:$0xf]
  %v2334 = vld [vmem:[%s2326 + $0x38] sm:$0xf]
  %v2343 = vunpack.c.l.b16 %v2318
  %v2344 = vunpack.c.l.b16 %v2319
  %v2345 = vunpack.c.l.b16 %v2320
  %v2346 = vunpack.c.l.b16 %v2321
  %v2347 = vunpack.c.l.b16 %v2322
  %v2348 = vunpack.c.l.b16 %v2323
  %v2349 = vunpack.c.l.b16 %v2324
  %v2350 = vunpack.c.l.b16 %v2325
  %v2351 = vpack.c.b16 %v2344, %v2343
  %v2352 = vpack.c.b16 %v2346, %v2345
  %v2353 = vpack.c.b16 %v2348, %v2347
  %v2354 = vpack.c.b16 %v2350, %v2349
  %v2367 = vunpack.c.l.b16 %v2327
  %v2368 = vunpack.c.l.b16 %v2328
  %v2369 = vunpack.c.l.b16 %v2329
  %v2370 = vunpack.c.l.b16 %v2330
  %v2371 = vunpack.c.l.b16 %v2331
  %v2372 = vunpack.c.l.b16 %v2332
  %v2373 = vunpack.c.l.b16 %v2333
  %v2374 = vunpack.c.l.b16 %v2334
  %v2375 = vpack.c.b16 %v2368, %v2367
  %v2376 = vpack.c.b16 %v2370, %v2369
  %v2377 = vpack.c.b16 %v2372, %v2371
  %v2378 = vpack.c.b16 %v2374, %v2373
  %s2383 = scalar_lea.vmem %s3, 384
  %v2384 = vld [vmem:[%s2383] sm:$0xf]
  %v2385 = vld [vmem:[%s2383 + $0x4] sm:$0xf]
  %v2386 = vld [vmem:[%s2383 + $0x8] sm:$0xf]
  %v2387 = vld [vmem:[%s2383 + $0xc] sm:$0xf]
  %v2388 = vld [vmem:[%s2383 + $0x10] sm:$0xf]
  %v2389 = vld [vmem:[%s2383 + $0x14] sm:$0xf]
  %v2390 = vld [vmem:[%s2383 + $0x18] sm:$0xf]
  %v2391 = vld [vmem:[%s2383 + $0x1c] sm:$0xf]
  %v2392 = vld [vmem:[%s2383 + $0x20] sm:$0xf]
  %v2393 = vld [vmem:[%s2383 + $0x24] sm:$0xf]
  %v2394 = vld [vmem:[%s2383 + $0x28] sm:$0xf]
  %v2395 = vld [vmem:[%s2383 + $0x2c] sm:$0xf]
  %v2396 = vld [vmem:[%s2383 + $0x30] sm:$0xf]
  %v2397 = vld [vmem:[%s2383 + $0x34] sm:$0xf]
  %v2398 = vld [vmem:[%s2383 + $0x38] sm:$0xf]
  %v2399 = vld [vmem:[%s2383 + $0x3c] sm:$0xf]
  %v2416 = vunpack.c.l.b16 %v2384
  %v2417 = vunpack.c.l.b16 %v2385
  %v2418 = vunpack.c.l.b16 %v2386
  %v2419 = vunpack.c.l.b16 %v2387
  %v2420 = vunpack.c.l.b16 %v2388
  %v2421 = vunpack.c.l.b16 %v2389
  %v2422 = vunpack.c.l.b16 %v2390
  %v2423 = vunpack.c.l.b16 %v2391
  %v2424 = vunpack.c.l.b16 %v2392
  %v2425 = vunpack.c.l.b16 %v2393
  %v2426 = vunpack.c.l.b16 %v2394
  %v2427 = vunpack.c.l.b16 %v2395
  %v2428 = vunpack.c.l.b16 %v2396
  %v2429 = vunpack.c.l.b16 %v2397
  %v2430 = vunpack.c.l.b16 %v2398
  %v2431 = vunpack.c.l.b16 %v2399
  %v2432 = vpack.c.b16 %v2417, %v2416
  %v2433 = vpack.c.b16 %v2419, %v2418
  %v2434 = vpack.c.b16 %v2421, %v2420
  %v2435 = vpack.c.b16 %v2423, %v2422
  %v2436 = vpack.c.b16 %v2425, %v2424
  %v2437 = vpack.c.b16 %v2427, %v2426
  %v2438 = vpack.c.b16 %v2429, %v2428
  %v2439 = vpack.c.b16 %v2431, %v2430
  %2448 = vmatpush.bf16.msra.mxu0 %v2439
  %2449 = vmatpush.bf16.msra.mxu0 %v2438
  %2450 = vmatpush.bf16.msra.mxu0 %v2437
  %2451 = vmatpush.bf16.msra.mxu0 %v2436
  %2452 = vmatpush.bf16.msra.mxu0 %v2435
  %2453 = vmatpush.bf16.msra.mxu0 %v2434
  %2454 = vmatpush.bf16.msra.mxu0 %v2433
  %2455 = vmatpush.bf16.msra.mxu0 %v2432
  %2456 = vmatmul.bf16.gmra.mxu0 %v2351
  %v2457 = vpop.f32.mrf.mxu0
  %v2458 = vadd.f32 0.0, %v2457
  %v2459 = vpop.f32.mrf.mxu0
  %v2460 = vadd.f32 0.0, %v2459
  %2461 = vmatmul.bf16.gmra.mxu0 %v2352
  %v2462 = vpop.f32.mrf.mxu0
  %v2463 = vadd.f32 0.0, %v2462
  %v2464 = vpop.f32.mrf.mxu0
  %v2465 = vadd.f32 0.0, %v2464
  %2466 = vmatmul.bf16.gmra.mxu0 %v2353
  %v2467 = vpop.f32.mrf.mxu0
  %v2468 = vadd.f32 0.0, %v2467
  %v2469 = vpop.f32.mrf.mxu0
  %v2470 = vadd.f32 0.0, %v2469
  %2471 = vmatmul.bf16.gmra.mxu0 %v2354
  %v2472 = vpop.f32.mrf.mxu0
  %v2473 = vadd.f32 0.0, %v2472
  %v2474 = vpop.f32.mrf.mxu0
  %v2475 = vadd.f32 0.0, %v2474
  %2476 = vmatmul.bf16.gmra.mxu0 %v2375
  %v2477 = vpop.f32.mrf.mxu0
  %v2478 = vadd.f32 0.0, %v2477
  %v2479 = vpop.f32.mrf.mxu0
  %v2480 = vadd.f32 0.0, %v2479
  %2481 = vmatmul.bf16.gmra.mxu0 %v2376
  %v2482 = vpop.f32.mrf.mxu0
  %v2483 = vadd.f32 0.0, %v2482
  %v2484 = vpop.f32.mrf.mxu0
  %v2485 = vadd.f32 0.0, %v2484
  %2486 = vmatmul.bf16.gmra.mxu0 %v2377
  %v2487 = vpop.f32.mrf.mxu0
  %v2488 = vadd.f32 0.0, %v2487
  %v2489 = vpop.f32.mrf.mxu0
  %v2490 = vadd.f32 0.0, %v2489
  %2491 = vmatmul.bf16.gmra.mxu0 %v2378
  %v2492 = vpop.f32.mrf.mxu0
  %v2493 = vadd.f32 0.0, %v2492
  %v2494 = vpop.f32.mrf.mxu0
  %v2495 = vadd.f32 0.0, %v2494
  %2496 = vdwg.mxu0
  %v2497 = vadd.f32 %v2301, %v2458
  %v2498 = vadd.f32 %v2302, %v2460
  %v2499 = vadd.f32 %v2303, %v2463
  %v2500 = vadd.f32 %v2304, %v2465
  %v2501 = vadd.f32 %v2305, %v2468
  %v2502 = vadd.f32 %v2306, %v2470
  %v2503 = vadd.f32 %v2307, %v2473
  %v2504 = vadd.f32 %v2308, %v2475
  %v2505 = vadd.f32 %v2309, %v2478
  %v2506 = vadd.f32 %v2310, %v2480
  %v2507 = vadd.f32 %v2311, %v2483
  %v2508 = vadd.f32 %v2312, %v2485
  %v2509 = vadd.f32 %v2313, %v2488
  %v2510 = vadd.f32 %v2314, %v2490
  %v2511 = vadd.f32 %v2315, %v2493
  %v2512 = vadd.f32 %v2316, %v2495
  %v2513 = vld [vmem:[%s2317] sm:$0xf]
  %v2514 = vld [vmem:[%s2317 + $0x4] sm:$0x1]
  %v2515 = vld [vmem:[%s2317 + $0x8] sm:$0xf]
  %v2516 = vld [vmem:[%s2317 + $0xc] sm:$0x1]
  %v2517 = vld [vmem:[%s2317 + $0x10] sm:$0xf]
  %v2518 = vld [vmem:[%s2317 + $0x14] sm:$0x1]
  %v2519 = vld [vmem:[%s2317 + $0x18] sm:$0xf]
  %v2520 = vld [vmem:[%s2317 + $0x1c] sm:$0x1]
  %v2521 = vld [vmem:[%s2317 + $0x20] sm:$0xf]
  %v2522 = vld [vmem:[%s2317 + $0x24] sm:$0x1]
  %v2523 = vld [vmem:[%s2317 + $0x28] sm:$0xf]
  %v2524 = vld [vmem:[%s2317 + $0x2c] sm:$0x1]
  %v2525 = vld [vmem:[%s2317 + $0x30] sm:$0xf]
  %v2526 = vld [vmem:[%s2317 + $0x34] sm:$0x1]
  %v2527 = vld [vmem:[%s2317 + $0x38] sm:$0xf]
  %v2528 = vld [vmem:[%s2317 + $0x3c] sm:$0x1]
  %v2530 = vshrl.u32 %v2513, 16
  %v2532 = vrot.slane %v2530, 4
  %v2533 = vshll.u32 %v2513, 16
  %v2535 = vrot.slane %v2533, 5
  %v2536 = vor.u32 %v2532, %v2535
  %v2537 = vrot.slane %v2536, 4
  %v2539 = vshll.u32 %v2514, 16
  %v2541 = vrot.slane %v2539, 5
  %v2542 = vsel %vm678, %v2537, %v2541
  %v2544 = vshrl.u32 %v2515, 16
  %v2546 = vrot.slane %v2544, 4
  %v2547 = vshll.u32 %v2515, 16
  %v2549 = vrot.slane %v2547, 5
  %v2550 = vor.u32 %v2546, %v2549
  %v2551 = vrot.slane %v2550, 4
  %v2553 = vshll.u32 %v2516, 16
  %v2555 = vrot.slane %v2553, 5
  %v2556 = vsel %vm678, %v2551, %v2555
  %v2558 = vshrl.u32 %v2517, 16
  %v2560 = vrot.slane %v2558, 4
  %v2561 = vshll.u32 %v2517, 16
  %v2563 = vrot.slane %v2561, 5
  %v2564 = vor.u32 %v2560, %v2563
  %v2565 = vrot.slane %v2564, 4
  %v2567 = vshll.u32 %v2518, 16
  %v2569 = vrot.slane %v2567, 5
  %v2570 = vsel %vm678, %v2565, %v2569
  %v2572 = vshrl.u32 %v2519, 16
  %v2574 = vrot.slane %v2572, 4
  %v2575 = vshll.u32 %v2519, 16
  %v2577 = vrot.slane %v2575, 5
  %v2578 = vor.u32 %v2574, %v2577
  %v2579 = vrot.slane %v2578, 4
  %v2581 = vshll.u32 %v2520, 16
  %v2583 = vrot.slane %v2581, 5
  %v2584 = vsel %vm678, %v2579, %v2583
  %v2586 = vshrl.u32 %v2521, 16
  %v2588 = vrot.slane %v2586, 4
  %v2589 = vshll.u32 %v2521, 16
  %v2591 = vrot.slane %v2589, 5
  %v2592 = vor.u32 %v2588, %v2591
  %v2593 = vrot.slane %v2592, 4
  %v2595 = vshll.u32 %v2522, 16
  %v2597 = vrot.slane %v2595, 5
  %v2598 = vsel %vm678, %v2593, %v2597
  %v2600 = vshrl.u32 %v2523, 16
  %v2602 = vrot.slane %v2600, 4
  %v2603 = vshll.u32 %v2523, 16
  %v2605 = vrot.slane %v2603, 5
  %v2606 = vor.u32 %v2602, %v2605
  %v2607 = vrot.slane %v2606, 4
  %v2609 = vshll.u32 %v2524, 16
  %v2611 = vrot.slane %v2609, 5
  %v2612 = vsel %vm678, %v2607, %v2611
  %v2614 = vshrl.u32 %v2525, 16
  %v2616 = vrot.slane %v2614, 4
  %v2617 = vshll.u32 %v2525, 16
  %v2619 = vrot.slane %v2617, 5
  %v2620 = vor.u32 %v2616, %v2619
  %v2621 = vrot.slane %v2620, 4
  %v2623 = vshll.u32 %v2526, 16
  %v2625 = vrot.slane %v2623, 5
  %v2626 = vsel %vm678, %v2621, %v2625
  %v2628 = vshrl.u32 %v2527, 16
  %v2630 = vrot.slane %v2628, 4
  %v2631 = vshll.u32 %v2527, 16
  %v2633 = vrot.slane %v2631, 5
  %v2634 = vor.u32 %v2630, %v2633
  %v2635 = vrot.slane %v2634, 4
  %v2637 = vshll.u32 %v2528, 16
  %v2639 = vrot.slane %v2637, 5
  %v2640 = vsel %vm678, %v2635, %v2639
  %v2641 = vld [vmem:[%s2326] sm:$0xf]
  %v2642 = vld [vmem:[%s2326 + $0x4] sm:$0x1]
  %v2643 = vld [vmem:[%s2326 + $0x8] sm:$0xf]
  %v2644 = vld [vmem:[%s2326 + $0xc] sm:$0x1]
  %v2645 = vld [vmem:[%s2326 + $0x10] sm:$0xf]
  %v2646 = vld [vmem:[%s2326 + $0x14] sm:$0x1]
  %v2647 = vld [vmem:[%s2326 + $0x18] sm:$0xf]
  %v2648 = vld [vmem:[%s2326 + $0x1c] sm:$0x1]
  %v2649 = vld [vmem:[%s2326 + $0x20] sm:$0xf]
  %v2650 = vld [vmem:[%s2326 + $0x24] sm:$0x1]
  %v2651 = vld [vmem:[%s2326 + $0x28] sm:$0xf]
  %v2652 = vld [vmem:[%s2326 + $0x2c] sm:$0x1]
  %v2653 = vld [vmem:[%s2326 + $0x30] sm:$0xf]
  %v2654 = vld [vmem:[%s2326 + $0x34] sm:$0x1]
  %v2655 = vld [vmem:[%s2326 + $0x38] sm:$0xf]
  %v2656 = vld [vmem:[%s2326 + $0x3c] sm:$0x1]
  %v2658 = vshrl.u32 %v2641, 16
  %v2660 = vrot.slane %v2658, 4
  %v2661 = vshll.u32 %v2641, 16
  %v2663 = vrot.slane %v2661, 5
  %v2664 = vor.u32 %v2660, %v2663
  %v2665 = vrot.slane %v2664, 4
  %v2667 = vshll.u32 %v2642, 16
  %v2669 = vrot.slane %v2667, 5
  %v2670 = vsel %vm678, %v2665, %v2669
  %v2672 = vshrl.u32 %v2643, 16
  %v2674 = vrot.slane %v2672, 4
  %v2675 = vshll.u32 %v2643, 16
  %v2677 = vrot.slane %v2675, 5
  %v2678 = vor.u32 %v2674, %v2677
  %v2679 = vrot.slane %v2678, 4
  %v2681 = vshll.u32 %v2644, 16
  %v2683 = vrot.slane %v2681, 5
  %v2684 = vsel %vm678, %v2679, %v2683
  %v2686 = vshrl.u32 %v2645, 16
  %v2688 = vrot.slane %v2686, 4
  %v2689 = vshll.u32 %v2645, 16
  %v2691 = vrot.slane %v2689, 5
  %v2692 = vor.u32 %v2688, %v2691
  %v2693 = vrot.slane %v2692, 4
  %v2695 = vshll.u32 %v2646, 16
  %v2697 = vrot.slane %v2695, 5
  %v2698 = vsel %vm678, %v2693, %v2697
  %v2700 = vshrl.u32 %v2647, 16
  %v2702 = vrot.slane %v2700, 4
  %v2703 = vshll.u32 %v2647, 16
  %v2705 = vrot.slane %v2703, 5
  %v2706 = vor.u32 %v2702, %v2705
  %v2707 = vrot.slane %v2706, 4
  %v2709 = vshll.u32 %v2648, 16
  %v2711 = vrot.slane %v2709, 5
  %v2712 = vsel %vm678, %v2707, %v2711
  %v2714 = vshrl.u32 %v2649, 16
  %v2716 = vrot.slane %v2714, 4
  %v2717 = vshll.u32 %v2649, 16
  %v2719 = vrot.slane %v2717, 5
  %v2720 = vor.u32 %v2716, %v2719
  %v2721 = vrot.slane %v2720, 4
  %v2723 = vshll.u32 %v2650, 16
  %v2725 = vrot.slane %v2723, 5
  %v2726 = vsel %vm678, %v2721, %v2725
  %v2728 = vshrl.u32 %v2651, 16
  %v2730 = vrot.slane %v2728, 4
  %v2731 = vshll.u32 %v2651, 16
  %v2733 = vrot.slane %v2731, 5
  %v2734 = vor.u32 %v2730, %v2733
  %v2735 = vrot.slane %v2734, 4
  %v2737 = vshll.u32 %v2652, 16
  %v2739 = vrot.slane %v2737, 5
  %v2740 = vsel %vm678, %v2735, %v2739
  %v2742 = vshrl.u32 %v2653, 16
  %v2744 = vrot.slane %v2742, 4
  %v2745 = vshll.u32 %v2653, 16
  %v2747 = vrot.slane %v2745, 5
  %v2748 = vor.u32 %v2744, %v2747
  %v2749 = vrot.slane %v2748, 4
  %v2751 = vshll.u32 %v2654, 16
  %v2753 = vrot.slane %v2751, 5
  %v2754 = vsel %vm678, %v2749, %v2753
  %v2756 = vshrl.u32 %v2655, 16
  %v2758 = vrot.slane %v2756, 4
  %v2759 = vshll.u32 %v2655, 16
  %v2761 = vrot.slane %v2759, 5
  %v2762 = vor.u32 %v2758, %v2761
  %v2763 = vrot.slane %v2762, 4
  %v2765 = vshll.u32 %v2656, 16
  %v2767 = vrot.slane %v2765, 5
  %v2768 = vsel %vm678, %v2763, %v2767
  %v2769 = vunpack.c.l.b16 %v2542
  %v2770 = vunpack.c.l.b16 %v2556
  %v2771 = vunpack.c.l.b16 %v2570
  %v2772 = vunpack.c.l.b16 %v2584
  %v2773 = vunpack.c.l.b16 %v2598
  %v2774 = vunpack.c.l.b16 %v2612
  %v2775 = vunpack.c.l.b16 %v2626
  %v2776 = vunpack.c.l.b16 %v2640
  %v2777 = vpack.c.b16 %v2770, %v2769
  %v2778 = vpack.c.b16 %v2772, %v2771
  %v2779 = vpack.c.b16 %v2774, %v2773
  %v2780 = vpack.c.b16 %v2776, %v2775
  %v2785 = vunpack.c.l.b16 %v2670
  %v2786 = vunpack.c.l.b16 %v2684
  %v2787 = vunpack.c.l.b16 %v2698
  %v2788 = vunpack.c.l.b16 %v2712
  %v2789 = vunpack.c.l.b16 %v2726
  %v2790 = vunpack.c.l.b16 %v2740
  %v2791 = vunpack.c.l.b16 %v2754
  %v2792 = vunpack.c.l.b16 %v2768
  %v2793 = vpack.c.b16 %v2786, %v2785
  %v2794 = vpack.c.b16 %v2788, %v2787
  %v2795 = vpack.c.b16 %v2790, %v2789
  %v2796 = vpack.c.b16 %v2792, %v2791
  %s2801 = scalar_lea.vmem %s3, 448
  %v2802 = vld [vmem:[%s2801] sm:$0xf]
  %v2803 = vld [vmem:[%s2801 + $0x4] sm:$0xf]
  %v2804 = vld [vmem:[%s2801 + $0x8] sm:$0xf]
  %v2805 = vld [vmem:[%s2801 + $0xc] sm:$0xf]
  %v2806 = vld [vmem:[%s2801 + $0x10] sm:$0xf]
  %v2807 = vld [vmem:[%s2801 + $0x14] sm:$0xf]
  %v2808 = vld [vmem:[%s2801 + $0x18] sm:$0xf]
  %v2809 = vld [vmem:[%s2801 + $0x1c] sm:$0xf]
  %v2810 = vld [vmem:[%s2801 + $0x20] sm:$0xf]
  %v2811 = vld [vmem:[%s2801 + $0x24] sm:$0xf]
  %v2812 = vld [vmem:[%s2801 + $0x28] sm:$0xf]
  %v2813 = vld [vmem:[%s2801 + $0x2c] sm:$0xf]
  %v2814 = vld [vmem:[%s2801 + $0x30] sm:$0xf]
  %v2815 = vld [vmem:[%s2801 + $0x34] sm:$0xf]
  %v2816 = vld [vmem:[%s2801 + $0x38] sm:$0xf]
  %v2817 = vld [vmem:[%s2801 + $0x3c] sm:$0xf]
  %v2834 = vunpack.c.l.b16 %v2802
  %v2835 = vunpack.c.l.b16 %v2803
  %v2836 = vunpack.c.l.b16 %v2804
  %v2837 = vunpack.c.l.b16 %v2805
  %v2838 = vunpack.c.l.b16 %v2806
  %v2839 = vunpack.c.l.b16 %v2807
  %v2840 = vunpack.c.l.b16 %v2808
  %v2841 = vunpack.c.l.b16 %v2809
  %v2842 = vunpack.c.l.b16 %v2810
  %v2843 = vunpack.c.l.b16 %v2811
  %v2844 = vunpack.c.l.b16 %v2812
  %v2845 = vunpack.c.l.b16 %v2813
  %v2846 = vunpack.c.l.b16 %v2814
  %v2847 = vunpack.c.l.b16 %v2815
  %v2848 = vunpack.c.l.b16 %v2816
  %v2849 = vunpack.c.l.b16 %v2817
  %v2850 = vpack.c.b16 %v2835, %v2834
  %v2851 = vpack.c.b16 %v2837, %v2836
  %v2852 = vpack.c.b16 %v2839, %v2838
  %v2853 = vpack.c.b16 %v2841, %v2840
  %v2854 = vpack.c.b16 %v2843, %v2842
  %v2855 = vpack.c.b16 %v2845, %v2844
  %v2856 = vpack.c.b16 %v2847, %v2846
  %v2857 = vpack.c.b16 %v2849, %v2848
  %2866 = vmatpush.bf16.msra.mxu0 %v2857
  %2867 = vmatpush.bf16.msra.mxu0 %v2856
  %2868 = vmatpush.bf16.msra.mxu0 %v2855
  %2869 = vmatpush.bf16.msra.mxu0 %v2854
  %2870 = vmatpush.bf16.msra.mxu0 %v2853
  %2871 = vmatpush.bf16.msra.mxu0 %v2852
  %2872 = vmatpush.bf16.msra.mxu0 %v2851
  %2873 = vmatpush.bf16.msra.mxu0 %v2850
  %2874 = vmatmul.bf16.gmra.mxu0 %v2777
  %v2875 = vpop.f32.mrf.mxu0
  %v2876 = vadd.f32 0.0, %v2875
  %v2877 = vpop.f32.mrf.mxu0
  %v2878 = vadd.f32 0.0, %v2877
  %2879 = vmatmul.bf16.gmra.mxu0 %v2778
  %v2880 = vpop.f32.mrf.mxu0
  %v2881 = vadd.f32 0.0, %v2880
  %v2882 = vpop.f32.mrf.mxu0
  %v2883 = vadd.f32 0.0, %v2882
  %2884 = vmatmul.bf16.gmra.mxu0 %v2779
  %v2885 = vpop.f32.mrf.mxu0
  %v2886 = vadd.f32 0.0, %v2885
  %v2887 = vpop.f32.mrf.mxu0
  %v2888 = vadd.f32 0.0, %v2887
  %2889 = vmatmul.bf16.gmra.mxu0 %v2780
  %v2890 = vpop.f32.mrf.mxu0
  %v2891 = vadd.f32 0.0, %v2890
  %v2892 = vpop.f32.mrf.mxu0
  %v2893 = vadd.f32 0.0, %v2892
  %2894 = vmatmul.bf16.gmra.mxu0 %v2793
  %v2895 = vpop.f32.mrf.mxu0
  %v2896 = vadd.f32 0.0, %v2895
  %v2897 = vpop.f32.mrf.mxu0
  %v2898 = vadd.f32 0.0, %v2897
  %2899 = vmatmul.bf16.gmra.mxu0 %v2794
  %v2900 = vpop.f32.mrf.mxu0
  %v2901 = vadd.f32 0.0, %v2900
  %v2902 = vpop.f32.mrf.mxu0
  %v2903 = vadd.f32 0.0, %v2902
  %2904 = vmatmul.bf16.gmra.mxu0 %v2795
  %v2905 = vpop.f32.mrf.mxu0
  %v2906 = vadd.f32 0.0, %v2905
  %v2907 = vpop.f32.mrf.mxu0
  %v2908 = vadd.f32 0.0, %v2907
  %2909 = vmatmul.bf16.gmra.mxu0 %v2796
  %v2910 = vpop.f32.mrf.mxu0
  %v2911 = vadd.f32 0.0, %v2910
  %v2912 = vpop.f32.mrf.mxu0
  %v2913 = vadd.f32 0.0, %v2912
  %2914 = vdwg.mxu0
  %v2915 = vadd.f32 %v2497, %v2876
  %v2916 = vadd.f32 %v2498, %v2878
  %v2917 = vadd.f32 %v2499, %v2881
  %v2918 = vadd.f32 %v2500, %v2883
  %v2919 = vadd.f32 %v2501, %v2886
  %v2920 = vadd.f32 %v2502, %v2888
  %v2921 = vadd.f32 %v2503, %v2891
  %v2922 = vadd.f32 %v2504, %v2893
  %v2923 = vadd.f32 %v2505, %v2896
  %v2924 = vadd.f32 %v2506, %v2898
  %v2925 = vadd.f32 %v2507, %v2901
  %v2926 = vadd.f32 %v2508, %v2903
  %v2927 = vadd.f32 %v2509, %v2906
  %v2928 = vadd.f32 %v2510, %v2908
  %v2929 = vadd.f32 %v2511, %v2911
  %v2930 = vadd.f32 %v2512, %v2913
  %v2931 = vld [vmem:[%s2317] sm:$0xe]
  %v2932 = vld [vmem:[%s2317 + $0x8] sm:$0xe]
  %v2933 = vld [vmem:[%s2317 + $0x10] sm:$0xe]
  %v2934 = vld [vmem:[%s2317 + $0x18] sm:$0xe]
  %v2935 = vld [vmem:[%s2317 + $0x20] sm:$0xe]
  %v2936 = vld [vmem:[%s2317 + $0x28] sm:$0xe]
  %v2937 = vld [vmem:[%s2317 + $0x30] sm:$0xe]
  %v2938 = vld [vmem:[%s2317 + $0x38] sm:$0xe]
  %v2955 = vrot.slane %v2931, 5
  %v2956 = vrot.slane %v2955, 4
  %v2957 = vrot.slane %v2514, 5
  %v2958 = vsel %vm1180, %v2956, %v2957
  %v2959 = vrot.slane %v2932, 5
  %v2960 = vrot.slane %v2959, 4
  %v2961 = vrot.slane %v2516, 5
  %v2962 = vsel %vm1180, %v2960, %v2961
  %v2963 = vrot.slane %v2933, 5
  %v2964 = vrot.slane %v2963, 4
  %v2965 = vrot.slane %v2518, 5
  %v2966 = vsel %vm1180, %v2964, %v2965
  %v2967 = vrot.slane %v2934, 5
  %v2968 = vrot.slane %v2967, 4
  %v2969 = vrot.slane %v2520, 5
  %v2970 = vsel %vm1180, %v2968, %v2969
  %v2971 = vrot.slane %v2935, 5
  %v2972 = vrot.slane %v2971, 4
  %v2973 = vrot.slane %v2522, 5
  %v2974 = vsel %vm1180, %v2972, %v2973
  %v2975 = vrot.slane %v2936, 5
  %v2976 = vrot.slane %v2975, 4
  %v2977 = vrot.slane %v2524, 5
  %v2978 = vsel %vm1180, %v2976, %v2977
  %v2979 = vrot.slane %v2937, 5
  %v2980 = vrot.slane %v2979, 4
  %v2981 = vrot.slane %v2526, 5
  %v2982 = vsel %vm1180, %v2980, %v2981
  %v2983 = vrot.slane %v2938, 5
  %v2984 = vrot.slane %v2983, 4
  %v2985 = vrot.slane %v2528, 5
  %v2986 = vsel %vm1180, %v2984, %v2985
  %v2987 = vld [vmem:[%s2326] sm:$0xe]
  %v2988 = vld [vmem:[%s2326 + $0x8] sm:$0xe]
  %v2989 = vld [vmem:[%s2326 + $0x10] sm:$0xe]
  %v2990 = vld [vmem:[%s2326 + $0x18] sm:$0xe]
  %v2991 = vld [vmem:[%s2326 + $0x20] sm:$0xe]
  %v2992 = vld [vmem:[%s2326 + $0x28] sm:$0xe]
  %v2993 = vld [vmem:[%s2326 + $0x30] sm:$0xe]
  %v2994 = vld [vmem:[%s2326 + $0x38] sm:$0xe]
  %v3011 = vrot.slane %v2987, 5
  %v3012 = vrot.slane %v3011, 4
  %v3013 = vrot.slane %v2642, 5
  %v3014 = vsel %vm1180, %v3012, %v3013
  %v3015 = vrot.slane %v2988, 5
  %v3016 = vrot.slane %v3015, 4
  %v3017 = vrot.slane %v2644, 5
  %v3018 = vsel %vm1180, %v3016, %v3017
  %v3019 = vrot.slane %v2989, 5
  %v3020 = vrot.slane %v3019, 4
  %v3021 = vrot.slane %v2646, 5
  %v3022 = vsel %vm1180, %v3020, %v3021
  %v3023 = vrot.slane %v2990, 5
  %v3024 = vrot.slane %v3023, 4
  %v3025 = vrot.slane %v2648, 5
  %v3026 = vsel %vm1180, %v3024, %v3025
  %v3027 = vrot.slane %v2991, 5
  %v3028 = vrot.slane %v3027, 4
  %v3029 = vrot.slane %v2650, 5
  %v3030 = vsel %vm1180, %v3028, %v3029
  %v3031 = vrot.slane %v2992, 5
  %v3032 = vrot.slane %v3031, 4
  %v3033 = vrot.slane %v2652, 5
  %v3034 = vsel %vm1180, %v3032, %v3033
  %v3035 = vrot.slane %v2993, 5
  %v3036 = vrot.slane %v3035, 4
  %v3037 = vrot.slane %v2654, 5
  %v3038 = vsel %vm1180, %v3036, %v3037
  %v3039 = vrot.slane %v2994, 5
  %v3040 = vrot.slane %v3039, 4
  %v3041 = vrot.slane %v2656, 5
  %v3042 = vsel %vm1180, %v3040, %v3041
  %v3043 = vunpack.c.l.b16 %v2958
  %v3044 = vunpack.c.l.b16 %v2962
  %v3045 = vunpack.c.l.b16 %v2966
  %v3046 = vunpack.c.l.b16 %v2970
  %v3047 = vunpack.c.l.b16 %v2974
  %v3048 = vunpack.c.l.b16 %v2978
  %v3049 = vunpack.c.l.b16 %v2982
  %v3050 = vunpack.c.l.b16 %v2986
  %v3051 = vpack.c.b16 %v3044, %v3043
  %v3052 = vpack.c.b16 %v3046, %v3045
  %v3053 = vpack.c.b16 %v3048, %v3047
  %v3054 = vpack.c.b16 %v3050, %v3049
  %v3059 = vunpack.c.l.b16 %v3014
  %v3060 = vunpack.c.l.b16 %v3018
  %v3061 = vunpack.c.l.b16 %v3022
  %v3062 = vunpack.c.l.b16 %v3026
  %v3063 = vunpack.c.l.b16 %v3030
  %v3064 = vunpack.c.l.b16 %v3034
  %v3065 = vunpack.c.l.b16 %v3038
  %v3066 = vunpack.c.l.b16 %v3042
  %v3067 = vpack.c.b16 %v3060, %v3059
  %v3068 = vpack.c.b16 %v3062, %v3061
  %v3069 = vpack.c.b16 %v3064, %v3063
  %v3070 = vpack.c.b16 %v3066, %v3065
  %s3075 = scalar_lea.vmem %s3, 512
  %v3076 = vld [vmem:[%s3075] sm:$0xf]
  %v3077 = vld [vmem:[%s3075 + $0x4] sm:$0xf]
  %v3078 = vld [vmem:[%s3075 + $0x8] sm:$0xf]
  %v3079 = vld [vmem:[%s3075 + $0xc] sm:$0xf]
  %v3080 = vld [vmem:[%s3075 + $0x10] sm:$0xf]
  %v3081 = vld [vmem:[%s3075 + $0x14] sm:$0xf]
  %v3082 = vld [vmem:[%s3075 + $0x18] sm:$0xf]
  %v3083 = vld [vmem:[%s3075 + $0x1c] sm:$0xf]
  %v3084 = vld [vmem:[%s3075 + $0x20] sm:$0xf]
  %v3085 = vld [vmem:[%s3075 + $0x24] sm:$0xf]
  %v3086 = vld [vmem:[%s3075 + $0x28] sm:$0xf]
  %v3087 = vld [vmem:[%s3075 + $0x2c] sm:$0xf]
  %v3088 = vld [vmem:[%s3075 + $0x30] sm:$0xf]
  %v3089 = vld [vmem:[%s3075 + $0x34] sm:$0xf]
  %v3090 = vld [vmem:[%s3075 + $0x38] sm:$0xf]
  %v3091 = vld [vmem:[%s3075 + $0x3c] sm:$0xf]
  %v3108 = vunpack.c.l.b16 %v3076
  %v3109 = vunpack.c.l.b16 %v3077
  %v3110 = vunpack.c.l.b16 %v3078
  %v3111 = vunpack.c.l.b16 %v3079
  %v3112 = vunpack.c.l.b16 %v3080
  %v3113 = vunpack.c.l.b16 %v3081
  %v3114 = vunpack.c.l.b16 %v3082
  %v3115 = vunpack.c.l.b16 %v3083
  %v3116 = vunpack.c.l.b16 %v3084
  %v3117 = vunpack.c.l.b16 %v3085
  %v3118 = vunpack.c.l.b16 %v3086
  %v3119 = vunpack.c.l.b16 %v3087
  %v3120 = vunpack.c.l.b16 %v3088
  %v3121 = vunpack.c.l.b16 %v3089
  %v3122 = vunpack.c.l.b16 %v3090
  %v3123 = vunpack.c.l.b16 %v3091
  %v3124 = vpack.c.b16 %v3109, %v3108
  %v3125 = vpack.c.b16 %v3111, %v3110
  %v3126 = vpack.c.b16 %v3113, %v3112
  %v3127 = vpack.c.b16 %v3115, %v3114
  %v3128 = vpack.c.b16 %v3117, %v3116
  %v3129 = vpack.c.b16 %v3119, %v3118
  %v3130 = vpack.c.b16 %v3121, %v3120
  %v3131 = vpack.c.b16 %v3123, %v3122
  %3140 = vmatpush.bf16.msra.mxu0 %v3131
  %3141 = vmatpush.bf16.msra.mxu0 %v3130
  %3142 = vmatpush.bf16.msra.mxu0 %v3129
  %3143 = vmatpush.bf16.msra.mxu0 %v3128
  %3144 = vmatpush.bf16.msra.mxu0 %v3127
  %3145 = vmatpush.bf16.msra.mxu0 %v3126
  %3146 = vmatpush.bf16.msra.mxu0 %v3125
  %3147 = vmatpush.bf16.msra.mxu0 %v3124
  %3148 = vmatmul.bf16.gmra.mxu0 %v3051
  %v3149 = vpop.f32.mrf.mxu0
  %v3150 = vadd.f32 0.0, %v3149
  %v3151 = vpop.f32.mrf.mxu0
  %v3152 = vadd.f32 0.0, %v3151
  %3153 = vmatmul.bf16.gmra.mxu0 %v3052
  %v3154 = vpop.f32.mrf.mxu0
  %v3155 = vadd.f32 0.0, %v3154
  %v3156 = vpop.f32.mrf.mxu0
  %v3157 = vadd.f32 0.0, %v3156
  %3158 = vmatmul.bf16.gmra.mxu0 %v3053
  %v3159 = vpop.f32.mrf.mxu0
  %v3160 = vadd.f32 0.0, %v3159
  %v3161 = vpop.f32.mrf.mxu0
  %v3162 = vadd.f32 0.0, %v3161
  %3163 = vmatmul.bf16.gmra.mxu0 %v3054
  %v3164 = vpop.f32.mrf.mxu0
  %v3165 = vadd.f32 0.0, %v3164
  %v3166 = vpop.f32.mrf.mxu0
  %v3167 = vadd.f32 0.0, %v3166
  %3168 = vmatmul.bf16.gmra.mxu0 %v3067
  %v3169 = vpop.f32.mrf.mxu0
  %v3170 = vadd.f32 0.0, %v3169
  %v3171 = vpop.f32.mrf.mxu0
  %v3172 = vadd.f32 0.0, %v3171
  %3173 = vmatmul.bf16.gmra.mxu0 %v3068
  %v3174 = vpop.f32.mrf.mxu0
  %v3175 = vadd.f32 0.0, %v3174
  %v3176 = vpop.f32.mrf.mxu0
  %v3177 = vadd.f32 0.0, %v3176
  %3178 = vmatmul.bf16.gmra.mxu0 %v3069
  %v3179 = vpop.f32.mrf.mxu0
  %v3180 = vadd.f32 0.0, %v3179
  %v3181 = vpop.f32.mrf.mxu0
  %v3182 = vadd.f32 0.0, %v3181
  %3183 = vmatmul.bf16.gmra.mxu0 %v3070
  %v3184 = vpop.f32.mrf.mxu0
  %v3185 = vadd.f32 0.0, %v3184
  %v3186 = vpop.f32.mrf.mxu0
  %v3187 = vadd.f32 0.0, %v3186
  %3188 = vdwg.mxu0
  %v3189 = vadd.f32 %v2915, %v3150
  %v3190 = vadd.f32 %v2916, %v3152
  %v3191 = vadd.f32 %v2917, %v3155
  %v3192 = vadd.f32 %v2918, %v3157
  %v3193 = vadd.f32 %v2919, %v3160
  %v3194 = vadd.f32 %v2920, %v3162
  %v3195 = vadd.f32 %v2921, %v3165
  %v3196 = vadd.f32 %v2922, %v3167
  %v3197 = vadd.f32 %v2923, %v3170
  %v3198 = vadd.f32 %v2924, %v3172
  %v3199 = vadd.f32 %v2925, %v3175
  %v3200 = vadd.f32 %v2926, %v3177
  %v3201 = vadd.f32 %v2927, %v3180
  %v3202 = vadd.f32 %v2928, %v3182
  %v3203 = vadd.f32 %v2929, %v3185
  %v3204 = vadd.f32 %v2930, %v3187
  %v3205 = vld [vmem:[%s4] sm:$0x1]
  %v3207 = vperm.slane %v3205, 0
  %v3209 = vadd.f32 %v3189, %v3207
  %v3210 = vadd.f32 %v3190, %v3207
  %v3211 = vadd.f32 %v3191, %v3207
  %v3212 = vadd.f32 %v3192, %v3207
  %v3213 = vadd.f32 %v3193, %v3207
  %v3214 = vadd.f32 %v3194, %v3207
  %v3215 = vadd.f32 %v3195, %v3207
  %v3216 = vadd.f32 %v3196, %v3207
  %v3217 = vadd.f32 %v3197, %v3207
  %v3218 = vadd.f32 %v3198, %v3207
  %v3219 = vadd.f32 %v3199, %v3207
  %v3220 = vadd.f32 %v3200, %v3207
  %v3221 = vadd.f32 %v3201, %v3207
  %v3222 = vadd.f32 %v3202, %v3207
  %v3223 = vadd.f32 %v3203, %v3207
  %v3224 = vadd.f32 %v3204, %v3207
  %v3225 = vld [vmem:[%s5] sm:$0xf]
  %v3226 = vld [vmem:[%s5 + $0x4] sm:$0xf]
  %v3227 = vld [vmem:[%s5 + $0x8] sm:$0xf]
  %v3228 = vld [vmem:[%s5 + $0xc] sm:$0xf]
  %v3229 = vld [vmem:[%s5 + $0x10] sm:$0xf]
  %v3230 = vld [vmem:[%s6] sm:$0x1]
  %v3232 = vperm.slane %v3230, 0
  %v3239 = vunpack.c.l.b16 %v3225
  %v3240 = vunpack.c.l.b16 %v3226
  %v3241 = vunpack.c.l.b16 %v3227
  %v3242 = vunpack.c.l.b16 %v3228
  %v3243 = vunpack.c.l.b16 %v3229
  %v3244 = vpack.c.b16 %v3240, %v3239
  %v3245 = vpack.c.b16 %v3242, %v3241
  %v3246 = vpack.c.b16 %v3243, %v3243
  %v3250 = vsel %vm132, %v3246, 0
  %3252 = vmatpush.bf16.msra.mxu0 0
  %3253 = vmatpush.bf16.msra.mxu0 0
  %3254 = vmatpush.bf16.msra.mxu0 0
  %3255 = vmatpush.bf16.msra.mxu0 0
  %3256 = vmatpush.bf16.msra.mxu0 0
  %3257 = vmatpush.bf16.msra.mxu0 %v3250
  %3258 = vmatpush.bf16.msra.mxu0 %v3245
  %3259 = vmatpush.bf16.msra.mxu0 %v3244
  %3260 = vmatmul.bf16.gmra.mxu0 %v109
  %v3261 = vpop.f32.mrf.mxu0
  %v3262 = vadd.f32 %v3232, %v3261
  %v3263 = vpop.f32.mrf.mxu0
  %v3264 = vadd.f32 %v3232, %v3263
  %3265 = vmatmul.bf16.gmra.mxu0 %v112
  %v3266 = vpop.f32.mrf.mxu0
  %v3267 = vadd.f32 %v3232, %v3266
  %v3268 = vpop.f32.mrf.mxu0
  %v3269 = vadd.f32 %v3232, %v3268
  %3270 = vmatmul.bf16.gmra.mxu0 %v115
  %v3271 = vpop.f32.mrf.mxu0
  %v3272 = vadd.f32 %v3232, %v3271
  %v3273 = vpop.f32.mrf.mxu0
  %v3274 = vadd.f32 %v3232, %v3273
  %3275 = vmatmul.bf16.gmra.mxu0 %v118
  %v3276 = vpop.f32.mrf.mxu0
  %v3277 = vadd.f32 %v3232, %v3276
  %v3278 = vpop.f32.mrf.mxu0
  %v3279 = vadd.f32 %v3232, %v3278
  %3280 = vmatmul.bf16.gmra.mxu0 %v121
  %v3281 = vpop.f32.mrf.mxu0
  %v3282 = vadd.f32 %v3232, %v3281
  %v3283 = vpop.f32.mrf.mxu0
  %v3284 = vadd.f32 %v3232, %v3283
  %3285 = vmatmul.bf16.gmra.mxu0 %v124
  %v3286 = vpop.f32.mrf.mxu0
  %v3287 = vadd.f32 %v3232, %v3286
  %v3288 = vpop.f32.mrf.mxu0
  %v3289 = vadd.f32 %v3232, %v3288
  %3290 = vmatmul.bf16.gmra.mxu0 %v127
  %v3291 = vpop.f32.mrf.mxu0
  %v3292 = vadd.f32 %v3232, %v3291
  %v3293 = vpop.f32.mrf.mxu0
  %v3294 = vadd.f32 %v3232, %v3293
  %3295 = vmatmul.bf16.gmra.mxu0 %v130
  %v3296 = vpop.f32.mrf.mxu0
  %v3297 = vadd.f32 %v3232, %v3296
  %v3298 = vpop.f32.mrf.mxu0
  %v3299 = vadd.f32 %v3232, %v3298
  %3300 = vdwg.mxu0
  %v3301 = vadd.f32 %v3209, %v3262
  %v3302 = vadd.f32 %v3210, %v3264
  %v3303 = vadd.f32 %v3211, %v3267
  %v3304 = vadd.f32 %v3212, %v3269
  %v3305 = vadd.f32 %v3213, %v3272
  %v3306 = vadd.f32 %v3214, %v3274
  %v3307 = vadd.f32 %v3215, %v3277
  %v3308 = vadd.f32 %v3216, %v3279
  %v3309 = vadd.f32 %v3217, %v3282
  %v3310 = vadd.f32 %v3218, %v3284
  %v3311 = vadd.f32 %v3219, %v3287
  %v3312 = vadd.f32 %v3220, %v3289
  %v3313 = vadd.f32 %v3221, %v3292
  %v3314 = vadd.f32 %v3222, %v3294
  %v3315 = vadd.f32 %v3223, %v3297
  %v3316 = vadd.f32 %v3224, %v3299
  %v3317 = vmax.f32 %v3301, 0.0
  %v3318 = vmax.f32 %v3302, 0.0
  %v3319 = vmax.f32 %v3303, 0.0
  %v3320 = vmax.f32 %v3304, 0.0
  %v3321 = vmax.f32 %v3305, 0.0
  %v3322 = vmax.f32 %v3306, 0.0
  %v3323 = vmax.f32 %v3307, 0.0
  %v3324 = vmax.f32 %v3308, 0.0
  %v3325 = vmax.f32 %v3309, 0.0
  %v3326 = vmax.f32 %v3310, 0.0
  %v3327 = vmax.f32 %v3311, 0.0
  %v3328 = vmax.f32 %v3312, 0.0
  %v3329 = vmax.f32 %v3313, 0.0
  %v3330 = vmax.f32 %v3314, 0.0
  %v3331 = vmax.f32 %v3315, 0.0
  %v3332 = vmax.f32 %v3316, 0.0
  %3333 = vst [vmem:[%s7] sm:$0xff] %v3317
  %3334 = vst [vmem:[%s7 + $0x8] sm:$0xff] %v3318
  %3335 = vst [vmem:[%s7 + $0x10] sm:$0xff] %v3319
  %3336 = vst [vmem:[%s7 + $0x18] sm:$0xff] %v3320
  %3337 = vst [vmem:[%s7 + $0x20] sm:$0xff] %v3321
  %3338 = vst [vmem:[%s7 + $0x28] sm:$0xff] %v3322
  %3339 = vst [vmem:[%s7 + $0x30] sm:$0xff] %v3323
  %3340 = vst [vmem:[%s7 + $0x38] sm:$0xff] %v3324
  %3341 = vst [vmem:[%s7 + $0x40] sm:$0xff] %v3325
  %3342 = vst [vmem:[%s7 + $0x48] sm:$0xff] %v3326
  %3343 = vst [vmem:[%s7 + $0x50] sm:$0xff] %v3327
  %3344 = vst [vmem:[%s7 + $0x58] sm:$0xff] %v3328
  %3345 = vst [vmem:[%s7 + $0x60] sm:$0xff] %v3329
  %3346 = vst [vmem:[%s7 + $0x68] sm:$0xff] %v3330
  %3347 = vst [vmem:[%s7 + $0x70] sm:$0xff] %v3331
  %3348 = vst [vmem:[%s7 + $0x78] sm:$0xff] %v3332
  // Predicated region
  $region30: #{resblock_forward.1} parent=0 // pred_check
    _
  $region31: #{resblock_forward.1} parent=0 // pred_check_branch
    %3350 = sbr.rel (0) target = $region33
  $region32: #{resblock_forward.1} parent=0 // pred_region
    _
  $region33: #{resblock_forward.1} parent=0 // pred_fallthru
    _
  // Predicated region
  $region34: #{resblock_forward.1} parent=0 // pred_check
    _
  $region35: #{resblock_forward.1} parent=0 // pred_check_branch
    %3352 = sbr.rel (0) target = $region37
  $region36: #{resblock_forward.1} parent=0 // pred_region
    _
  $region37: #{resblock_forward.1} parent=0 // pred_fallthru
    _

</llo_original>
